<compile_context>
chip_gen: v6e
topology: v6e:2x2x1
jax: 0.10.0
libtpu: 0.0.40
codegen_flags: <defaults>
</compile_context>

<pallas_src>
import functools

import jax
import jax.numpy as jnp
from jax.experimental import pallas as pl
from jax.experimental.pallas import tpu as pltpu

EPS = 1e-5


def transformer_block_kernel(x_ref, g1_ref, g2_ref, wqkv_ref, wo_ref,
                             w13_ref, w2_ref, cos_ref, sin_ref, o_ref,
                             ho_ref, *, num_heads, tq, tff):
    x = x_ref[0]                              # (S, D) f32, one batch element
    S, D = x.shape
    dk = D // num_heads
    dff = w2_ref.shape[0]
    nq = S // tq
    nff = dff // tff

    g1 = g1_ref[...]                          # (1, D) f32
    g2 = g2_ref[...]                          # (1, D) f32
    cos = cos_ref[...]                        # (S, dk) f32
    sin = sin_ref[...]                        # (S, dk) f32, sign pre-folded

    # ---- RMSNorm 1 (f32 stats), cast adjacent to the consuming dot ----
    ms = jnp.mean(x * x, axis=-1, keepdims=True)
    xn = (x * jax.lax.rsqrt(ms + EPS) * g1).astype(jnp.bfloat16)

    # ---- fused Q|K|V projection: bf16 into MXU, f32 accumulate ----
    # 1/sqrt(dk) is already folded into the Wq columns (prepare_params).
    qkv = jnp.dot(xn, wqkv_ref[...],
                  preferred_element_type=jnp.float32)          # (S, 3D) f32

    # ---- RoPE hoisted out of the attention loops ----
    def rope(t):  # split-half RoPE on the XLU; sign folded into the sin table
        return t * cos + pltpu.roll(t, shift=dk // 2, axis=1) * sin

    q_parts, k_parts = [], []
    for h in range(num_heads):
        lo = h * dk
        q_parts.append(rope(qkv[:, lo:lo + dk]))
        k_parts.append(rope(qkv[:, D + lo:D + lo + dk]))
    q_bf = jnp.concatenate(q_parts, axis=-1).astype(jnp.bfloat16)     # (S, D)
    # K transposed ONCE per invocation (feeds the MXU directly per tile).
    kT_bf = jnp.concatenate(k_parts, axis=-1).astype(jnp.bfloat16).T  # (D, S)
    v_bf = qkv[:, 2 * D:].astype(jnp.bfloat16)                        # (S, D)

    neg = jnp.float32(-1e30)
    row = jax.lax.broadcasted_iota(jnp.int32, (tq, tq), 0)
    col = jax.lax.broadcasted_iota(jnp.int32, (tq, tq), 1)
    diag_mask = row >= col                    # causal mask for diagonal tiles

    # ---- flash-tiled causal attention (KV tile size == query tile size) ----
    for qi in range(nq):
        qs = qi * tq
        for h in range(num_heads):
            lo = h * dk
            q_tile = q_bf[qs:qs + tq, lo:lo + dk]                 # (tq, dk) bf16
            m_i = jnp.full((tq, 1), -jnp.inf, jnp.float32)
            l_i = jnp.zeros((tq, 1), jnp.float32)
            acc = jnp.zeros((tq, dk), jnp.float32)
            for ki in range(qi + 1):          # skip KV tiles above the diagonal
                ks = ki * tq
                s = jnp.dot(q_tile, kT_bf[lo:lo + dk, ks:ks + tq],
                            preferred_element_type=jnp.float32)   # (tq, tq) f32
                if ki == qi:
                    s = jnp.where(diag_mask, s, neg)
                m_new = jnp.maximum(m_i, jnp.max(s, axis=-1, keepdims=True))
                alpha = jnp.exp(m_i - m_new)
                p = jnp.exp(s - m_new)
                l_i = alpha * l_i + jnp.sum(p, axis=-1, keepdims=True)
                acc = alpha * acc + jnp.dot(p.astype(jnp.bfloat16),
                                            v_bf[ks:ks + tq, lo:lo + dk],
                                            preferred_element_type=jnp.float32)
                m_i = m_new
            # deferred softmax normalization on (tq, dk), not (tq, S)
            ho_ref[qs:qs + tq, lo:lo + dk] = (
                acc * pl.reciprocal(l_i, approx=True)).astype(jnp.bfloat16)

    # ---- single K=D output projection over all heads ----
    attn = jnp.dot(ho_ref[...], wo_ref[...],
                   preferred_element_type=jnp.float32)            # (S, D) f32
    x2 = x + attn                                                 # residual 1

    # ---- RMSNorm 2 + d_ff-chunked SwiGLU (W1|W3 interleaved per chunk) ----
    ms2 = jnp.mean(x2 * x2, axis=-1, keepdims=True)
    xn2 = (x2 * jax.lax.rsqrt(ms2 + EPS) * g2).astype(jnp.bfloat16)
    ff = jnp.zeros((S, D), jnp.float32)
    for c in range(nff):
        cs = c * 2 * tff
        h13 = jnp.dot(xn2, w13_ref[:, cs:cs + 2 * tff],
                      preferred_element_type=jnp.float32)         # (S, 2*tff)
        h1 = h13[:, :tff]
        h3 = h13[:, tff:]
        silu = h1 * pl.reciprocal(1.0 + jnp.exp(-h1), approx=True)
        ff = ff + jnp.dot((silu * h3).astype(jnp.bfloat16),
                          w2_ref[c * tff:(c + 1) * tff, :],
                          preferred_element_type=jnp.float32)

    o_ref[0] = x2 + ff                                            # residual 2


def prepare_params(params, *, num_heads, theta, max_seq_len, ff_chunk=512):
    """One-time weight fusion / layout / bf16 cast + RoPE tables.

    Kept OFF the per-forward path (perf review item): call once at load time.
    """
    D = params['wq'].shape[0]
    dff = params['w1'].shape[0]
    dk = D // num_heads
    assert D % num_heads == 0
    assert dk % 128 == 0 and D % 128 == 0 and dff % 128 == 0, (
        "kernel assumes lane-aligned D, head_dim and d_ff")
    tff = min(dff, ff_chunk)
    assert dff % tff == 0
    nff = dff // tff

    # even|odd permutation of Q/K output features per head (interleaved RoPE
    # becomes split-half RoPE; dot-product scores are permutation invariant).
    perm = jnp.concatenate([
        jnp.concatenate([h * dk + jnp.arange(0, dk, 2),
                         h * dk + jnp.arange(1, dk, 2)])
        for h in range(num_heads)])

    scale = 1.0 / (dk ** 0.5)                 # fold score scale into Wq
    wq_t = (params['wq'].T * scale)[:, perm]
    wk_t = params['wk'].T[:, perm]
    wqkv = jnp.concatenate([wq_t, wk_t, params['wv'].T],
                           axis=1).astype(jnp.bfloat16)           # (D, 3D)
    wo_t = params['wo'].T.astype(jnp.bfloat16)                    # (D, D)

    # interleave W1|W3 per d_ff chunk so each FFN chunk is one MXU matmul
    w1t = params['w1'].T.reshape(D, nff, tff)
    w3t = params['w3'].T.reshape(D, nff, tff)
    w13 = jnp.concatenate([w1t, w3t], axis=-1).reshape(
        D, 2 * dff).astype(jnp.bfloat16)                          # (D, 2*dff)
    w2_t = params['w2'].T.astype(jnp.bfloat16)                    # (dff, D)

    # RoPE tables (token_position=None -> arange); sign pre-folded into sin
    pos = jnp.arange(max_seq_len, dtype=jnp.float32)
    j = jnp.arange(dk // 2, dtype=jnp.float32)
    inv_freq = theta ** (-2.0 * j / dk)
    ang = pos[:, None] * inv_freq[None, :]                        # (L, dk/2)
    cos = jnp.concatenate([jnp.cos(ang), jnp.cos(ang)], axis=-1)  # (L, dk)
    sin_signed = jnp.concatenate([-jnp.sin(ang), jnp.sin(ang)], axis=-1)

    return {
        'wqkv': wqkv, 'wo': wo_t, 'w13': w13, 'w2': w2_t,
        'g1': params['g1'].reshape(1, D), 'g2': params['g2'].reshape(1, D),
        'cos': cos, 'sin': sin_signed,
        'num_heads': num_heads, 'd_ff': dff, 'tff': tff,
    }


def transformer_block(x, prep):
    B, S, D = x.shape
    H = prep['num_heads']
    dk = D // H
    dff = prep['d_ff']
    tff = prep['tff']
    assert prep['cos'].shape[0] >= S, "sequence longer than max_seq_len"

    tq = S if S <= 256 else 256               # internal query/KV tile size
    assert S % tq == 0 and tq % 8 == 0

    kernel = functools.partial(transformer_block_kernel,
                               num_heads=H, tq=tq, tff=tff)

    def const(shape):
        # grid-invariant operand: block index never changes with grid=(B,)
        return pl.BlockSpec(shape, lambda b: (0,) * len(shape))

    # vmem limit derived from the actual tiling footprint (not a blanket cap)
    bf, f4 = 2, 4
    vmem_est = (
        2 * bf * (D * 3 * D + D * D + D * 2 * dff + dff * D)   # weights (x2 buf)
        + 2 * 2 * S * D * f4                                   # x/out pipelined
        + S * D * bf                                           # head-out scratch
        + 3 * S * D * f4 + 3 * S * D * bf + 4 * S * D * f4     # qkv/q/k/v/resid
        + 3 * S * 2 * tff * f4                                 # FFN chunk temps
        + 4 * tq * tq * f4)                                    # flash score tile
    vmem_limit = int(min(max(2 * vmem_est, 32 << 20), 64 << 20))

    return pl.pallas_call(
        kernel,
        out_shape=jax.ShapeDtypeStruct((B, S, D), jnp.float32),
        grid=(B,),
        in_specs=[
            pl.BlockSpec((1, S, D), lambda b: (b, 0, 0)),      # x (pipelined)
            const((1, D)), const((1, D)),                      # g1, g2
            const((D, 3 * D)),                                 # Wq|Wk|Wv (bf16)
            const((D, D)),                                     # Wo (bf16)
            const((D, 2 * dff)),                               # W1|W3 (bf16)
            const((dff, D)),                                   # W2 (bf16)
            const((S, dk)), const((S, dk)),                    # cos, signed sin
        ],
        out_specs=pl.BlockSpec((1, S, D), lambda b: (b, 0, 0)),
        scratch_shapes=[pltpu.VMEM((S, D), jnp.bfloat16)],     # per-head outs
        compiler_params=pltpu.CompilerParams(
            dimension_semantics=("parallel",),   # batch shards across TCs
            vmem_limit_bytes=vmem_limit),
    )(x, prep['g1'], prep['g2'], prep['wqkv'], prep['wo'],
      prep['w13'], prep['w2'], prep['cos'], prep['sin'])


def init_params(key, d_model, d_ff):
    ks = jax.random.split(key, 7)
    s = 0.02
    return {
        'wq': jax.random.normal(ks[0], (d_model, d_model), jnp.float32) * s,
        'wk': jax.random.normal(ks[1], (d_model, d_model), jnp.float32) * s,
        'wv': jax.random.normal(ks[2], (d_model, d_model), jnp.float32) * s,
        'wo': jax.random.normal(ks[3], (d_model, d_model), jnp.float32) * s,
        'w1': jax.random.normal(ks[4], (d_ff, d_model), jnp.float32) * s,
        'w2': jax.random.normal(ks[5], (d_model, d_ff), jnp.float32) * s,
        'w3': jax.random.normal(ks[6], (d_ff, d_model), jnp.float32) * s,
        'g1': jnp.ones((d_model,), jnp.float32),   # RMSNorm gains init to 1
        'g2': jnp.ones((d_model,), jnp.float32),
    }


def reference(x, p, *, num_heads, theta):
    """Pure-JAX f32 reference mirroring the PyTorch module (interleaved RoPE)."""
    B, S, D = x.shape
    dk = D // num_heads

    def rmsnorm(v, g):
        ms = jnp.mean(v * v, axis=-1, keepdims=True)
        return v * jax.lax.rsqrt(ms + EPS) * g

    xn = rmsnorm(x, p['g1'])
    q = (xn @ p['wq'].T).reshape(B, S, num_heads, dk)
    k = (xn @ p['wk'].T).reshape(B, S, num_heads, dk)
    v = (xn @ p['wv'].T).reshape(B, S, num_heads, dk)

    pos = jnp.arange(S, dtype=jnp.float32)
    j = jnp.arange(dk // 2, dtype=jnp.float32)
    inv_freq = theta ** (-2.0 * j / dk)
    ang = pos[:, None] * inv_freq[None, :]
    c = jnp.cos(ang)[None, :, None, :]
    s = jnp.sin(ang)[None, :, None, :]

    def rope_interleaved(t):
        te, to = t[..., 0::2], t[..., 1::2]
        oe = te * c - to * s
        oo = te * s + to * c
        return jnp.stack([oe, oo], axis=-1).reshape(t.shape)

    q = rope_interleaved(q)
    k = rope_interleaved(k)
    scores = jnp.einsum('bqhd,bkhd->bhqk', q, k) / (dk ** 0.5)
    mask = jnp.tril(jnp.ones((S, S), bool))
    scores = jnp.where(mask, scores, -jnp.inf)
    attn = jnp.einsum('bhqk,bkhd->bqhd',
                      jax.nn.softmax(scores, axis=-1), v).reshape(B, S, D)
    x2 = x + attn @ p['wo'].T
    xn2 = rmsnorm(x2, p['g2'])
    h1 = xn2 @ p['w1'].T
    h3 = xn2 @ p['w3'].T
    return x2 + (h1 * jax.nn.sigmoid(h1) * h3) @ p['w2'].T


if __name__ == "__main__":
    # lane-friendly small shapes: D and dk multiples of 128
    B, S, D, H, DFF = 2, 128, 256, 2, 512
    THETA = 10000.0

    key = jax.random.PRNGKey(0)
    kx, kp = jax.random.split(key)
    x = jax.random.normal(kx, (B, S, D), jnp.float32)
    params = init_params(kp, D, DFF)

    # one-time weight fusion / RoPE tables (off the per-call path)
    prep = prepare_params(params, num_heads=H, theta=THETA, max_seq_len=S)

    out = transformer_block(x, prep)
    out = jax.block_until_ready(out)

    ref = reference(x, params, num_heads=H, theta=THETA)
    assert out.shape == (B, S, D)
    err = float(jnp.max(jnp.abs(out - ref)))
    assert jnp.allclose(out, ref, atol=1e-2, rtol=1e-2), err
    print("KERNEL_OK")
</pallas_src>

<mosaic_0001>
module attributes {stable_mosaic.version = 11 : i64} {
  func.func @transformer_block_kernel(%arg0: i32, %arg1: memref<1x128x256xf32, #tpu.memory_space<vmem>>, %arg2: memref<1x256xf32, #tpu.memory_space<vmem>>, %arg3: memref<1x256xf32, #tpu.memory_space<vmem>>, %arg4: memref<256x768xbf16, #tpu.memory_space<vmem>>, %arg5: memref<256x256xbf16, #tpu.memory_space<vmem>>, %arg6: memref<256x1024xbf16, #tpu.memory_space<vmem>>, %arg7: memref<512x256xbf16, #tpu.memory_space<vmem>>, %arg8: memref<128x128xf32, #tpu.memory_space<vmem>>, %arg9: memref<128x128xf32, #tpu.memory_space<vmem>>, %arg10: memref<1x128x256xf32, #tpu.memory_space<vmem>>, %arg11: memref<128x256xbf16, #tpu.memory_space<vmem>>) attributes {dimension_semantics = [#tpu.dimension_semantics<parallel>], iteration_bounds = array<i64: 2>, scalar_prefetch = 0 : i64, scratch_operands = 1 : i64, tpu.core_type = #tpu.core_type<tc>, window_params = [{transform_indices = @transform_0, window_bounds = array<i64: 1, 128, 256>}, {pipeline_mode = #tpu.pipeline_mode<synchronous>, transform_indices = @transform_1, window_bounds = array<i64: 1, 256>}, {pipeline_mode = #tpu.pipeline_mode<synchronous>, transform_indices = @transform_2, window_bounds = array<i64: 1, 256>}, {pipeline_mode = #tpu.pipeline_mode<synchronous>, transform_indices = @transform_3, window_bounds = array<i64: 256, 768>}, {pipeline_mode = #tpu.pipeline_mode<synchronous>, transform_indices = @transform_4, window_bounds = array<i64: 256, 256>}, {pipeline_mode = #tpu.pipeline_mode<synchronous>, transform_indices = @transform_5, window_bounds = array<i64: 256, 1024>}, {pipeline_mode = #tpu.pipeline_mode<synchronous>, transform_indices = @transform_6, window_bounds = array<i64: 512, 256>}, {pipeline_mode = #tpu.pipeline_mode<synchronous>, transform_indices = @transform_7, window_bounds = array<i64: 128, 128>}, {pipeline_mode = #tpu.pipeline_mode<synchronous>, transform_indices = @transform_8, window_bounds = array<i64: 128, 128>}, {transform_indices = @transform_9, window_bounds = array<i64: 1, 128, 256>}]} {
    %c0 = arith.constant 0 : index
    %c0_0 = arith.constant 0 : index
    %c0_1 = arith.constant 0 : index
    %0 = vector.load %arg1[%c0, %c0_0, %c0_1] : memref<1x128x256xf32, #tpu.memory_space<vmem>>, vector<1x128x256xf32>
    %1 = vector.shape_cast %0 : vector<1x128x256xf32> to vector<128x256xf32>
    %c0_2 = arith.constant 0 : index
    %c0_3 = arith.constant 0 : index
    %2 = vector.load %arg2[%c0_2, %c0_3] : memref<1x256xf32, #tpu.memory_space<vmem>>, vector<1x256xf32>
    %c0_4 = arith.constant 0 : index
    %c0_5 = arith.constant 0 : index
    %3 = vector.load %arg3[%c0_4, %c0_5] : memref<1x256xf32, #tpu.memory_space<vmem>>, vector<1x256xf32>
    %c0_6 = arith.constant 0 : index
    %c0_7 = arith.constant 0 : index
    %4 = vector.load %arg8[%c0_6, %c0_7] : memref<128x128xf32, #tpu.memory_space<vmem>>, vector<128x128xf32>
    %c0_8 = arith.constant 0 : index
    %c0_9 = arith.constant 0 : index
    %5 = vector.load %arg9[%c0_8, %c0_9] : memref<128x128xf32, #tpu.memory_space<vmem>>, vector<128x128xf32>
    %6 = arith.mulf %1, %1 : vector<128x256xf32>
    %cst = arith.constant dense<0.000000e+00> : vector<128xf32>
    %7 = vector.multi_reduction <add>, %6, %cst [1] : vector<128x256xf32> to vector<128xf32>
    %8 = vector.shape_cast %7 : vector<128xf32> to vector<128x1xf32>
    %cst_10 = arith.constant 2.560000e+02 : f32
    %9 = vector.broadcast %cst_10 : f32 to vector<128x1xf32>
    %10 = arith.divf %8, %9 : vector<128x1xf32>
    %cst_11 = arith.constant 9.99999974E-6 : f32
    %11 = vector.broadcast %cst_11 : f32 to vector<128x1xf32>
    %12 = arith.addf %10, %11 : vector<128x1xf32>
    %13 = math.rsqrt %12 : vector<128x1xf32>
    %14 = vector.broadcast %13 : vector<128x1xf32> to vector<128x256xf32>
    %15 = arith.mulf %1, %14 : vector<128x256xf32>
    %16 = vector.broadcast %2 : vector<1x256xf32> to vector<128x256xf32>
    %17 = arith.mulf %15, %16 : vector<128x256xf32>
    %18 = arith.truncf %17 : vector<128x256xf32> to vector<128x256xbf16>
    %c0_12 = arith.constant 0 : index
    %c0_13 = arith.constant 0 : index
    %19 = vector.load %arg4[%c0_12, %c0_13] : memref<256x768xbf16, #tpu.memory_space<vmem>>, vector<256x768xbf16>
    %cst_14 = arith.constant dense<0.000000e+00> : vector<128x768xf32>
    %20 = tpu.matmul %18, %19, %cst_14 {dimension_numbers = #tpu.dot_dimension_numbers<[1], [0], [0], [1], [0, 0, 1, 1], [], []>} : vector<128x256xbf16>, vector<256x768xbf16>, vector<128x768xf32> -> vector<128x768xf32>
    %21 = vector.extract_strided_slice %20 {offsets = [0, 0], sizes = [128, 128], strides = [1, 1]} : vector<128x768xf32> to vector<128x128xf32>
    %22 = arith.mulf %21, %4 : vector<128x128xf32>
    %c64_i32 = arith.constant 64 : i32
    %23 = tpu.dynamic_rotate %21 by %c64_i32 dim 1 : vector<128x128xf32>, i32 -> vector<128x128xf32>
    %24 = arith.mulf %23, %5 : vector<128x128xf32>
    %25 = arith.addf %22, %24 : vector<128x128xf32>
    %26 = vector.extract_strided_slice %20 {offsets = [0, 256], sizes = [128, 128], strides = [1, 1]} : vector<128x768xf32> to vector<128x128xf32>
    %27 = arith.mulf %26, %4 : vector<128x128xf32>
    %c64_i32_15 = arith.constant 64 : i32
    %28 = tpu.dynamic_rotate %26 by %c64_i32_15 dim 1 : vector<128x128xf32>, i32 -> vector<128x128xf32>
    %29 = arith.mulf %28, %5 : vector<128x128xf32>
    %30 = arith.addf %27, %29 : vector<128x128xf32>
    %31 = vector.extract_strided_slice %20 {offsets = [0, 128], sizes = [128, 128], strides = [1, 1]} : vector<128x768xf32> to vector<128x128xf32>
    %32 = arith.mulf %31, %4 : vector<128x128xf32>
    %c64_i32_16 = arith.constant 64 : i32
    %33 = tpu.dynamic_rotate %31 by %c64_i32_16 dim 1 : vector<128x128xf32>, i32 -> vector<128x128xf32>
    %34 = arith.mulf %33, %5 : vector<128x128xf32>
    %35 = arith.addf %32, %34 : vector<128x128xf32>
    %36 = vector.extract_strided_slice %20 {offsets = [0, 384], sizes = [128, 128], strides = [1, 1]} : vector<128x768xf32> to vector<128x128xf32>
    %37 = arith.mulf %36, %4 : vector<128x128xf32>
    %c64_i32_17 = arith.constant 64 : i32
    %38 = tpu.dynamic_rotate %36 by %c64_i32_17 dim 1 : vector<128x128xf32>, i32 -> vector<128x128xf32>
    %39 = arith.mulf %38, %5 : vector<128x128xf32>
    %40 = arith.addf %37, %39 : vector<128x128xf32>
    %41 = tpu.concatenate %25, %35 in 1 : vector<128x128xf32>, vector<128x128xf32> -> vector<128x256xf32>
    %42 = arith.truncf %41 : vector<128x256xf32> to vector<128x256xbf16>
    %43 = tpu.concatenate %30, %40 in 1 : vector<128x128xf32>, vector<128x128xf32> -> vector<128x256xf32>
    %44 = arith.truncf %43 : vector<128x256xf32> to vector<128x256xbf16>
    %45 = tpu.transpose %44, [1, 0] : vector<128x256xbf16> -> vector<256x128xbf16>
    %46 = vector.extract_strided_slice %20 {offsets = [0, 512], sizes = [128, 256], strides = [1, 1]} : vector<128x768xf32> to vector<128x256xf32>
    %47 = arith.truncf %46 : vector<128x256xf32> to vector<128x256xbf16>
    %48 = tpu.iota {dimensions = array<i32: 0>} : vector<128x128xi32>
    %49 = tpu.iota {dimensions = array<i32: 1>} : vector<128x128xi32>
    %50 = arith.cmpi sge, %48, %49 : vector<128x128xi32>
    %51 = vector.extract_strided_slice %42 {offsets = [0, 0], sizes = [128, 128], strides = [1, 1]} : vector<128x256xbf16> to vector<128x128xbf16>
    %cst_18 = arith.constant 0xFF800000 : f32
    %52 = vector.broadcast %cst_18 : f32 to vector<128x1xf32>
    %cst_19 = arith.constant 0.000000e+00 : f32
    %53 = vector.broadcast %cst_19 : f32 to vector<128x1xf32>
    %cst_20 = arith.constant 0.000000e+00 : f32
    %54 = vector.broadcast %cst_20 : f32 to vector<128x128xf32>
    %55 = vector.extract_strided_slice %45 {offsets = [0, 0], sizes = [128, 128], strides = [1, 1]} : vector<256x128xbf16> to vector<128x128xbf16>
    %cst_21 = arith.constant dense<0.000000e+00> : vector<128x128xf32>
    %56 = tpu.matmul %51, %55, %cst_21 {dimension_numbers = #tpu.dot_dimension_numbers<[1], [0], [0], [1], [0, 0, 1, 1], [], []>} : vector<128x128xbf16>, vector<128x128xbf16>, vector<128x128xf32> -> vector<128x128xf32>
    %cst_22 = arith.constant -1.000000e+30 : f32
    %57 = vector.broadcast %cst_22 : f32 to vector<128x128xf32>
    %58 = arith.select %50, %56, %57 : vector<128x128xi1>, vector<128x128xf32>
    %cst_23 = arith.constant dense<0xFF800000> : vector<128xf32>
    %59 = vector.multi_reduction <maximumf>, %58, %cst_23 [1] : vector<128x128xf32> to vector<128xf32>
    %60 = vector.shape_cast %59 : vector<128xf32> to vector<128x1xf32>
    %61 = arith.maximumf %52, %60 : vector<128x1xf32>
    %62 = arith.subf %52, %61 : vector<128x1xf32>
    %63 = math.exp %62 : vector<128x1xf32>
    %64 = vector.broadcast %61 : vector<128x1xf32> to vector<128x128xf32>
    %65 = arith.subf %58, %64 : vector<128x128xf32>
    %66 = math.exp %65 : vector<128x128xf32>
    %67 = arith.mulf %63, %53 : vector<128x1xf32>
    %cst_24 = arith.constant dense<0.000000e+00> : vector<128xf32>
    %68 = vector.multi_reduction <add>, %66, %cst_24 [1] : vector<128x128xf32> to vector<128xf32>
    %69 = vector.shape_cast %68 : vector<128xf32> to vector<128x1xf32>
    %70 = arith.addf %67, %69 : vector<128x1xf32>
    %71 = vector.broadcast %63 : vector<128x1xf32> to vector<128x128xf32>
    %72 = arith.mulf %71, %54 : vector<128x128xf32>
    %73 = arith.truncf %66 : vector<128x128xf32> to vector<128x128xbf16>
    %74 = vector.extract_strided_slice %47 {offsets = [0, 0], sizes = [128, 128], strides = [1, 1]} : vector<128x256xbf16> to vector<128x128xbf16>
    %cst_25 = arith.constant dense<0.000000e+00> : vector<128x128xf32>
    %75 = tpu.matmul %73, %74, %cst_25 {dimension_numbers = #tpu.dot_dimension_numbers<[1], [0], [0], [1], [0, 0, 1, 1], [], []>} : vector<128x128xbf16>, vector<128x128xbf16>, vector<128x128xf32> -> vector<128x128xf32>
    %76 = arith.addf %72, %75 : vector<128x128xf32>
    %77 = tpu.reciprocal %70 {approx = true} : vector<128x1xf32> -> vector<128x1xf32>
    %78 = vector.broadcast %77 : vector<128x1xf32> to vector<128x128xf32>
    %79 = arith.mulf %76, %78 : vector<128x128xf32>
    %80 = arith.truncf %79 : vector<128x128xf32> to vector<128x128xbf16>
    %c0_26 = arith.constant 0 : index
    %c0_27 = arith.constant 0 : index
    %81 = vector.load %arg11[%c0_26, %c0_27] : memref<128x256xbf16, #tpu.memory_space<vmem>>, vector<128x128xbf16>
    tpu.vector_store %arg11[%c0_26, %c0_27], %80 {strides = array<i32>} : memref<128x256xbf16, #tpu.memory_space<vmem>>, vector<128x128xbf16>,
    %82 = vector.extract_strided_slice %42 {offsets = [0, 128], sizes = [128, 128], strides = [1, 1]} : vector<128x256xbf16> to vector<128x128xbf16>
    %cst_28 = arith.constant 0xFF800000 : f32
    %83 = vector.broadcast %cst_28 : f32 to vector<128x1xf32>
    %cst_29 = arith.constant 0.000000e+00 : f32
    %84 = vector.broadcast %cst_29 : f32 to vector<128x1xf32>
    %cst_30 = arith.constant 0.000000e+00 : f32
    %85 = vector.broadcast %cst_30 : f32 to vector<128x128xf32>
    %86 = vector.extract_strided_slice %45 {offsets = [128, 0], sizes = [128, 128], strides = [1, 1]} : vector<256x128xbf16> to vector<128x128xbf16>
    %cst_31 = arith.constant dense<0.000000e+00> : vector<128x128xf32>
    %87 = tpu.matmul %82, %86, %cst_31 {dimension_numbers = #tpu.dot_dimension_numbers<[1], [0], [0], [1], [0, 0, 1, 1], [], []>} : vector<128x128xbf16>, vector<128x128xbf16>, vector<128x128xf32> -> vector<128x128xf32>
    %cst_32 = arith.constant -1.000000e+30 : f32
    %88 = vector.broadcast %cst_32 : f32 to vector<128x128xf32>
    %89 = arith.select %50, %87, %88 : vector<128x128xi1>, vector<128x128xf32>
    %cst_33 = arith.constant dense<0xFF800000> : vector<128xf32>
    %90 = vector.multi_reduction <maximumf>, %89, %cst_33 [1] : vector<128x128xf32> to vector<128xf32>
    %91 = vector.shape_cast %90 : vector<128xf32> to vector<128x1xf32>
    %92 = arith.maximumf %83, %91 : vector<128x1xf32>
    %93 = arith.subf %83, %92 : vector<128x1xf32>
    %94 = math.exp %93 : vector<128x1xf32>
    %95 = vector.broadcast %92 : vector<128x1xf32> to vector<128x128xf32>
    %96 = arith.subf %89, %95 : vector<128x128xf32>
    %97 = math.exp %96 : vector<128x128xf32>
    %98 = arith.mulf %94, %84 : vector<128x1xf32>
    %cst_34 = arith.constant dense<0.000000e+00> : vector<128xf32>
    %99 = vector.multi_reduction <add>, %97, %cst_34 [1] : vector<128x128xf32> to vector<128xf32>
    %100 = vector.shape_cast %99 : vector<128xf32> to vector<128x1xf32>
    %101 = arith.addf %98, %100 : vector<128x1xf32>
    %102 = vector.broadcast %94 : vector<128x1xf32> to vector<128x128xf32>
    %103 = arith.mulf %102, %85 : vector<128x128xf32>
    %104 = arith.truncf %97 : vector<128x128xf32> to vector<128x128xbf16>
    %105 = vector.extract_strided_slice %47 {offsets = [0, 128], sizes = [128, 128], strides = [1, 1]} : vector<128x256xbf16> to vector<128x128xbf16>
    %cst_35 = arith.constant dense<0.000000e+00> : vector<128x128xf32>
    %106 = tpu.matmul %104, %105, %cst_35 {dimension_numbers = #tpu.dot_dimension_numbers<[1], [0], [0], [1], [0, 0, 1, 1], [], []>} : vector<128x128xbf16>, vector<128x128xbf16>, vector<128x128xf32> -> vector<128x128xf32>
    %107 = arith.addf %103, %106 : vector<128x128xf32>
    %108 = tpu.reciprocal %101 {approx = true} : vector<128x1xf32> -> vector<128x1xf32>
    %109 = vector.broadcast %108 : vector<128x1xf32> to vector<128x128xf32>
    %110 = arith.mulf %107, %109 : vector<128x128xf32>
    %111 = arith.truncf %110 : vector<128x128xf32> to vector<128x128xbf16>
    %c0_36 = arith.constant 0 : index
    %c128 = arith.constant 128 : index
    %112 = vector.load %arg11[%c0_36, %c128] : memref<128x256xbf16, #tpu.memory_space<vmem>>, vector<128x128xbf16>
    tpu.vector_store %arg11[%c0_36, %c128], %111 {strides = array<i32>} : memref<128x256xbf16, #tpu.memory_space<vmem>>, vector<128x128xbf16>,
    %c0_37 = arith.constant 0 : index
    %c0_38 = arith.constant 0 : index
    %113 = vector.load %arg11[%c0_37, %c0_38] : memref<128x256xbf16, #tpu.memory_space<vmem>>, vector<128x256xbf16>
    %c0_39 = arith.constant 0 : index
    %c0_40 = arith.constant 0 : index
    %114 = vector.load %arg5[%c0_39, %c0_40] : memref<256x256xbf16, #tpu.memory_space<vmem>>, vector<256x256xbf16>
    %cst_41 = arith.constant dense<0.000000e+00> : vector<128x256xf32>
    %115 = tpu.matmul %113, %114, %cst_41 {dimension_numbers = #tpu.dot_dimension_numbers<[1], [0], [0], [1], [0, 0, 1, 1], [], []>} : vector<128x256xbf16>, vector<256x256xbf16>, vector<128x256xf32> -> vector<128x256xf32>
    %116 = arith.addf %1, %115 : vector<128x256xf32>
    %117 = arith.mulf %116, %116 : vector<128x256xf32>
    %cst_42 = arith.constant dense<0.000000e+00> : vector<128xf32>
    %118 = vector.multi_reduction <add>, %117, %cst_42 [1] : vector<128x256xf32> to vector<128xf32>
    %119 = vector.shape_cast %118 : vector<128xf32> to vector<128x1xf32>
    %cst_43 = arith.constant 2.560000e+02 : f32
    %120 = vector.broadcast %cst_43 : f32 to vector<128x1xf32>
    %121 = arith.divf %119, %120 : vector<128x1xf32>
    %cst_44 = arith.constant 9.99999974E-6 : f32
    %122 = vector.broadcast %cst_44 : f32 to vector<128x1xf32>
    %123 = arith.addf %121, %122 : vector<128x1xf32>
    %124 = math.rsqrt %123 : vector<128x1xf32>
    %125 = vector.broadcast %124 : vector<128x1xf32> to vector<128x256xf32>
    %126 = arith.mulf %116, %125 : vector<128x256xf32>
    %127 = vector.broadcast %3 : vector<1x256xf32> to vector<128x256xf32>
    %128 = arith.mulf %126, %127 : vector<128x256xf32>
    %129 = arith.truncf %128 : vector<128x256xf32> to vector<128x256xbf16>
    %cst_45 = arith.constant 0.000000e+00 : f32
    %130 = vector.broadcast %cst_45 : f32 to vector<128x256xf32>
    %c0_46 = arith.constant 0 : index
    %c0_47 = arith.constant 0 : index
    %131 = vector.load %arg6[%c0_46, %c0_47] : memref<256x1024xbf16, #tpu.memory_space<vmem>>, vector<256x1024xbf16>
    %cst_48 = arith.constant dense<0.000000e+00> : vector<128x1024xf32>
    %132 = tpu.matmul %129, %131, %cst_48 {dimension_numbers = #tpu.dot_dimension_numbers<[1], [0], [0], [1], [0, 0, 1, 1], [], []>} : vector<128x256xbf16>, vector<256x1024xbf16>, vector<128x1024xf32> -> vector<128x1024xf32>
    %133 = vector.extract_strided_slice %132 {offsets = [0, 0], sizes = [128, 512], strides = [1, 1]} : vector<128x1024xf32> to vector<128x512xf32>
    %134 = vector.extract_strided_slice %132 {offsets = [0, 512], sizes = [128, 512], strides = [1, 1]} : vector<128x1024xf32> to vector<128x512xf32>
    %cst_49 = arith.constant 0.000000e+00 : f32
    %135 = vector.broadcast %cst_49 : f32 to vector<128x512xf32>
    %136 = arith.subf %135, %133 : vector<128x512xf32>
    %137 = math.exp %136 : vector<128x512xf32>
    %cst_50 = arith.constant 1.000000e+00 : f32
    %138 = vector.broadcast %cst_50 : f32 to vector<128x512xf32>
    %139 = arith.addf %138, %137 : vector<128x512xf32>
    %140 = tpu.reciprocal %139 {approx = true} : vector<128x512xf32> -> vector<128x512xf32>
    %141 = arith.mulf %133, %140 : vector<128x512xf32>
    %142 = arith.mulf %141, %134 : vector<128x512xf32>
    %143 = arith.truncf %142 : vector<128x512xf32> to vector<128x512xbf16>
    %c0_51 = arith.constant 0 : index
    %c0_52 = arith.constant 0 : index
    %144 = vector.load %arg7[%c0_51, %c0_52] : memref<512x256xbf16, #tpu.memory_space<vmem>>, vector<512x256xbf16>
    %cst_53 = arith.constant dense<0.000000e+00> : vector<128x256xf32>
    %145 = tpu.matmul %143, %144, %cst_53 {dimension_numbers = #tpu.dot_dimension_numbers<[1], [0], [0], [1], [0, 0, 1, 1], [], []>} : vector<128x512xbf16>, vector<512x256xbf16>, vector<128x256xf32> -> vector<128x256xf32>
    %146 = arith.addf %130, %145 : vector<128x256xf32>
    %147 = arith.addf %116, %146 : vector<128x256xf32>
    %c0_54 = arith.constant 0 : index
    %c0_55 = arith.constant 0 : index
    %c0_56 = arith.constant 0 : index
    %148 = vector.load %arg10[%c0_54, %c0_55, %c0_56] : memref<1x128x256xf32, #tpu.memory_space<vmem>>, vector<1x128x256xf32>
    %149 = vector.shape_cast %148 : vector<1x128x256xf32> to vector<128x256xf32>
    %150 = vector.shape_cast %147 : vector<128x256xf32> to vector<1x128x256xf32>
    tpu.vector_store %arg10[%c0_54, %c0_55, %c0_56], %150 {strides = array<i32>} : memref<1x128x256xf32, #tpu.memory_space<vmem>>, vector<1x128x256xf32>,
    return
  }
  func.func @transform_0(%arg0: i32) -> (i32, i32, i32) {
    %c0_i32 = arith.constant 0 : i32
    %c0_i32_0 = arith.constant 0 : i32
    %c0_i32_1 = arith.constant 0 : i32
    return %arg0, %c0_i32, %c0_i32_0 : i32, i32, i32
  }
  func.func @transform_1(%arg0: i32) -> (i32, i32) {
    %c0_i32 = arith.constant 0 : i32
    %c0_i32_0 = arith.constant 0 : i32
    %c0_i32_1 = arith.constant 0 : i32
    return %c0_i32, %c0_i32_0 : i32, i32
  }
  func.func @transform_2(%arg0: i32) -> (i32, i32) {
    %c0_i32 = arith.constant 0 : i32
    %c0_i32_0 = arith.constant 0 : i32
    %c0_i32_1 = arith.constant 0 : i32
    return %c0_i32, %c0_i32_0 : i32, i32
  }
  func.func @transform_3(%arg0: i32) -> (i32, i32) {
    %c0_i32 = arith.constant 0 : i32
    %c0_i32_0 = arith.constant 0 : i32
    %c0_i32_1 = arith.constant 0 : i32
    return %c0_i32, %c0_i32_0 : i32, i32
  }
  func.func @transform_4(%arg0: i32) -> (i32, i32) {
    %c0_i32 = arith.constant 0 : i32
    %c0_i32_0 = arith.constant 0 : i32
    %c0_i32_1 = arith.constant 0 : i32
    return %c0_i32, %c0_i32_0 : i32, i32
  }
  func.func @transform_5(%arg0: i32) -> (i32, i32) {
    %c0_i32 = arith.constant 0 : i32
    %c0_i32_0 = arith.constant 0 : i32
    %c0_i32_1 = arith.constant 0 : i32
    return %c0_i32, %c0_i32_0 : i32, i32
  }
  func.func @transform_6(%arg0: i32) -> (i32, i32) {
    %c0_i32 = arith.constant 0 : i32
    %c0_i32_0 = arith.constant 0 : i32
    %c0_i32_1 = arith.constant 0 : i32
    return %c0_i32, %c0_i32_0 : i32, i32
  }
  func.func @transform_7(%arg0: i32) -> (i32, i32) {
    %c0_i32 = arith.constant 0 : i32
    %c0_i32_0 = arith.constant 0 : i32
    %c0_i32_1 = arith.constant 0 : i32
    return %c0_i32, %c0_i32_0 : i32, i32
  }
  func.func @transform_8(%arg0: i32) -> (i32, i32) {
    %c0_i32 = arith.constant 0 : i32
    %c0_i32_0 = arith.constant 0 : i32
    %c0_i32_1 = arith.constant 0 : i32
    return %c0_i32, %c0_i32_0 : i32, i32
  }
  func.func @transform_9(%arg0: i32) -> (i32, i32, i32) {
    %c0_i32 = arith.constant 0 : i32
    %c0_i32_0 = arith.constant 0 : i32
    %c0_i32_1 = arith.constant 0 : i32
    return %arg0, %c0_i32, %c0_i32_0 : i32, i32, i32
  }
}

</mosaic_0001>

<llo_original>
// kernel: tpu_custom_call.1
$region0: #{tpu_custom_call.1}
  #allocation0 [shape = 'u32[]', space=smem, size = 0x4, offset = 0x4, fixed_abs, tag = 'smem constant byte address 0x4 - core index']
  #allocation1 [shape = 'u32[144,128]{1,0:T(1,128)}', space=vmem, size = 0x12000, scoped, tag = 'internal scratch']
  #allocation2 [shape = 'bf16[128,256]{1,0:T(8,128)(2,1)}', space=vmem, size = 0x10000, scoped, tag = 'scratch operand']
  %s0 = inlined_call_operand.hbm [shape: f32[2,128,256], index: 0, kind: input, shape index: {}]
  %s1 = inlined_call_operand.hbm [shape: f32[1,256], index: 1, kind: input, shape index: {}]
  %s2 = inlined_call_operand.vmem [shape: f32[1,256], index: 2, kind: input, shape index: {}]
  %s3 = inlined_call_operand.hbm [shape: bf16[256,768], index: 3, kind: input, shape index: {}]
  %s4 = inlined_call_operand.hbm [shape: bf16[256,256], index: 4, kind: input, shape index: {}]
  %s5 = inlined_call_operand.hbm [shape: bf16[256,1024], index: 5, kind: input, shape index: {}]
  %s6 = inlined_call_operand.hbm [shape: bf16[512,256], index: 6, kind: input, shape index: {}]
  %s7 = inlined_call_operand.hbm [shape: f32[128,128], index: 7, kind: input, shape index: {}]
  %s8 = inlined_call_operand.hbm [shape: f32[128,128], index: 8, kind: input, shape index: {}]
  %s9 = inlined_call_operand.hbm [shape: f32[2,128,256], index: 9, kind: output, shape index: {}]
  %s10 = sld [smem:[#allocation0]]
  $region101: #{tpu_custom_call.1} parent=0
    _
  %s12 = ssub.s32 1, %s10
  %s13 = scalar_select 0, %s12, %s10
  $region1: #{tpu_custom_call.1} parent=0
    #allocation3 [shape = 'u8[262144]{0}', space=vmem, size = 0x40000, scoped, tag = 'input window, operand 0']
    #allocation4 [shape = 's32[2]{0}', space=sflag, size = 0x8, scoped, tag = 'scoped memory for tpu_custom_call.1']
    #allocation5 [shape = 's32[2]{0}', space=sflag, size = 0x8, scoped, tag = 'scoped memory for tpu_custom_call.1']
    #allocation6 [shape = 'u8[1024]{0}', space=vmem, size = 0x400, scoped, tag = 'input window, operand 1, single buffered']
    #allocation7 [shape = 's32[1]{0}', space=sflag, size = 0x4, scoped, tag = 'scoped memory for tpu_custom_call.1']
    #allocation8 [shape = 'u8[393216]{0}', space=vmem, size = 0x60000, scoped, tag = 'input window, operand 3, single buffered']
    #allocation9 [shape = 'u8[131072]{0}', space=vmem, size = 0x20000, scoped, tag = 'input window, operand 4, single buffered']
    #allocation10 [shape = 's32[1]{0}', space=sflag, size = 0x4, scoped, tag = 'scoped memory for tpu_custom_call.1']
    #allocation11 [shape = 'u8[524288]{0}', space=vmem, size = 0x80000, scoped, tag = 'input window, operand 5, single buffered']
    #allocation12 [shape = 'u8[262144]{0}', space=vmem, size = 0x40000, scoped, tag = 'input window, operand 6, single buffered']
    #allocation13 [shape = 's32[1]{0}', space=sflag, size = 0x4, scoped, tag = 'scoped memory for tpu_custom_call.1']
    #allocation14 [shape = 'u8[65536]{0}', space=vmem, size = 0x10000, scoped, tag = 'input window, operand 7, single buffered']
    #allocation15 [shape = 'u8[65536]{0}', space=vmem, size = 0x10000, scoped, tag = 'input window, operand 8, single buffered']
    #allocation16 [shape = 's32[1]{0}', space=sflag, size = 0x4, scoped, tag = 'scoped memory for tpu_custom_call.1']
    #allocation17 [shape = 'u8[262144]{0}', space=vmem, size = 0x40000, scoped, tag = 'output window, operand 0']
    %14 = vsyncpa [#allocation4], 0
    %s15 = scalar_lea.sflag [#allocation4], 1
    %16 = vsyncpa %s15, 0
    %17 = vsyncpa [#allocation7], 0
    %18 = vsyncpa [#allocation10], 0
    %19 = vsyncpa [#allocation13], 0
    %20 = vsyncpa [#allocation16], 0
    %21 = vsyncpa [#allocation5], 0
    %s22 = scalar_lea.sflag [#allocation5], 1
    %23 = vsyncpa %s22, 0
    loop: start=0, step=1, limit=4
    $region2: #{tpu_custom_call.1} parent=1 // loop_pre_header
      _
    $region3: #{tpu_custom_call.1} parent=1 // loop_header
      %s25 = sphi 0, %s29
      %p26 = scmp.ge.s32.totalorder %s25, 4
      %s35 = sphi 0, %s37
      %s38 = sphi 0, %s35
      %s39 = sphi 0, %s38
      %s55 = sphi 0, %s39
      %s59 = sphi 0, %s59
      %s61 = sphi 0, %s59
      %s62 = sphi 0, %s61
      %s76 = sphi 0, %s62
      %s80 = sphi 0, %s80
      %s82 = sphi 0, %s80
      %s83 = sphi 0, %s82
      %s97 = sphi 0, %s83
      %s101 = sphi 0, %s101
      %s103 = sphi 0, %s101
      %s104 = sphi 0, %s103
      %s118 = sphi 0, %s104
      %s122 = sphi 0, %s122
      %s124 = sphi 0, %s122
      %s125 = sphi 0, %s124
      %s139 = sphi 0, %s125
      %s143 = sphi 0, %s143
      %s145 = sphi 0, %s143
      %s146 = sphi 0, %s145
      %s160 = sphi 0, %s146
      %s164 = sphi 0, %s164
      %s166 = sphi 0, %s164
      %s167 = sphi 0, %s166
      %s181 = sphi 0, %s167
      %s185 = sphi 0, %s185
      %s187 = sphi 0, %s185
      %s188 = sphi 0, %s187
      %s202 = sphi 0, %s188
      %s206 = sphi 0, %s206
      %s208 = sphi 0, %s206
      %s209 = sphi 0, %s208
      %s223 = sphi 0, %s209
      %s229 = sphi 0, %s231
      %s232 = sphi 0, %s229
      %s233 = sphi 0, %s232
      %s249 = sphi 0, %s233
    $region4: #{tpu_custom_call.1} parent=1 // loop_header_branch
      %28 = sbr.rel (%p26) target = $region8
    $region5: #{tpu_custom_call.1} parent=1 // loop_body
      %s30 = ssub.s32 %s25, 1
      %s31 = ssub.s32 %s25, 2
      %s32 = sadd.s32 %s25, 1
      %s33 = ssub.s32 %s25, %s32
      %p34 = scmp.eq.s32.totalorder %s33, 0
      %s36 = sadd.s32 %s35, 1
      %s37 = scalar_select %p34, %s35, %s36
      %p40 = pneg %p34
      %p41 = scmp.eq.s32.totalorder %s25, 1
      %p42 = por %p40, %p41
      %p43 = scmp.ne.s32.totalorder %s35, %s38
      %p44 = scmp.eq.s32.totalorder %s25, 0
      %p45 = por %p43, %p44
      %p46 = scmp.ne.s32.totalorder %s35, %s38
      %p47 = scmp.eq.s32.totalorder %s30, 1
      %p48 = por %p46, %p47
      %p49 = scmp.ne.s32.totalorder %s38, %s39
      %p50 = scmp.eq.s32.totalorder %s30, 0
      %p51 = por %p49, %p50
      %p52 = scmp.ne.s32.totalorder %s38, %s39
      %p53 = scmp.eq.s32.totalorder %s31, 1
      %p54 = por %p52, %p53
      %p56 = scmp.ne.s32.totalorder %s39, %s55
      %p57 = scmp.eq.s32.totalorder %s31, 0
      %p58 = por %p56, %p57
      %s60 = sadd.s32 %s59, 1
      %p63 = scmp.eq.s32.totalorder %s25, 1
      %p64 = scmp.ne.s32.totalorder %s59, %s61
      %p65 = scmp.eq.s32.totalorder %s25, 0
      %p66 = por %p64, %p65
      %p67 = scmp.ne.s32.totalorder %s59, %s61
      %p68 = scmp.eq.s32.totalorder %s30, 1
      %p69 = por %p67, %p68
      %p70 = scmp.ne.s32.totalorder %s61, %s62
      %p71 = scmp.eq.s32.totalorder %s30, 0
      %p72 = por %p70, %p71
      %p73 = scmp.ne.s32.totalorder %s61, %s62
      %p74 = scmp.eq.s32.totalorder %s31, 1
      %p75 = por %p73, %p74
      %p77 = scmp.ne.s32.totalorder %s62, %s76
      %p78 = scmp.eq.s32.totalorder %s31, 0
      %p79 = por %p77, %p78
      %s81 = sadd.s32 %s80, 1
      %p84 = scmp.eq.s32.totalorder %s25, 1
      %p85 = scmp.ne.s32.totalorder %s80, %s82
      %p86 = scmp.eq.s32.totalorder %s25, 0
      %p87 = por %p85, %p86
      %p88 = scmp.ne.s32.totalorder %s80, %s82
      %p89 = scmp.eq.s32.totalorder %s30, 1
      %p90 = por %p88, %p89
      %p91 = scmp.ne.s32.totalorder %s82, %s83
      %p92 = scmp.eq.s32.totalorder %s30, 0
      %p93 = por %p91, %p92
      %p94 = scmp.ne.s32.totalorder %s82, %s83
      %p95 = scmp.eq.s32.totalorder %s31, 1
      %p96 = por %p94, %p95
      %p98 = scmp.ne.s32.totalorder %s83, %s97
      %p99 = scmp.eq.s32.totalorder %s31, 0
      %p100 = por %p98, %p99
      %s102 = sadd.s32 %s101, 1
      %p105 = scmp.eq.s32.totalorder %s25, 1
      %p106 = scmp.ne.s32.totalorder %s101, %s103
      %p107 = scmp.eq.s32.totalorder %s25, 0
      %p108 = por %p106, %p107
      %p109 = scmp.ne.s32.totalorder %s101, %s103
      %p110 = scmp.eq.s32.totalorder %s30, 1
      %p111 = por %p109, %p110
      %p112 = scmp.ne.s32.totalorder %s103, %s104
      %p113 = scmp.eq.s32.totalorder %s30, 0
      %p114 = por %p112, %p113
      %p115 = scmp.ne.s32.totalorder %s103, %s104
      %p116 = scmp.eq.s32.totalorder %s31, 1
      %p117 = por %p115, %p116
      %p119 = scmp.ne.s32.totalorder %s104, %s118
      %p120 = scmp.eq.s32.totalorder %s31, 0
      %p121 = por %p119, %p120
      %s123 = sadd.s32 %s122, 1
      %p126 = scmp.eq.s32.totalorder %s25, 1
      %p127 = scmp.ne.s32.totalorder %s122, %s124
      %p128 = scmp.eq.s32.totalorder %s25, 0
      %p129 = por %p127, %p128
      %p130 = scmp.ne.s32.totalorder %s122, %s124
      %p131 = scmp.eq.s32.totalorder %s30, 1
      %p132 = por %p130, %p131
      %p133 = scmp.ne.s32.totalorder %s124, %s125
      %p134 = scmp.eq.s32.totalorder %s30, 0
      %p135 = por %p133, %p134
      %p136 = scmp.ne.s32.totalorder %s124, %s125
      %p137 = scmp.eq.s32.totalorder %s31, 1
      %p138 = por %p136, %p137
      %p140 = scmp.ne.s32.totalorder %s125, %s139
      %p141 = scmp.eq.s32.totalorder %s31, 0
      %p142 = por %p140, %p141
      %s144 = sadd.s32 %s143, 1
      %p147 = scmp.eq.s32.totalorder %s25, 1
      %p148 = scmp.ne.s32.totalorder %s143, %s145
      %p149 = scmp.eq.s32.totalorder %s25, 0
      %p150 = por %p148, %p149
      %p151 = scmp.ne.s32.totalorder %s143, %s145
      %p152 = scmp.eq.s32.totalorder %s30, 1
      %p153 = por %p151, %p152
      %p154 = scmp.ne.s32.totalorder %s145, %s146
      %p155 = scmp.eq.s32.totalorder %s30, 0
      %p156 = por %p154, %p155
      %p157 = scmp.ne.s32.totalorder %s145, %s146
      %p158 = scmp.eq.s32.totalorder %s31, 1
      %p159 = por %p157, %p158
      %p161 = scmp.ne.s32.totalorder %s146, %s160
      %p162 = scmp.eq.s32.totalorder %s31, 0
      %p163 = por %p161, %p162
      %s165 = sadd.s32 %s164, 1
      %p168 = scmp.eq.s32.totalorder %s25, 1
      %p169 = scmp.ne.s32.totalorder %s164, %s166
      %p170 = scmp.eq.s32.totalorder %s25, 0
      %p171 = por %p169, %p170
      %p172 = scmp.ne.s32.totalorder %s164, %s166
      %p173 = scmp.eq.s32.totalorder %s30, 1
      %p174 = por %p172, %p173
      %p175 = scmp.ne.s32.totalorder %s166, %s167
      %p176 = scmp.eq.s32.totalorder %s30, 0
      %p177 = por %p175, %p176
      %p178 = scmp.ne.s32.totalorder %s166, %s167
      %p179 = scmp.eq.s32.totalorder %s31, 1
      %p180 = por %p178, %p179
      %p182 = scmp.ne.s32.totalorder %s167, %s181
      %p183 = scmp.eq.s32.totalorder %s31, 0
      %p184 = por %p182, %p183
      %s186 = sadd.s32 %s185, 1
      %p189 = scmp.eq.s32.totalorder %s25, 1
      %p190 = scmp.ne.s32.totalorder %s185, %s187
      %p191 = scmp.eq.s32.totalorder %s25, 0
      %p192 = por %p190, %p191
      %p193 = scmp.ne.s32.totalorder %s185, %s187
      %p194 = scmp.eq.s32.totalorder %s30, 1
      %p195 = por %p193, %p194
      %p196 = scmp.ne.s32.totalorder %s187, %s188
      %p197 = scmp.eq.s32.totalorder %s30, 0
      %p198 = por %p196, %p197
      %p199 = scmp.ne.s32.totalorder %s187, %s188
      %p200 = scmp.eq.s32.totalorder %s31, 1
      %p201 = por %p199, %p200
      %p203 = scmp.ne.s32.totalorder %s188, %s202
      %p204 = scmp.eq.s32.totalorder %s31, 0
      %p205 = por %p203, %p204
      %s207 = sadd.s32 %s206, 1
      %p210 = scmp.eq.s32.totalorder %s25, 1
      %p211 = scmp.ne.s32.totalorder %s206, %s208
      %p212 = scmp.eq.s32.totalorder %s25, 0
      %p213 = por %p211, %p212
      %p214 = scmp.ne.s32.totalorder %s206, %s208
      %p215 = scmp.eq.s32.totalorder %s30, 1
      %p216 = por %p214, %p215
      %p217 = scmp.ne.s32.totalorder %s208, %s209
      %p218 = scmp.eq.s32.totalorder %s30, 0
      %p219 = por %p217, %p218
      %p220 = scmp.ne.s32.totalorder %s208, %s209
      %p221 = scmp.eq.s32.totalorder %s31, 1
      %p222 = por %p220, %p221
      %p224 = scmp.ne.s32.totalorder %s209, %s223
      %p225 = scmp.eq.s32.totalorder %s31, 0
      %p226 = por %p224, %p225
      %s227 = ssub.s32 %s25, %s32
      %p228 = scmp.eq.s32.totalorder %s227, 0
      %s230 = sadd.s32 %s229, 1
      %s231 = scalar_select %p228, %s229, %s230
      %p234 = pneg %p228
      %p235 = scmp.eq.s32.totalorder %s25, 1
      %p236 = por %p234, %p235
      %p237 = scmp.ne.s32.totalorder %s229, %s232
      %p238 = scmp.eq.s32.totalorder %s25, 0
      %p239 = por %p237, %p238
      %p240 = scmp.ne.s32.totalorder %s229, %s232
      %p241 = scmp.eq.s32.totalorder %s30, 1
      %p242 = por %p240, %p241
      %p243 = scmp.ne.s32.totalorder %s232, %s233
      %p244 = scmp.eq.s32.totalorder %s30, 0
      %p245 = por %p243, %p244
      %p246 = scmp.ne.s32.totalorder %s232, %s233
      %p247 = scmp.eq.s32.totalorder %s31, 1
      %p248 = por %p246, %p247
      %p250 = scmp.ne.s32.totalorder %s233, %s249
      %p251 = scmp.eq.s32.totalorder %s31, 0
      %p252 = por %p250, %p251
      %p253 = scmp.le.s32.totalorder 1, %s25
      %p254 = scmp.lt.s32.totalorder %s25, 3
      %p255 = pnand %p253, %p254
      %p256 = pneg %p255
      // Predicated region
      $region9: #{tpu_custom_call.1} parent=5 // pred_check
        _
      $region10: #{tpu_custom_call.1} parent=5 // pred_check_branch
        %258 = sbr.rel (%p255) target = $region12
      $region11: #{tpu_custom_call.1} parent=5 // pred_region
        %s259 = ssub.s32 %s25, 1
        // Predicated region
        $region13: #{tpu_custom_call.1} parent=11 // pred_check
          %p260 = pneg %p72
        $region14: #{tpu_custom_call.1} parent=11 // pred_check_branch
          %262 = sbr.rel (%p260) target = $region16
        $region15: #{tpu_custom_call.1} parent=11 // pred_region
          %s264 = ssub.s32 32, 32
          %265 = vsyncadd [#allocation7], %s264
          %s267 = sshll.u32 [#allocation6], 4
          %s268 = int_to_ptr.vmem [resolvable:$true] %s267
          %270 = dma.hbm_to_vmem [thread:$0]  %s1, 32, %s268, [#allocation7]
        $region16: #{tpu_custom_call.1} parent=11 // pred_fallthru
          _
        // Predicated region
        $region17: #{tpu_custom_call.1} parent=11 // pred_check
          %p271 = pneg %p93
        $region18: #{tpu_custom_call.1} parent=11 // pred_check_branch
          %273 = sbr.rel (%p271) target = $region20
        $region19: #{tpu_custom_call.1} parent=11 // pred_region
          _
        $region20: #{tpu_custom_call.1} parent=11 // pred_fallthru
          _
        // Predicated region
        $region21: #{tpu_custom_call.1} parent=11 // pred_check
          %p274 = pneg %p114
        $region22: #{tpu_custom_call.1} parent=11 // pred_check_branch
          %276 = sbr.rel (%p274) target = $region24
        $region23: #{tpu_custom_call.1} parent=11 // pred_region
          %s278 = ssub.s32 12288, 12288
          %279 = vsyncadd [#allocation7], %s278
          %s280 = sshll.u32 [#allocation8], 4
          %s281 = int_to_ptr.vmem [resolvable:$true] %s280
          %286 = dma.hbm_to_vmem [thread:$0]  %s3, 12288, %s281, [#allocation7], 384, 384, 24
        $region24: #{tpu_custom_call.1} parent=11 // pred_fallthru
          _
        // Predicated region
        $region25: #{tpu_custom_call.1} parent=11 // pred_check
          %p287 = pneg %p135
        $region26: #{tpu_custom_call.1} parent=11 // pred_check_branch
          %289 = sbr.rel (%p287) target = $region28
        $region27: #{tpu_custom_call.1} parent=11 // pred_region
          %s291 = ssub.s32 4096, 4096
          %292 = vsyncadd [#allocation10], %s291
          %s293 = sshll.u32 [#allocation9], 4
          %s294 = int_to_ptr.vmem [resolvable:$true] %s293
          %299 = dma.hbm_to_vmem [thread:$0]  %s4, 4096, %s294, [#allocation10], 128, 128, 8
        $region28: #{tpu_custom_call.1} parent=11 // pred_fallthru
          _
        // Predicated region
        $region29: #{tpu_custom_call.1} parent=11 // pred_check
          %p300 = pneg %p156
        $region30: #{tpu_custom_call.1} parent=11 // pred_check_branch
          %302 = sbr.rel (%p300) target = $region32
        $region31: #{tpu_custom_call.1} parent=11 // pred_region
          %s304 = ssub.s32 16384, 16384
          %305 = vsyncadd [#allocation10], %s304
          %s306 = sshll.u32 [#allocation11], 4
          %s307 = int_to_ptr.vmem [resolvable:$true] %s306
          %312 = dma.hbm_to_vmem [thread:$0]  %s5, 16384, %s307, [#allocation10], 512, 512, 32
        $region32: #{tpu_custom_call.1} parent=11 // pred_fallthru
          _
        // Predicated region
        $region33: #{tpu_custom_call.1} parent=11 // pred_check
          %p313 = pneg %p177
        $region34: #{tpu_custom_call.1} parent=11 // pred_check_branch
          %315 = sbr.rel (%p313) target = $region36
        $region35: #{tpu_custom_call.1} parent=11 // pred_region
          %s317 = ssub.s32 8192, 8192
          %318 = vsyncadd [#allocation13], %s317
          %s319 = sshll.u32 [#allocation12], 4
          %s320 = int_to_ptr.vmem [resolvable:$true] %s319
          %325 = dma.hbm_to_vmem [thread:$0]  %s6, 8192, %s320, [#allocation13], 128, 128, 8
        $region36: #{tpu_custom_call.1} parent=11 // pred_fallthru
          _
        // Predicated region
        $region37: #{tpu_custom_call.1} parent=11 // pred_check
          %p326 = pneg %p198
        $region38: #{tpu_custom_call.1} parent=11 // pred_check_branch
          %328 = sbr.rel (%p326) target = $region40
        $region39: #{tpu_custom_call.1} parent=11 // pred_region
          %s330 = ssub.s32 2048, 2048
          %331 = vsyncadd [#allocation13], %s330
          %s332 = sshll.u32 [#allocation14], 4
          %s333 = int_to_ptr.vmem [resolvable:$true] %s332
          %338 = dma.hbm_to_vmem [thread:$0]  %s7, 2048, %s333, [#allocation13], 128, 128, 8
        $region40: #{tpu_custom_call.1} parent=11 // pred_fallthru
          _
        // Predicated region
        $region41: #{tpu_custom_call.1} parent=11 // pred_check
          %p339 = pneg %p219
        $region42: #{tpu_custom_call.1} parent=11 // pred_check_branch
          %341 = sbr.rel (%p339) target = $region44
        $region43: #{tpu_custom_call.1} parent=11 // pred_region
          %s343 = ssub.s32 2048, 2048
          %344 = vsyncadd [#allocation16], %s343
          %s345 = sshll.u32 [#allocation15], 4
          %s346 = int_to_ptr.vmem [resolvable:$true] %s345
          %351 = dma.hbm_to_vmem [thread:$0]  %s8, 2048, %s346, [#allocation16], 128, 128, 8
        $region44: #{tpu_custom_call.1} parent=11 // pred_fallthru
          _
      $region12: #{tpu_custom_call.1} parent=5 // pred_fallthru
        _
      %p352 = scmp.lt.s32.totalorder %s25, 2
      // Predicated region
      $region45: #{tpu_custom_call.1} parent=5 // pred_check
        %p353 = pneg %p352
      $region46: #{tpu_custom_call.1} parent=5 // pred_check_branch
        %355 = sbr.rel (%p353) target = $region48
      $region47: #{tpu_custom_call.1} parent=5 // pred_region
        // Predicated region
        $region49: #{tpu_custom_call.1} parent=47 // pred_check
          %p356 = pneg %p45
        $region50: #{tpu_custom_call.1} parent=47 // pred_check_branch
          %358 = sbr.rel (%p356) target = $region52
        $region51: #{tpu_custom_call.1} parent=47 // pred_region
          %s359 = sand.u32 %s35, 1
          %s360 = scalar_lea.sflag [#allocation4], %s359
          %s361 = sand.u32 %s35, 1
          %s362 = smul.addr %s361, 256
          %s363 = scalar_lea.vmem [#allocation3], %s362
          %s365 = ssub.s32 4096, 4096
          %366 = vsyncadd %s360, %s365
          %s367 = smul.addr %s25, 32
          %s368 = smul.addr %s367, 128
          %s369 = scalar_lea.hbm %s0, %s368
          %s370 = sshll.u32 %s363, 4
          %s371 = int_to_ptr.vmem [resolvable:$true] %s370
          %376 = dma.hbm_to_vmem [thread:$0]  %s369, 4096, %s371, %s360, 256, 256, 16
        $region52: #{tpu_custom_call.1} parent=47 // pred_fallthru
          _
      $region48: #{tpu_custom_call.1} parent=5 // pred_fallthru
        _
      %p377 = scmp.le.s32.totalorder 1, %s25
      %p378 = scmp.lt.s32.totalorder %s25, 3
      %p379 = pnand %p377, %p378
      %p380 = pneg %p379
      // Predicated region
      $region53: #{tpu_custom_call.1} parent=5 // pred_check
        _
      $region54: #{tpu_custom_call.1} parent=5 // pred_check_branch
        %382 = sbr.rel (%p379) target = $region56
      $region55: #{tpu_custom_call.1} parent=5 // pred_region
        %s383 = ssub.s32 %s25, 1
        %s384 = sand.u32 %s38, 1
        %s385 = scalar_lea.sflag [#allocation4], %s384
        %s386 = sand.u32 %s38, 1
        %s387 = smul.addr %s386, 256
        %s388 = scalar_lea.vmem [#allocation3], %s387
        // Predicated region
        $region57: #{tpu_custom_call.1} parent=55 // pred_check
          %p389 = pneg %p51
        $region58: #{tpu_custom_call.1} parent=55 // pred_check_branch
          %391 = sbr.rel (%p389) target = $region60
        $region59: #{tpu_custom_call.1} parent=55 // pred_region
          %392 = dma.done %s385, 4096
        $region60: #{tpu_custom_call.1} parent=55 // pred_fallthru
          _
        // Predicated region
        $region61: #{tpu_custom_call.1} parent=55 // pred_check
          %p393 = pneg %p72
        $region62: #{tpu_custom_call.1} parent=55 // pred_check_branch
          %395 = sbr.rel (%p393) target = $region64
        $region63: #{tpu_custom_call.1} parent=55 // pred_region
          %396 = dma.done [#allocation7], 32
        $region64: #{tpu_custom_call.1} parent=55 // pred_fallthru
          _
        // Predicated region
        $region65: #{tpu_custom_call.1} parent=55 // pred_check
          %p397 = pneg %p114
        $region66: #{tpu_custom_call.1} parent=55 // pred_check_branch
          %399 = sbr.rel (%p397) target = $region68
        $region67: #{tpu_custom_call.1} parent=55 // pred_region
          %400 = dma.done [#allocation7], 12288
        $region68: #{tpu_custom_call.1} parent=55 // pred_fallthru
          _
        // Predicated region
        $region69: #{tpu_custom_call.1} parent=55 // pred_check
          %p401 = pneg %p135
        $region70: #{tpu_custom_call.1} parent=55 // pred_check_branch
          %403 = sbr.rel (%p401) target = $region72
        $region71: #{tpu_custom_call.1} parent=55 // pred_region
          %404 = dma.done [#allocation10], 4096
        $region72: #{tpu_custom_call.1} parent=55 // pred_fallthru
          _
        // Predicated region
        $region73: #{tpu_custom_call.1} parent=55 // pred_check
          %p405 = pneg %p156
        $region74: #{tpu_custom_call.1} parent=55 // pred_check_branch
          %407 = sbr.rel (%p405) target = $region76
        $region75: #{tpu_custom_call.1} parent=55 // pred_region
          %408 = dma.done [#allocation10], 16384
        $region76: #{tpu_custom_call.1} parent=55 // pred_fallthru
          _
        // Predicated region
        $region77: #{tpu_custom_call.1} parent=55 // pred_check
          %p409 = pneg %p177
        $region78: #{tpu_custom_call.1} parent=55 // pred_check_branch
          %411 = sbr.rel (%p409) target = $region80
        $region79: #{tpu_custom_call.1} parent=55 // pred_region
          %412 = dma.done [#allocation13], 8192
        $region80: #{tpu_custom_call.1} parent=55 // pred_fallthru
          _
        // Predicated region
        $region81: #{tpu_custom_call.1} parent=55 // pred_check
          %p413 = pneg %p198
        $region82: #{tpu_custom_call.1} parent=55 // pred_check_branch
          %415 = sbr.rel (%p413) target = $region84
        $region83: #{tpu_custom_call.1} parent=55 // pred_region
          %416 = dma.done [#allocation13], 2048
        $region84: #{tpu_custom_call.1} parent=55 // pred_fallthru
          _
        // Predicated region
        $region85: #{tpu_custom_call.1} parent=55 // pred_check
          %p417 = pneg %p219
        $region86: #{tpu_custom_call.1} parent=55 // pred_check_branch
          %419 = sbr.rel (%p417) target = $region88
        $region87: #{tpu_custom_call.1} parent=55 // pred_region
          %420 = dma.done [#allocation16], 2048
        $region88: #{tpu_custom_call.1} parent=55 // pred_fallthru
          _
        %s421 = sand.u32 %s38, 1
        %s422 = scalar_lea.sflag [#allocation4], %s421
        %s423 = sand.u32 %s38, 1
        %s424 = smul.addr %s423, 256
        %s425 = scalar_lea.vmem [#allocation3], %s424
        %p426 = pneg %p51
        %p427 = pneg %p48
        %p428 = pneg %p72
        %p429 = pneg %p69
        %p430 = pneg %p93
        %p431 = pneg %p90
        %p432 = pneg %p114
        %p433 = pneg %p111
        %p434 = pneg %p135
        %p435 = pneg %p132
        %p436 = pneg %p156
        %p437 = pneg %p153
        %p438 = pneg %p177
        %p439 = pneg %p174
        %p440 = pneg %p198
        %p441 = pneg %p195
        %p442 = pneg %p219
        %p443 = pneg %p216
        %p444 = pneg %p245
        %p445 = pneg %p242
        %s446 = sand.u32 %s232, 1
        %s447 = scalar_lea.sflag [#allocation5], %s446
        %s448 = sand.u32 %s232, 1
        %s449 = smul.addr %s448, 256
        %s450 = scalar_lea.vmem [#allocation17], %s449
        %v452 = vld [vmem:[%s388] sm:$0xff]
        %v453 = vld [vmem:[%s388 + $0x8] sm:$0xff]
        %v454 = vld [vmem:[%s388 + $0x10] sm:$0xff]
        %v455 = vld [vmem:[%s388 + $0x18] sm:$0xff]
        %v456 = vld [vmem:[%s388 + $0x20] sm:$0xff]
        %v457 = vld [vmem:[%s388 + $0x28] sm:$0xff]
        %v458 = vld [vmem:[%s388 + $0x30] sm:$0xff]
        %v459 = vld [vmem:[%s388 + $0x38] sm:$0xff]
        %v460 = vld [vmem:[%s388 + $0x40] sm:$0xff]
        %v461 = vld [vmem:[%s388 + $0x48] sm:$0xff]
        %v462 = vld [vmem:[%s388 + $0x50] sm:$0xff]
        %v463 = vld [vmem:[%s388 + $0x58] sm:$0xff]
        %v464 = vld [vmem:[%s388 + $0x60] sm:$0xff]
        %v465 = vld [vmem:[%s388 + $0x68] sm:$0xff]
        %v466 = vld [vmem:[%s388 + $0x70] sm:$0xff]
        %v467 = vld [vmem:[%s388 + $0x78] sm:$0xff]
        %v468 = vld [vmem:[%s388 + $0x80] sm:$0xff]
        %v469 = vld [vmem:[%s388 + $0x88] sm:$0xff]
        %v470 = vld [vmem:[%s388 + $0x90] sm:$0xff]
        %v471 = vld [vmem:[%s388 + $0x98] sm:$0xff]
        %v472 = vld [vmem:[%s388 + $0xa0] sm:$0xff]
        %v473 = vld [vmem:[%s388 + $0xa8] sm:$0xff]
        %v474 = vld [vmem:[%s388 + $0xb0] sm:$0xff]
        %v475 = vld [vmem:[%s388 + $0xb8] sm:$0xff]
        %v476 = vld [vmem:[%s388 + $0xc0] sm:$0xff]
        %v477 = vld [vmem:[%s388 + $0xc8] sm:$0xff]
        %v478 = vld [vmem:[%s388 + $0xd0] sm:$0xff]
        %v479 = vld [vmem:[%s388 + $0xd8] sm:$0xff]
        %v480 = vld [vmem:[%s388 + $0xe0] sm:$0xff]
        %v481 = vld [vmem:[%s388 + $0xe8] sm:$0xff]
        %v482 = vld [vmem:[%s388 + $0xf0] sm:$0xff]
        %v483 = vld [vmem:[%s388 + $0xf8] sm:$0xff]
        %v484 = vld [vmem:[#allocation6] sm:$0x3]
        %v485 = vld [vmem:[%s2] sm:$0x3]
        %v486 = vld [vmem:[#allocation14] sm:$0xff]
        %v487 = vld [vmem:[#allocation14 + $0x8] sm:$0xff]
        %v488 = vld [vmem:[#allocation14 + $0x10] sm:$0xff]
        %v489 = vld [vmem:[#allocation14 + $0x18] sm:$0xff]
        %v490 = vld [vmem:[#allocation14 + $0x20] sm:$0xff]
        %v491 = vld [vmem:[#allocation14 + $0x28] sm:$0xff]
        %v492 = vld [vmem:[#allocation14 + $0x30] sm:$0xff]
        %v493 = vld [vmem:[#allocation14 + $0x38] sm:$0xff]
        %v494 = vld [vmem:[#allocation14 + $0x40] sm:$0xff]
        %v495 = vld [vmem:[#allocation14 + $0x48] sm:$0xff]
        %v496 = vld [vmem:[#allocation14 + $0x50] sm:$0xff]
        %v497 = vld [vmem:[#allocation14 + $0x58] sm:$0xff]
        %v498 = vld [vmem:[#allocation14 + $0x60] sm:$0xff]
        %v499 = vld [vmem:[#allocation14 + $0x68] sm:$0xff]
        %v500 = vld [vmem:[#allocation14 + $0x70] sm:$0xff]
        %v501 = vld [vmem:[#allocation14 + $0x78] sm:$0xff]
        %v502 = vld [vmem:[#allocation15] sm:$0xff]
        %v503 = vld [vmem:[#allocation15 + $0x8] sm:$0xff]
        %v504 = vld [vmem:[#allocation15 + $0x10] sm:$0xff]
        %v505 = vld [vmem:[#allocation15 + $0x18] sm:$0xff]
        %v506 = vld [vmem:[#allocation15 + $0x20] sm:$0xff]
        %v507 = vld [vmem:[#allocation15 + $0x28] sm:$0xff]
        %v508 = vld [vmem:[#allocation15 + $0x30] sm:$0xff]
        %v509 = vld [vmem:[#allocation15 + $0x38] sm:$0xff]
        %v510 = vld [vmem:[#allocation15 + $0x40] sm:$0xff]
        %v511 = vld [vmem:[#allocation15 + $0x48] sm:$0xff]
        %v512 = vld [vmem:[#allocation15 + $0x50] sm:$0xff]
        %v513 = vld [vmem:[#allocation15 + $0x58] sm:$0xff]
        %v514 = vld [vmem:[#allocation15 + $0x60] sm:$0xff]
        %v515 = vld [vmem:[#allocation15 + $0x68] sm:$0xff]
        %v516 = vld [vmem:[#allocation15 + $0x70] sm:$0xff]
        %v517 = vld [vmem:[#allocation15 + $0x78] sm:$0xff]
        %v518 = vmul.f32 %v452, %v452
        %v519 = vmul.f32 %v453, %v453
        %v520 = vmul.f32 %v454, %v454
        %v521 = vmul.f32 %v455, %v455
        %v522 = vmul.f32 %v456, %v456
        %v523 = vmul.f32 %v457, %v457
        %v524 = vmul.f32 %v458, %v458
        %v525 = vmul.f32 %v459, %v459
        %v526 = vmul.f32 %v460, %v460
        %v527 = vmul.f32 %v461, %v461
        %v528 = vmul.f32 %v462, %v462
        %v529 = vmul.f32 %v463, %v463
        %v530 = vmul.f32 %v464, %v464
        %v531 = vmul.f32 %v465, %v465
        %v532 = vmul.f32 %v466, %v466
        %v533 = vmul.f32 %v467, %v467
        %v534 = vmul.f32 %v468, %v468
        %v535 = vmul.f32 %v469, %v469
        %v536 = vmul.f32 %v470, %v470
        %v537 = vmul.f32 %v471, %v471
        %v538 = vmul.f32 %v472, %v472
        %v539 = vmul.f32 %v473, %v473
        %v540 = vmul.f32 %v474, %v474
        %v541 = vmul.f32 %v475, %v475
        %v542 = vmul.f32 %v476, %v476
        %v543 = vmul.f32 %v477, %v477
        %v544 = vmul.f32 %v478, %v478
        %v545 = vmul.f32 %v479, %v479
        %v546 = vmul.f32 %v480, %v480
        %v547 = vmul.f32 %v481, %v481
        %v548 = vmul.f32 %v482, %v482
        %v549 = vmul.f32 %v483, %v483
        %v550 = vadd.f32 %v518, %v519
        %551 = vadd.xlane.f32.xlu0 %v550
        %v552 = vpop.xlane.xlu0 %551
        %v553 = vadd.f32 %v520, %v521
        %554 = vadd.xlane.f32.xlu0 %v553
        %v555 = vpop.xlane.xlu0 %554
        %v556 = vadd.f32 %v522, %v523
        %557 = vadd.xlane.f32.xlu0 %v556
        %v558 = vpop.xlane.xlu0 %557
        %v559 = vadd.f32 %v524, %v525
        %560 = vadd.xlane.f32.xlu0 %v559
        %v561 = vpop.xlane.xlu0 %560
        %v562 = vadd.f32 %v526, %v527
        %563 = vadd.xlane.f32.xlu0 %v562
        %v564 = vpop.xlane.xlu0 %563
        %v565 = vadd.f32 %v528, %v529
        %566 = vadd.xlane.f32.xlu0 %v565
        %v567 = vpop.xlane.xlu0 %566
        %v568 = vadd.f32 %v530, %v531
        %569 = vadd.xlane.f32.xlu0 %v568
        %v570 = vpop.xlane.xlu0 %569
        %v571 = vadd.f32 %v532, %v533
        %572 = vadd.xlane.f32.xlu0 %v571
        %v573 = vpop.xlane.xlu0 %572
        %v574 = vadd.f32 %v534, %v535
        %575 = vadd.xlane.f32.xlu0 %v574
        %v576 = vpop.xlane.xlu0 %575
        %v577 = vadd.f32 %v536, %v537
        %578 = vadd.xlane.f32.xlu0 %v577
        %v579 = vpop.xlane.xlu0 %578
        %v580 = vadd.f32 %v538, %v539
        %581 = vadd.xlane.f32.xlu0 %v580
        %v582 = vpop.xlane.xlu0 %581
        %v583 = vadd.f32 %v540, %v541
        %584 = vadd.xlane.f32.xlu0 %v583
        %v585 = vpop.xlane.xlu0 %584
        %v586 = vadd.f32 %v542, %v543
        %587 = vadd.xlane.f32.xlu0 %v586
        %v588 = vpop.xlane.xlu0 %587
        %v589 = vadd.f32 %v544, %v545
        %590 = vadd.xlane.f32.xlu0 %v589
        %v591 = vpop.xlane.xlu0 %590
        %v592 = vadd.f32 %v546, %v547
        %593 = vadd.xlane.f32.xlu0 %v592
        %v594 = vpop.xlane.xlu0 %593
        %v595 = vadd.f32 %v548, %v549
        %596 = vadd.xlane.f32.xlu0 %v595
        %v597 = vpop.xlane.xlu0 %596
        %v598 = vrcp.pop 256.0
        %v599 = vmul.f32 %v552, %v598
        %v600 = vmul.f32 %v555, %v598
        %v601 = vmul.f32 %v558, %v598
        %v602 = vmul.f32 %v561, %v598
        %v603 = vmul.f32 %v564, %v598
        %v604 = vmul.f32 %v567, %v598
        %v605 = vmul.f32 %v570, %v598
        %v606 = vmul.f32 %v573, %v598
        %v607 = vmul.f32 %v576, %v598
        %v608 = vmul.f32 %v579, %v598
        %v609 = vmul.f32 %v582, %v598
        %v610 = vmul.f32 %v585, %v598
        %v611 = vmul.f32 %v588, %v598
        %v612 = vmul.f32 %v591, %v598
        %v613 = vmul.f32 %v594, %v598
        %v614 = vmul.f32 %v597, %v598
        %v615 = vadd.f32 %v599, 1e-05
        %v616 = vadd.f32 %v600, 1e-05
        %v617 = vadd.f32 %v601, 1e-05
        %v618 = vadd.f32 %v602, 1e-05
        %v619 = vadd.f32 %v603, 1e-05
        %v620 = vadd.f32 %v604, 1e-05
        %v621 = vadd.f32 %v605, 1e-05
        %v622 = vadd.f32 %v606, 1e-05
        %v623 = vadd.f32 %v607, 1e-05
        %v624 = vadd.f32 %v608, 1e-05
        %v625 = vadd.f32 %v609, 1e-05
        %v626 = vadd.f32 %v610, 1e-05
        %v627 = vadd.f32 %v611, 1e-05
        %v628 = vadd.f32 %v612, 1e-05
        %v629 = vadd.f32 %v613, 1e-05
        %v630 = vadd.f32 %v614, 1e-05
        %v631 = vrsqrt.pop %v615
        %v632 = vrsqrt.pop %v616
        %v633 = vrsqrt.pop %v617
        %v634 = vrsqrt.pop %v618
        %v635 = vrsqrt.pop %v619
        %v636 = vrsqrt.pop %v620
        %v637 = vrsqrt.pop %v621
        %v638 = vrsqrt.pop %v622
        %v639 = vrsqrt.pop %v623
        %v640 = vrsqrt.pop %v624
        %v641 = vrsqrt.pop %v625
        %v642 = vrsqrt.pop %v626
        %v643 = vrsqrt.pop %v627
        %v644 = vrsqrt.pop %v628
        %v645 = vrsqrt.pop %v629
        %v646 = vrsqrt.pop %v630
        %v647 = vmul.f32 %v452, %v631
        %v648 = vmul.f32 %v453, %v631
        %v649 = vmul.f32 %v454, %v632
        %v650 = vmul.f32 %v455, %v632
        %v651 = vmul.f32 %v456, %v633
        %v652 = vmul.f32 %v457, %v633
        %v653 = vmul.f32 %v458, %v634
        %v654 = vmul.f32 %v459, %v634
        %v655 = vmul.f32 %v460, %v635
        %v656 = vmul.f32 %v461, %v635
        %v657 = vmul.f32 %v462, %v636
        %v658 = vmul.f32 %v463, %v636
        %v659 = vmul.f32 %v464, %v637
        %v660 = vmul.f32 %v465, %v637
        %v661 = vmul.f32 %v466, %v638
        %v662 = vmul.f32 %v467, %v638
        %v663 = vmul.f32 %v468, %v639
        %v664 = vmul.f32 %v469, %v639
        %v665 = vmul.f32 %v470, %v640
        %v666 = vmul.f32 %v471, %v640
        %v667 = vmul.f32 %v472, %v641
        %v668 = vmul.f32 %v473, %v641
        %v669 = vmul.f32 %v474, %v642
        %v670 = vmul.f32 %v475, %v642
        %v671 = vmul.f32 %v476, %v643
        %v672 = vmul.f32 %v477, %v643
        %v673 = vmul.f32 %v478, %v644
        %v674 = vmul.f32 %v479, %v644
        %v675 = vmul.f32 %v480, %v645
        %v676 = vmul.f32 %v481, %v645
        %v677 = vmul.f32 %v482, %v646
        %v678 = vmul.f32 %v483, %v646
        %v680 = vlaneseq
        %v681 = vshrl.u32 %v680, 7
        %v682 = vsub.s32 0, %v681
        %v683 = vrot.slane %v484, %v682
        %v684 = vlaneseq
        %v685 = vshrl.u32 %v684, 7
        %v686 = vsub.s32 1, %v685
        %v687 = vrot.slane %v484, %v686
        %v690 = vmul.f32 %v647, %v683
        %v691 = vmul.f32 %v648, %v687
        %v692 = vmul.f32 %v649, %v683
        %v693 = vmul.f32 %v650, %v687
        %v694 = vmul.f32 %v651, %v683
        %v695 = vmul.f32 %v652, %v687
        %v696 = vmul.f32 %v653, %v683
        %v697 = vmul.f32 %v654, %v687
        %v698 = vmul.f32 %v655, %v683
        %v699 = vmul.f32 %v656, %v687
        %v700 = vmul.f32 %v657, %v683
        %v701 = vmul.f32 %v658, %v687
        %v702 = vmul.f32 %v659, %v683
        %v703 = vmul.f32 %v660, %v687
        %v704 = vmul.f32 %v661, %v683
        %v705 = vmul.f32 %v662, %v687
        %v706 = vmul.f32 %v663, %v683
        %v707 = vmul.f32 %v664, %v687
        %v708 = vmul.f32 %v665, %v683
        %v709 = vmul.f32 %v666, %v687
        %v710 = vmul.f32 %v667, %v683
        %v711 = vmul.f32 %v668, %v687
        %v712 = vmul.f32 %v669, %v683
        %v713 = vmul.f32 %v670, %v687
        %v714 = vmul.f32 %v671, %v683
        %v715 = vmul.f32 %v672, %v687
        %v716 = vmul.f32 %v673, %v683
        %v717 = vmul.f32 %v674, %v687
        %v718 = vmul.f32 %v675, %v683
        %v719 = vmul.f32 %v676, %v687
        %v720 = vmul.f32 %v677, %v683
        %v721 = vmul.f32 %v678, %v687
        %v722 = vpack.c.bf16 %v692, %v690
        %v723 = vpack.c.bf16 %v693, %v691
        %v724 = vpack.c.bf16 %v696, %v694
        %v725 = vpack.c.bf16 %v697, %v695
        %v726 = vpack.c.bf16 %v700, %v698
        %v727 = vpack.c.bf16 %v701, %v699
        %v728 = vpack.c.bf16 %v704, %v702
        %v729 = vpack.c.bf16 %v705, %v703
        %v730 = vpack.c.bf16 %v708, %v706
        %v731 = vpack.c.bf16 %v709, %v707
        %v732 = vpack.c.bf16 %v712, %v710
        %v733 = vpack.c.bf16 %v713, %v711
        %v734 = vpack.c.bf16 %v716, %v714
        %v735 = vpack.c.bf16 %v717, %v715
        %v736 = vpack.c.bf16 %v720, %v718
        %v737 = vpack.c.bf16 %v721, %v719
        %v738 = vld [vmem:[#allocation8] sm:$0xff]
        %v739 = vld [vmem:[#allocation8 + $0x8] sm:$0xff]
        %v740 = vld [vmem:[#allocation8 + $0x10] sm:$0xff]
        %v741 = vld [vmem:[#allocation8 + $0x18] sm:$0xff]
        %v742 = vld [vmem:[#allocation8 + $0x20] sm:$0xff]
        %v743 = vld [vmem:[#allocation8 + $0x28] sm:$0xff]
        %v744 = vld [vmem:[#allocation8 + $0x30] sm:$0xff]
        %v745 = vld [vmem:[#allocation8 + $0x38] sm:$0xff]
        %v746 = vld [vmem:[#allocation8 + $0x40] sm:$0xff]
        %v747 = vld [vmem:[#allocation8 + $0x48] sm:$0xff]
        %v748 = vld [vmem:[#allocation8 + $0x50] sm:$0xff]
        %v749 = vld [vmem:[#allocation8 + $0x58] sm:$0xff]
        %v750 = vld [vmem:[#allocation8 + $0x60] sm:$0xff]
        %v751 = vld [vmem:[#allocation8 + $0x68] sm:$0xff]
        %v752 = vld [vmem:[#allocation8 + $0x70] sm:$0xff]
        %v753 = vld [vmem:[#allocation8 + $0x78] sm:$0xff]
        %v754 = vld [vmem:[#allocation8 + $0x80] sm:$0xff]
        %v755 = vld [vmem:[#allocation8 + $0x88] sm:$0xff]
        %v756 = vld [vmem:[#allocation8 + $0x90] sm:$0xff]
        %v757 = vld [vmem:[#allocation8 + $0x98] sm:$0xff]
        %v758 = vld [vmem:[#allocation8 + $0xa0] sm:$0xff]
        %v759 = vld [vmem:[#allocation8 + $0xa8] sm:$0xff]
        %v760 = vld [vmem:[#allocation8 + $0xb0] sm:$0xff]
        %v761 = vld [vmem:[#allocation8 + $0xb8] sm:$0xff]
        %v762 = vld [vmem:[#allocation8 + $0xc0] sm:$0xff]
        %v763 = vld [vmem:[#allocation8 + $0xc8] sm:$0xff]
        %v764 = vld [vmem:[#allocation8 + $0xd0] sm:$0xff]
        %v765 = vld [vmem:[#allocation8 + $0xd8] sm:$0xff]
        %v766 = vld [vmem:[#allocation8 + $0xe0] sm:$0xff]
        %v767 = vld [vmem:[#allocation8 + $0xe8] sm:$0xff]
        %v768 = vld [vmem:[#allocation8 + $0xf0] sm:$0xff]
        %v769 = vld [vmem:[#allocation8 + $0xf8] sm:$0xff]
        %v770 = vld [vmem:[#allocation8 + $0x100] sm:$0xff]
        %v771 = vld [vmem:[#allocation8 + $0x108] sm:$0xff]
        %v772 = vld [vmem:[#allocation8 + $0x110] sm:$0xff]
        %v773 = vld [vmem:[#allocation8 + $0x118] sm:$0xff]
        %v774 = vld [vmem:[#allocation8 + $0x120] sm:$0xff]
        %v775 = vld [vmem:[#allocation8 + $0x128] sm:$0xff]
        %v776 = vld [vmem:[#allocation8 + $0x130] sm:$0xff]
        %v777 = vld [vmem:[#allocation8 + $0x138] sm:$0xff]
        %v778 = vld [vmem:[#allocation8 + $0x140] sm:$0xff]
        %v779 = vld [vmem:[#allocation8 + $0x148] sm:$0xff]
        %v780 = vld [vmem:[#allocation8 + $0x150] sm:$0xff]
        %v781 = vld [vmem:[#allocation8 + $0x158] sm:$0xff]
        %v782 = vld [vmem:[#allocation8 + $0x160] sm:$0xff]
        %v783 = vld [vmem:[#allocation8 + $0x168] sm:$0xff]
        %v784 = vld [vmem:[#allocation8 + $0x170] sm:$0xff]
        %v785 = vld [vmem:[#allocation8 + $0x178] sm:$0xff]
        %v786 = vld [vmem:[#allocation8 + $0x180] sm:$0xff]
        %v787 = vld [vmem:[#allocation8 + $0x188] sm:$0xff]
        %v788 = vld [vmem:[#allocation8 + $0x190] sm:$0xff]
        %v789 = vld [vmem:[#allocation8 + $0x198] sm:$0xff]
        %v790 = vld [vmem:[#allocation8 + $0x1a0] sm:$0xff]
        %v791 = vld [vmem:[#allocation8 + $0x1a8] sm:$0xff]
        %v792 = vld [vmem:[#allocation8 + $0x1b0] sm:$0xff]
        %v793 = vld [vmem:[#allocation8 + $0x1b8] sm:$0xff]
        %v794 = vld [vmem:[#allocation8 + $0x1c0] sm:$0xff]
        %v795 = vld [vmem:[#allocation8 + $0x1c8] sm:$0xff]
        %v796 = vld [vmem:[#allocation8 + $0x1d0] sm:$0xff]
        %v797 = vld [vmem:[#allocation8 + $0x1d8] sm:$0xff]
        %v798 = vld [vmem:[#allocation8 + $0x1e0] sm:$0xff]
        %v799 = vld [vmem:[#allocation8 + $0x1e8] sm:$0xff]
        %v800 = vld [vmem:[#allocation8 + $0x1f0] sm:$0xff]
        %v801 = vld [vmem:[#allocation8 + $0x1f8] sm:$0xff]
        %v802 = vld [vmem:[#allocation8 + $0x200] sm:$0xff]
        %v803 = vld [vmem:[#allocation8 + $0x208] sm:$0xff]
        %v804 = vld [vmem:[#allocation8 + $0x210] sm:$0xff]
        %v805 = vld [vmem:[#allocation8 + $0x218] sm:$0xff]
        %v806 = vld [vmem:[#allocation8 + $0x220] sm:$0xff]
        %v807 = vld [vmem:[#allocation8 + $0x228] sm:$0xff]
        %v808 = vld [vmem:[#allocation8 + $0x230] sm:$0xff]
        %v809 = vld [vmem:[#allocation8 + $0x238] sm:$0xff]
        %v810 = vld [vmem:[#allocation8 + $0x240] sm:$0xff]
        %v811 = vld [vmem:[#allocation8 + $0x248] sm:$0xff]
        %v812 = vld [vmem:[#allocation8 + $0x250] sm:$0xff]
        %v813 = vld [vmem:[#allocation8 + $0x258] sm:$0xff]
        %v814 = vld [vmem:[#allocation8 + $0x260] sm:$0xff]
        %v815 = vld [vmem:[#allocation8 + $0x268] sm:$0xff]
        %v816 = vld [vmem:[#allocation8 + $0x270] sm:$0xff]
        %v817 = vld [vmem:[#allocation8 + $0x278] sm:$0xff]
        %v818 = vld [vmem:[#allocation8 + $0x280] sm:$0xff]
        %v819 = vld [vmem:[#allocation8 + $0x288] sm:$0xff]
        %v820 = vld [vmem:[#allocation8 + $0x290] sm:$0xff]
        %v821 = vld [vmem:[#allocation8 + $0x298] sm:$0xff]
        %v822 = vld [vmem:[#allocation8 + $0x2a0] sm:$0xff]
        %v823 = vld [vmem:[#allocation8 + $0x2a8] sm:$0xff]
        %v824 = vld [vmem:[#allocation8 + $0x2b0] sm:$0xff]
        %v825 = vld [vmem:[#allocation8 + $0x2b8] sm:$0xff]
        %v826 = vld [vmem:[#allocation8 + $0x2c0] sm:$0xff]
        %v827 = vld [vmem:[#allocation8 + $0x2c8] sm:$0xff]
        %v828 = vld [vmem:[#allocation8 + $0x2d0] sm:$0xff]
        %v829 = vld [vmem:[#allocation8 + $0x2d8] sm:$0xff]
        %v830 = vld [vmem:[#allocation8 + $0x2e0] sm:$0xff]
        %v831 = vld [vmem:[#allocation8 + $0x2e8] sm:$0xff]
        %v832 = vld [vmem:[#allocation8 + $0x2f0] sm:$0xff]
        %v833 = vld [vmem:[#allocation8 + $0x2f8] sm:$0xff]
        %v930 = vunpack.c.l.b16 %v738
        %v931 = vunpack.c.h.b16 %v738
        %v932 = vunpack.c.l.b16 %v739
        %v933 = vunpack.c.h.b16 %v739
        %v934 = vunpack.c.l.b16 %v740
        %v935 = vunpack.c.h.b16 %v740
        %v936 = vunpack.c.l.b16 %v741
        %v937 = vunpack.c.h.b16 %v741
        %v938 = vunpack.c.l.b16 %v742
        %v939 = vunpack.c.h.b16 %v742
        %v940 = vunpack.c.l.b16 %v743
        %v941 = vunpack.c.h.b16 %v743
        %v942 = vunpack.c.l.b16 %v744
        %v943 = vunpack.c.h.b16 %v744
        %v944 = vunpack.c.l.b16 %v745
        %v945 = vunpack.c.h.b16 %v745
        %v946 = vunpack.c.l.b16 %v746
        %v947 = vunpack.c.h.b16 %v746
        %v948 = vunpack.c.l.b16 %v747
        %v949 = vunpack.c.h.b16 %v747
        %v950 = vunpack.c.l.b16 %v748
        %v951 = vunpack.c.h.b16 %v748
        %v952 = vunpack.c.l.b16 %v749
        %v953 = vunpack.c.h.b16 %v749
        %v954 = vunpack.c.l.b16 %v750
        %v955 = vunpack.c.h.b16 %v750
        %v956 = vunpack.c.l.b16 %v751
        %v957 = vunpack.c.h.b16 %v751
        %v958 = vunpack.c.l.b16 %v752
        %v959 = vunpack.c.h.b16 %v752
        %v960 = vunpack.c.l.b16 %v753
        %v961 = vunpack.c.h.b16 %v753
        %v962 = vunpack.c.l.b16 %v754
        %v963 = vunpack.c.h.b16 %v754
        %v964 = vunpack.c.l.b16 %v755
        %v965 = vunpack.c.h.b16 %v755
        %v966 = vunpack.c.l.b16 %v756
        %v967 = vunpack.c.h.b16 %v756
        %v968 = vunpack.c.l.b16 %v757
        %v969 = vunpack.c.h.b16 %v757
        %v970 = vunpack.c.l.b16 %v758
        %v971 = vunpack.c.h.b16 %v758
        %v972 = vunpack.c.l.b16 %v759
        %v973 = vunpack.c.h.b16 %v759
        %v974 = vunpack.c.l.b16 %v760
        %v975 = vunpack.c.h.b16 %v760
        %v976 = vunpack.c.l.b16 %v761
        %v977 = vunpack.c.h.b16 %v761
        %v978 = vunpack.c.l.b16 %v762
        %v979 = vunpack.c.h.b16 %v762
        %v980 = vunpack.c.l.b16 %v763
        %v981 = vunpack.c.h.b16 %v763
        %v982 = vunpack.c.l.b16 %v764
        %v983 = vunpack.c.h.b16 %v764
        %v984 = vunpack.c.l.b16 %v765
        %v985 = vunpack.c.h.b16 %v765
        %v986 = vunpack.c.l.b16 %v766
        %v987 = vunpack.c.h.b16 %v766
        %v988 = vunpack.c.l.b16 %v767
        %v989 = vunpack.c.h.b16 %v767
        %v990 = vunpack.c.l.b16 %v768
        %v991 = vunpack.c.h.b16 %v768
        %v992 = vunpack.c.l.b16 %v769
        %v993 = vunpack.c.h.b16 %v769
        %v994 = vunpack.c.l.b16 %v770
        %v995 = vunpack.c.h.b16 %v770
        %v996 = vunpack.c.l.b16 %v771
        %v997 = vunpack.c.h.b16 %v771
        %v998 = vunpack.c.l.b16 %v772
        %v999 = vunpack.c.h.b16 %v772
        %v1000 = vunpack.c.l.b16 %v773
        %v1001 = vunpack.c.h.b16 %v773
        %v1002 = vunpack.c.l.b16 %v774
        %v1003 = vunpack.c.h.b16 %v774
        %v1004 = vunpack.c.l.b16 %v775
        %v1005 = vunpack.c.h.b16 %v775
        %v1006 = vunpack.c.l.b16 %v776
        %v1007 = vunpack.c.h.b16 %v776
        %v1008 = vunpack.c.l.b16 %v777
        %v1009 = vunpack.c.h.b16 %v777
        %v1010 = vunpack.c.l.b16 %v778
        %v1011 = vunpack.c.h.b16 %v778
        %v1012 = vunpack.c.l.b16 %v779
        %v1013 = vunpack.c.h.b16 %v779
        %v1014 = vunpack.c.l.b16 %v780
        %v1015 = vunpack.c.h.b16 %v780
        %v1016 = vunpack.c.l.b16 %v781
        %v1017 = vunpack.c.h.b16 %v781
        %v1018 = vunpack.c.l.b16 %v782
        %v1019 = vunpack.c.h.b16 %v782
        %v1020 = vunpack.c.l.b16 %v783
        %v1021 = vunpack.c.h.b16 %v783
        %v1022 = vunpack.c.l.b16 %v784
        %v1023 = vunpack.c.h.b16 %v784
        %v1024 = vunpack.c.l.b16 %v785
        %v1025 = vunpack.c.h.b16 %v785
        %v1026 = vunpack.c.l.b16 %v786
        %v1027 = vunpack.c.h.b16 %v786
        %v1028 = vunpack.c.l.b16 %v787
        %v1029 = vunpack.c.h.b16 %v787
        %v1030 = vunpack.c.l.b16 %v788
        %v1031 = vunpack.c.h.b16 %v788
        %v1032 = vunpack.c.l.b16 %v789
        %v1033 = vunpack.c.h.b16 %v789
        %v1034 = vunpack.c.l.b16 %v790
        %v1035 = vunpack.c.h.b16 %v790
        %v1036 = vunpack.c.l.b16 %v791
        %v1037 = vunpack.c.h.b16 %v791
        %v1038 = vunpack.c.l.b16 %v792
        %v1039 = vunpack.c.h.b16 %v792
        %v1040 = vunpack.c.l.b16 %v793
        %v1041 = vunpack.c.h.b16 %v793
        %v1042 = vunpack.c.l.b16 %v794
        %v1043 = vunpack.c.h.b16 %v794
        %v1044 = vunpack.c.l.b16 %v795
        %v1045 = vunpack.c.h.b16 %v795
        %v1046 = vunpack.c.l.b16 %v796
        %v1047 = vunpack.c.h.b16 %v796
        %v1048 = vunpack.c.l.b16 %v797
        %v1049 = vunpack.c.h.b16 %v797
        %v1050 = vunpack.c.l.b16 %v798
        %v1051 = vunpack.c.h.b16 %v798
        %v1052 = vunpack.c.l.b16 %v799
        %v1053 = vunpack.c.h.b16 %v799
        %v1054 = vunpack.c.l.b16 %v800
        %v1055 = vunpack.c.h.b16 %v800
        %v1056 = vunpack.c.l.b16 %v801
        %v1057 = vunpack.c.h.b16 %v801
        %v1058 = vunpack.c.l.b16 %v802
        %v1059 = vunpack.c.h.b16 %v802
        %v1060 = vunpack.c.l.b16 %v803
        %v1061 = vunpack.c.h.b16 %v803
        %v1062 = vunpack.c.l.b16 %v804
        %v1063 = vunpack.c.h.b16 %v804
        %v1064 = vunpack.c.l.b16 %v805
        %v1065 = vunpack.c.h.b16 %v805
        %v1066 = vunpack.c.l.b16 %v806
        %v1067 = vunpack.c.h.b16 %v806
        %v1068 = vunpack.c.l.b16 %v807
        %v1069 = vunpack.c.h.b16 %v807
        %v1070 = vunpack.c.l.b16 %v808
        %v1071 = vunpack.c.h.b16 %v808
        %v1072 = vunpack.c.l.b16 %v809
        %v1073 = vunpack.c.h.b16 %v809
        %v1074 = vunpack.c.l.b16 %v810
        %v1075 = vunpack.c.h.b16 %v810
        %v1076 = vunpack.c.l.b16 %v811
        %v1077 = vunpack.c.h.b16 %v811
        %v1078 = vunpack.c.l.b16 %v812
        %v1079 = vunpack.c.h.b16 %v812
        %v1080 = vunpack.c.l.b16 %v813
        %v1081 = vunpack.c.h.b16 %v813
        %v1082 = vunpack.c.l.b16 %v814
        %v1083 = vunpack.c.h.b16 %v814
        %v1084 = vunpack.c.l.b16 %v815
        %v1085 = vunpack.c.h.b16 %v815
        %v1086 = vunpack.c.l.b16 %v816
        %v1087 = vunpack.c.h.b16 %v816
        %v1088 = vunpack.c.l.b16 %v817
        %v1089 = vunpack.c.h.b16 %v817
        %v1090 = vunpack.c.l.b16 %v818
        %v1091 = vunpack.c.h.b16 %v818
        %v1092 = vunpack.c.l.b16 %v819
        %v1093 = vunpack.c.h.b16 %v819
        %v1094 = vunpack.c.l.b16 %v820
        %v1095 = vunpack.c.h.b16 %v820
        %v1096 = vunpack.c.l.b16 %v821
        %v1097 = vunpack.c.h.b16 %v821
        %v1098 = vunpack.c.l.b16 %v822
        %v1099 = vunpack.c.h.b16 %v822
        %v1100 = vunpack.c.l.b16 %v823
        %v1101 = vunpack.c.h.b16 %v823
        %v1102 = vunpack.c.l.b16 %v824
        %v1103 = vunpack.c.h.b16 %v824
        %v1104 = vunpack.c.l.b16 %v825
        %v1105 = vunpack.c.h.b16 %v825
        %v1106 = vunpack.c.l.b16 %v826
        %v1107 = vunpack.c.h.b16 %v826
        %v1108 = vunpack.c.l.b16 %v827
        %v1109 = vunpack.c.h.b16 %v827
        %v1110 = vunpack.c.l.b16 %v828
        %v1111 = vunpack.c.h.b16 %v828
        %v1112 = vunpack.c.l.b16 %v829
        %v1113 = vunpack.c.h.b16 %v829
        %v1114 = vunpack.c.l.b16 %v830
        %v1115 = vunpack.c.h.b16 %v830
        %v1116 = vunpack.c.l.b16 %v831
        %v1117 = vunpack.c.h.b16 %v831
        %v1118 = vunpack.c.l.b16 %v832
        %v1119 = vunpack.c.h.b16 %v832
        %v1120 = vunpack.c.l.b16 %v833
        %v1121 = vunpack.c.h.b16 %v833
        %v1122 = vpack.c.b16 %v936, %v930
        %v1123 = vpack.c.b16 %v937, %v931
        %v1124 = vpack.c.b16 %v938, %v932
        %v1125 = vpack.c.b16 %v939, %v933
        %v1126 = vpack.c.b16 %v940, %v934
        %v1127 = vpack.c.b16 %v941, %v935
        %v1128 = vpack.c.b16 %v948, %v942
        %v1129 = vpack.c.b16 %v949, %v943
        %v1130 = vpack.c.b16 %v950, %v944
        %v1131 = vpack.c.b16 %v951, %v945
        %v1132 = vpack.c.b16 %v952, %v946
        %v1133 = vpack.c.b16 %v953, %v947
        %v1134 = vpack.c.b16 %v960, %v954
        %v1135 = vpack.c.b16 %v961, %v955
        %v1136 = vpack.c.b16 %v962, %v956
        %v1137 = vpack.c.b16 %v963, %v957
        %v1138 = vpack.c.b16 %v964, %v958
        %v1139 = vpack.c.b16 %v965, %v959
        %v1140 = vpack.c.b16 %v972, %v966
        %v1141 = vpack.c.b16 %v973, %v967
        %v1142 = vpack.c.b16 %v974, %v968
        %v1143 = vpack.c.b16 %v975, %v969
        %v1144 = vpack.c.b16 %v976, %v970
        %v1145 = vpack.c.b16 %v977, %v971
        %v1146 = vpack.c.b16 %v984, %v978
        %v1147 = vpack.c.b16 %v985, %v979
        %v1148 = vpack.c.b16 %v986, %v980
        %v1149 = vpack.c.b16 %v987, %v981
        %v1150 = vpack.c.b16 %v988, %v982
        %v1151 = vpack.c.b16 %v989, %v983
        %v1152 = vpack.c.b16 %v996, %v990
        %v1153 = vpack.c.b16 %v997, %v991
        %v1154 = vpack.c.b16 %v998, %v992
        %v1155 = vpack.c.b16 %v999, %v993
        %v1156 = vpack.c.b16 %v1000, %v994
        %v1157 = vpack.c.b16 %v1001, %v995
        %v1158 = vpack.c.b16 %v1008, %v1002
        %v1159 = vpack.c.b16 %v1009, %v1003
        %v1160 = vpack.c.b16 %v1010, %v1004
        %v1161 = vpack.c.b16 %v1011, %v1005
        %v1162 = vpack.c.b16 %v1012, %v1006
        %v1163 = vpack.c.b16 %v1013, %v1007
        %v1164 = vpack.c.b16 %v1020, %v1014
        %v1165 = vpack.c.b16 %v1021, %v1015
        %v1166 = vpack.c.b16 %v1022, %v1016
        %v1167 = vpack.c.b16 %v1023, %v1017
        %v1168 = vpack.c.b16 %v1024, %v1018
        %v1169 = vpack.c.b16 %v1025, %v1019
        %v1170 = vpack.c.b16 %v1032, %v1026
        %v1171 = vpack.c.b16 %v1033, %v1027
        %v1172 = vpack.c.b16 %v1034, %v1028
        %v1173 = vpack.c.b16 %v1035, %v1029
        %v1174 = vpack.c.b16 %v1036, %v1030
        %v1175 = vpack.c.b16 %v1037, %v1031
        %v1176 = vpack.c.b16 %v1044, %v1038
        %v1177 = vpack.c.b16 %v1045, %v1039
        %v1178 = vpack.c.b16 %v1046, %v1040
        %v1179 = vpack.c.b16 %v1047, %v1041
        %v1180 = vpack.c.b16 %v1048, %v1042
        %v1181 = vpack.c.b16 %v1049, %v1043
        %v1182 = vpack.c.b16 %v1056, %v1050
        %v1183 = vpack.c.b16 %v1057, %v1051
        %v1184 = vpack.c.b16 %v1058, %v1052
        %v1185 = vpack.c.b16 %v1059, %v1053
        %v1186 = vpack.c.b16 %v1060, %v1054
        %v1187 = vpack.c.b16 %v1061, %v1055
        %v1188 = vpack.c.b16 %v1068, %v1062
        %v1189 = vpack.c.b16 %v1069, %v1063
        %v1190 = vpack.c.b16 %v1070, %v1064
        %v1191 = vpack.c.b16 %v1071, %v1065
        %v1192 = vpack.c.b16 %v1072, %v1066
        %v1193 = vpack.c.b16 %v1073, %v1067
        %v1194 = vpack.c.b16 %v1080, %v1074
        %v1195 = vpack.c.b16 %v1081, %v1075
        %v1196 = vpack.c.b16 %v1082, %v1076
        %v1197 = vpack.c.b16 %v1083, %v1077
        %v1198 = vpack.c.b16 %v1084, %v1078
        %v1199 = vpack.c.b16 %v1085, %v1079
        %v1200 = vpack.c.b16 %v1092, %v1086
        %v1201 = vpack.c.b16 %v1093, %v1087
        %v1202 = vpack.c.b16 %v1094, %v1088
        %v1203 = vpack.c.b16 %v1095, %v1089
        %v1204 = vpack.c.b16 %v1096, %v1090
        %v1205 = vpack.c.b16 %v1097, %v1091
        %v1206 = vpack.c.b16 %v1104, %v1098
        %v1207 = vpack.c.b16 %v1105, %v1099
        %v1208 = vpack.c.b16 %v1106, %v1100
        %v1209 = vpack.c.b16 %v1107, %v1101
        %v1210 = vpack.c.b16 %v1108, %v1102
        %v1211 = vpack.c.b16 %v1109, %v1103
        %v1212 = vpack.c.b16 %v1116, %v1110
        %v1213 = vpack.c.b16 %v1117, %v1111
        %v1214 = vpack.c.b16 %v1118, %v1112
        %v1215 = vpack.c.b16 %v1119, %v1113
        %v1216 = vpack.c.b16 %v1120, %v1114
        %v1217 = vpack.c.b16 %v1121, %v1115
        %1314 = vmatprep.subr.bf16.mxu0 %v1165
        %1315 = vmatpush1.bf16.msra.mxu0 %v1164
        %1316 = vmatprep.subr.bf16.mxu0 %v1159
        %1317 = vmatpush1.bf16.msra.mxu0 %v1158
        %1318 = vmatprep.subr.bf16.mxu0 %v1153
        %1319 = vmatpush1.bf16.msra.mxu0 %v1152
        %1320 = vmatprep.subr.bf16.mxu0 %v1147
        %1321 = vmatpush1.bf16.msra.mxu0 %v1146
        %1322 = vmatprep.subr.bf16.mxu0 %v1141
        %1323 = vmatpush1.bf16.msra.mxu0 %v1140
        %1324 = vmatprep.subr.bf16.mxu0 %v1135
        %1325 = vmatpush1.bf16.msra.mxu0 %v1134
        %1326 = vmatprep.subr.bf16.mxu0 %v1129
        %1327 = vmatpush1.bf16.msra.mxu0 %v1128
        %1328 = vmatprep.subr.bf16.mxu0 %v1123
        %1329 = vmatpush1.bf16.msra.mxu0 %v1122
        %1330 = vmatprep.subr.bf16.mxu0 %v1213
        %1331 = vmatpush2.bf16.msra.mxu0 %v1212
        %1332 = vmatprep.subr.bf16.mxu0 %v1207
        %1333 = vmatpush2.bf16.msra.mxu0 %v1206
        %1334 = vmatprep.subr.bf16.mxu0 %v1201
        %1335 = vmatpush2.bf16.msra.mxu0 %v1200
        %1336 = vmatprep.subr.bf16.mxu0 %v1195
        %1337 = vmatpush2.bf16.msra.mxu0 %v1194
        %1338 = vmatprep.subr.bf16.mxu0 %v1189
        %1339 = vmatpush2.bf16.msra.mxu0 %v1188
        %1340 = vmatprep.subr.bf16.mxu0 %v1183
        %1341 = vmatpush2.bf16.msra.mxu0 %v1182
        %1342 = vmatprep.subr.bf16.mxu0 %v1177
        %1343 = vmatpush2.bf16.msra.mxu0 %v1176
        %1344 = vmatprep.subr.bf16.mxu0 %v1171
        %1345 = vmatpush2.bf16.msra.mxu0 %v1170
        %1346 = vmatprep.mubr.bf16.mxu0 %v723
        %1347 = vmatmul.mubr.bf16.gmra.mxu0 %v722
        %v1348 = vpop.f32.mrf.mxu0
        %v1349 = vadd.f32 0.0, %v1348
        %v1350 = vpop.f32.mrf.mxu0
        %v1351 = vadd.f32 0.0, %v1350
        %v1352 = vpop.f32.mrf.mxu0
        %v1353 = vadd.f32 0.0, %v1352
        %v1354 = vpop.f32.mrf.mxu0
        %v1355 = vadd.f32 0.0, %v1354
        %1356 = vmatprep.mubr.bf16.mxu0 %v725
        %1357 = vmatmul.mubr.bf16.gmra.mxu0 %v724
        %v1358 = vpop.f32.mrf.mxu0
        %v1359 = vadd.f32 0.0, %v1358
        %v1360 = vpop.f32.mrf.mxu0
        %v1361 = vadd.f32 0.0, %v1360
        %v1362 = vpop.f32.mrf.mxu0
        %v1363 = vadd.f32 0.0, %v1362
        %v1364 = vpop.f32.mrf.mxu0
        %v1365 = vadd.f32 0.0, %v1364
        %1366 = vmatprep.mubr.bf16.mxu0 %v727
        %1367 = vmatmul.mubr.bf16.gmra.mxu0 %v726
        %v1368 = vpop.f32.mrf.mxu0
        %v1369 = vadd.f32 0.0, %v1368
        %v1370 = vpop.f32.mrf.mxu0
        %v1371 = vadd.f32 0.0, %v1370
        %v1372 = vpop.f32.mrf.mxu0
        %v1373 = vadd.f32 0.0, %v1372
        %v1374 = vpop.f32.mrf.mxu0
        %v1375 = vadd.f32 0.0, %v1374
        %1376 = vmatprep.mubr.bf16.mxu0 %v729
        %1377 = vmatmul.mubr.bf16.gmra.mxu0 %v728
        %v1378 = vpop.f32.mrf.mxu0
        %v1379 = vadd.f32 0.0, %v1378
        %v1380 = vpop.f32.mrf.mxu0
        %v1381 = vadd.f32 0.0, %v1380
        %v1382 = vpop.f32.mrf.mxu0
        %v1383 = vadd.f32 0.0, %v1382
        %v1384 = vpop.f32.mrf.mxu0
        %v1385 = vadd.f32 0.0, %v1384
        %1386 = vmatprep.mubr.bf16.mxu0 %v731
        %1387 = vmatmul.mubr.bf16.gmra.mxu0 %v730
        %v1388 = vpop.f32.mrf.mxu0
        %v1389 = vadd.f32 0.0, %v1388
        %v1390 = vpop.f32.mrf.mxu0
        %v1391 = vadd.f32 0.0, %v1390
        %v1392 = vpop.f32.mrf.mxu0
        %v1393 = vadd.f32 0.0, %v1392
        %v1394 = vpop.f32.mrf.mxu0
        %v1395 = vadd.f32 0.0, %v1394
        %1396 = vmatprep.mubr.bf16.mxu0 %v733
        %1397 = vmatmul.mubr.bf16.gmra.mxu0 %v732
        %v1398 = vpop.f32.mrf.mxu0
        %v1399 = vadd.f32 0.0, %v1398
        %v1400 = vpop.f32.mrf.mxu0
        %v1401 = vadd.f32 0.0, %v1400
        %v1402 = vpop.f32.mrf.mxu0
        %v1403 = vadd.f32 0.0, %v1402
        %v1404 = vpop.f32.mrf.mxu0
        %v1405 = vadd.f32 0.0, %v1404
        %1406 = vmatprep.mubr.bf16.mxu0 %v735
        %1407 = vmatmul.mubr.bf16.gmra.mxu0 %v734
        %v1408 = vpop.f32.mrf.mxu0
        %v1409 = vadd.f32 0.0, %v1408
        %v1410 = vpop.f32.mrf.mxu0
        %v1411 = vadd.f32 0.0, %v1410
        %v1412 = vpop.f32.mrf.mxu0
        %v1413 = vadd.f32 0.0, %v1412
        %v1414 = vpop.f32.mrf.mxu0
        %v1415 = vadd.f32 0.0, %v1414
        %1416 = vmatprep.mubr.bf16.mxu0 %v737
        %1417 = vmatmul.mubr.bf16.gmra.mxu0 %v736
        %v1418 = vpop.f32.mrf.mxu0
        %v1419 = vadd.f32 0.0, %v1418
        %v1420 = vpop.f32.mrf.mxu0
        %v1421 = vadd.f32 0.0, %v1420
        %v1422 = vpop.f32.mrf.mxu0
        %v1423 = vadd.f32 0.0, %v1422
        %v1424 = vpop.f32.mrf.mxu0
        %v1425 = vadd.f32 0.0, %v1424
        %1426 = vdwg.mxu0
        %1427 = vmatprep.subr.bf16.mxu0 %v1167
        %1428 = vmatpush1.bf16.msra.mxu0 %v1166
        %1429 = vmatprep.subr.bf16.mxu0 %v1161
        %1430 = vmatpush1.bf16.msra.mxu0 %v1160
        %1431 = vmatprep.subr.bf16.mxu0 %v1155
        %1432 = vmatpush1.bf16.msra.mxu0 %v1154
        %1433 = vmatprep.subr.bf16.mxu0 %v1149
        %1434 = vmatpush1.bf16.msra.mxu0 %v1148
        %1435 = vmatprep.subr.bf16.mxu0 %v1143
        %1436 = vmatpush1.bf16.msra.mxu0 %v1142
        %1437 = vmatprep.subr.bf16.mxu0 %v1137
        %1438 = vmatpush1.bf16.msra.mxu0 %v1136
        %1439 = vmatprep.subr.bf16.mxu0 %v1131
        %1440 = vmatpush1.bf16.msra.mxu0 %v1130
        %1441 = vmatprep.subr.bf16.mxu0 %v1125
        %1442 = vmatpush1.bf16.msra.mxu0 %v1124
        %1443 = vmatprep.subr.bf16.mxu0 %v1215
        %1444 = vmatpush2.bf16.msra.mxu0 %v1214
        %1445 = vmatprep.subr.bf16.mxu0 %v1209
        %1446 = vmatpush2.bf16.msra.mxu0 %v1208
        %1447 = vmatprep.subr.bf16.mxu0 %v1203
        %1448 = vmatpush2.bf16.msra.mxu0 %v1202
        %1449 = vmatprep.subr.bf16.mxu0 %v1197
        %1450 = vmatpush2.bf16.msra.mxu0 %v1196
        %1451 = vmatprep.subr.bf16.mxu0 %v1191
        %1452 = vmatpush2.bf16.msra.mxu0 %v1190
        %1453 = vmatprep.subr.bf16.mxu0 %v1185
        %1454 = vmatpush2.bf16.msra.mxu0 %v1184
        %1455 = vmatprep.subr.bf16.mxu0 %v1179
        %1456 = vmatpush2.bf16.msra.mxu0 %v1178
        %1457 = vmatprep.subr.bf16.mxu0 %v1173
        %1458 = vmatpush2.bf16.msra.mxu0 %v1172
        %1459 = vmatprep.mubr.bf16.mxu0 %v723
        %1460 = vmatmul.mubr.bf16.gmra.mxu0 %v722
        %v1461 = vpop.f32.mrf.mxu0
        %v1462 = vadd.f32 0.0, %v1461
        %v1463 = vpop.f32.mrf.mxu0
        %v1464 = vadd.f32 0.0, %v1463
        %v1465 = vpop.f32.mrf.mxu0
        %v1466 = vadd.f32 0.0, %v1465
        %v1467 = vpop.f32.mrf.mxu0
        %v1468 = vadd.f32 0.0, %v1467
        %1469 = vmatprep.mubr.bf16.mxu0 %v725
        %1470 = vmatmul.mubr.bf16.gmra.mxu0 %v724
        %v1471 = vpop.f32.mrf.mxu0
        %v1472 = vadd.f32 0.0, %v1471
        %v1473 = vpop.f32.mrf.mxu0
        %v1474 = vadd.f32 0.0, %v1473
        %v1475 = vpop.f32.mrf.mxu0
        %v1476 = vadd.f32 0.0, %v1475
        %v1477 = vpop.f32.mrf.mxu0
        %v1478 = vadd.f32 0.0, %v1477
        %1479 = vmatprep.mubr.bf16.mxu0 %v727
        %1480 = vmatmul.mubr.bf16.gmra.mxu0 %v726
        %v1481 = vpop.f32.mrf.mxu0
        %v1482 = vadd.f32 0.0, %v1481
        %v1483 = vpop.f32.mrf.mxu0
        %v1484 = vadd.f32 0.0, %v1483
        %v1485 = vpop.f32.mrf.mxu0
        %v1486 = vadd.f32 0.0, %v1485
        %v1487 = vpop.f32.mrf.mxu0
        %v1488 = vadd.f32 0.0, %v1487
        %1489 = vmatprep.mubr.bf16.mxu0 %v729
        %1490 = vmatmul.mubr.bf16.gmra.mxu0 %v728
        %v1491 = vpop.f32.mrf.mxu0
        %v1492 = vadd.f32 0.0, %v1491
        %v1493 = vpop.f32.mrf.mxu0
        %v1494 = vadd.f32 0.0, %v1493
        %v1495 = vpop.f32.mrf.mxu0
        %v1496 = vadd.f32 0.0, %v1495
        %v1497 = vpop.f32.mrf.mxu0
        %v1498 = vadd.f32 0.0, %v1497
        %1499 = vmatprep.mubr.bf16.mxu0 %v731
        %1500 = vmatmul.mubr.bf16.gmra.mxu0 %v730
        %v1501 = vpop.f32.mrf.mxu0
        %v1502 = vadd.f32 0.0, %v1501
        %v1503 = vpop.f32.mrf.mxu0
        %v1504 = vadd.f32 0.0, %v1503
        %v1505 = vpop.f32.mrf.mxu0
        %v1506 = vadd.f32 0.0, %v1505
        %v1507 = vpop.f32.mrf.mxu0
        %v1508 = vadd.f32 0.0, %v1507
        %1509 = vmatprep.mubr.bf16.mxu0 %v733
        %1510 = vmatmul.mubr.bf16.gmra.mxu0 %v732
        %v1511 = vpop.f32.mrf.mxu0
        %v1512 = vadd.f32 0.0, %v1511
        %v1513 = vpop.f32.mrf.mxu0
        %v1514 = vadd.f32 0.0, %v1513
        %v1515 = vpop.f32.mrf.mxu0
        %v1516 = vadd.f32 0.0, %v1515
        %v1517 = vpop.f32.mrf.mxu0
        %v1518 = vadd.f32 0.0, %v1517
        %1519 = vmatprep.mubr.bf16.mxu0 %v735
        %1520 = vmatmul.mubr.bf16.gmra.mxu0 %v734
        %v1521 = vpop.f32.mrf.mxu0
        %v1522 = vadd.f32 0.0, %v1521
        %v1523 = vpop.f32.mrf.mxu0
        %v1524 = vadd.f32 0.0, %v1523
        %v1525 = vpop.f32.mrf.mxu0
        %v1526 = vadd.f32 0.0, %v1525
        %v1527 = vpop.f32.mrf.mxu0
        %v1528 = vadd.f32 0.0, %v1527
        %1529 = vmatprep.mubr.bf16.mxu0 %v737
        %1530 = vmatmul.mubr.bf16.gmra.mxu0 %v736
        %v1531 = vpop.f32.mrf.mxu0
        %v1532 = vadd.f32 0.0, %v1531
        %v1533 = vpop.f32.mrf.mxu0
        %v1534 = vadd.f32 0.0, %v1533
        %v1535 = vpop.f32.mrf.mxu0
        %v1536 = vadd.f32 0.0, %v1535
        %v1537 = vpop.f32.mrf.mxu0
        %v1538 = vadd.f32 0.0, %v1537
        %1539 = vdwg.mxu0
        %1540 = vmatprep.subr.bf16.mxu0 %v1169
        %1541 = vmatpush1.bf16.msra.mxu0 %v1168
        %1542 = vmatprep.subr.bf16.mxu0 %v1163
        %1543 = vmatpush1.bf16.msra.mxu0 %v1162
        %1544 = vmatprep.subr.bf16.mxu0 %v1157
        %1545 = vmatpush1.bf16.msra.mxu0 %v1156
        %1546 = vmatprep.subr.bf16.mxu0 %v1151
        %1547 = vmatpush1.bf16.msra.mxu0 %v1150
        %1548 = vmatprep.subr.bf16.mxu0 %v1145
        %1549 = vmatpush1.bf16.msra.mxu0 %v1144
        %1550 = vmatprep.subr.bf16.mxu0 %v1139
        %1551 = vmatpush1.bf16.msra.mxu0 %v1138
        %1552 = vmatprep.subr.bf16.mxu0 %v1133
        %1553 = vmatpush1.bf16.msra.mxu0 %v1132
        %1554 = vmatprep.subr.bf16.mxu0 %v1127
        %1555 = vmatpush1.bf16.msra.mxu0 %v1126
        %1556 = vmatprep.subr.bf16.mxu0 %v1217
        %1557 = vmatpush2.bf16.msra.mxu0 %v1216
        %1558 = vmatprep.subr.bf16.mxu0 %v1211
        %1559 = vmatpush2.bf16.msra.mxu0 %v1210
        %1560 = vmatprep.subr.bf16.mxu0 %v1205
        %1561 = vmatpush2.bf16.msra.mxu0 %v1204
        %1562 = vmatprep.subr.bf16.mxu0 %v1199
        %1563 = vmatpush2.bf16.msra.mxu0 %v1198
        %1564 = vmatprep.subr.bf16.mxu0 %v1193
        %1565 = vmatpush2.bf16.msra.mxu0 %v1192
        %1566 = vmatprep.subr.bf16.mxu0 %v1187
        %1567 = vmatpush2.bf16.msra.mxu0 %v1186
        %1568 = vmatprep.subr.bf16.mxu0 %v1181
        %1569 = vmatpush2.bf16.msra.mxu0 %v1180
        %1570 = vmatprep.subr.bf16.mxu0 %v1175
        %1571 = vmatpush2.bf16.msra.mxu0 %v1174
        %1572 = vmatprep.mubr.bf16.mxu0 %v723
        %1573 = vmatmul.mubr.bf16.gmra.mxu0 %v722
        %v1574 = vpop.f32.mrf.mxu0
        %v1575 = vadd.f32 0.0, %v1574
        %v1576 = vpop.f32.mrf.mxu0
        %v1577 = vadd.f32 0.0, %v1576
        %v1578 = vpop.f32.mrf.mxu0
        %v1579 = vadd.f32 0.0, %v1578
        %v1580 = vpop.f32.mrf.mxu0
        %v1581 = vadd.f32 0.0, %v1580
        %1582 = vmatprep.mubr.bf16.mxu0 %v725
        %1583 = vmatmul.mubr.bf16.gmra.mxu0 %v724
        %v1584 = vpop.f32.mrf.mxu0
        %v1585 = vadd.f32 0.0, %v1584
        %v1586 = vpop.f32.mrf.mxu0
        %v1587 = vadd.f32 0.0, %v1586
        %v1588 = vpop.f32.mrf.mxu0
        %v1589 = vadd.f32 0.0, %v1588
        %v1590 = vpop.f32.mrf.mxu0
        %v1591 = vadd.f32 0.0, %v1590
        %1592 = vmatprep.mubr.bf16.mxu0 %v727
        %1593 = vmatmul.mubr.bf16.gmra.mxu0 %v726
        %v1594 = vpop.f32.mrf.mxu0
        %v1595 = vadd.f32 0.0, %v1594
        %v1596 = vpop.f32.mrf.mxu0
        %v1597 = vadd.f32 0.0, %v1596
        %v1598 = vpop.f32.mrf.mxu0
        %v1599 = vadd.f32 0.0, %v1598
        %v1600 = vpop.f32.mrf.mxu0
        %v1601 = vadd.f32 0.0, %v1600
        %1602 = vmatprep.mubr.bf16.mxu0 %v729
        %1603 = vmatmul.mubr.bf16.gmra.mxu0 %v728
        %v1604 = vpop.f32.mrf.mxu0
        %v1605 = vadd.f32 0.0, %v1604
        %v1606 = vpop.f32.mrf.mxu0
        %v1607 = vadd.f32 0.0, %v1606
        %v1608 = vpop.f32.mrf.mxu0
        %v1609 = vadd.f32 0.0, %v1608
        %v1610 = vpop.f32.mrf.mxu0
        %v1611 = vadd.f32 0.0, %v1610
        %1612 = vmatprep.mubr.bf16.mxu0 %v731
        %1613 = vmatmul.mubr.bf16.gmra.mxu0 %v730
        %v1614 = vpop.f32.mrf.mxu0
        %v1615 = vadd.f32 0.0, %v1614
        %v1616 = vpop.f32.mrf.mxu0
        %v1617 = vadd.f32 0.0, %v1616
        %v1618 = vpop.f32.mrf.mxu0
        %v1619 = vadd.f32 0.0, %v1618
        %v1620 = vpop.f32.mrf.mxu0
        %v1621 = vadd.f32 0.0, %v1620
        %1622 = vmatprep.mubr.bf16.mxu0 %v733
        %1623 = vmatmul.mubr.bf16.gmra.mxu0 %v732
        %v1624 = vpop.f32.mrf.mxu0
        %v1625 = vadd.f32 0.0, %v1624
        %v1626 = vpop.f32.mrf.mxu0
        %v1627 = vadd.f32 0.0, %v1626
        %v1628 = vpop.f32.mrf.mxu0
        %v1629 = vadd.f32 0.0, %v1628
        %v1630 = vpop.f32.mrf.mxu0
        %v1631 = vadd.f32 0.0, %v1630
        %1632 = vmatprep.mubr.bf16.mxu0 %v735
        %1633 = vmatmul.mubr.bf16.gmra.mxu0 %v734
        %v1634 = vpop.f32.mrf.mxu0
        %v1635 = vadd.f32 0.0, %v1634
        %v1636 = vpop.f32.mrf.mxu0
        %v1637 = vadd.f32 0.0, %v1636
        %v1638 = vpop.f32.mrf.mxu0
        %v1639 = vadd.f32 0.0, %v1638
        %v1640 = vpop.f32.mrf.mxu0
        %v1641 = vadd.f32 0.0, %v1640
        %1642 = vmatprep.mubr.bf16.mxu0 %v737
        %1643 = vmatmul.mubr.bf16.gmra.mxu0 %v736
        %v1644 = vpop.f32.mrf.mxu0
        %v1645 = vadd.f32 0.0, %v1644
        %v1646 = vpop.f32.mrf.mxu0
        %v1647 = vadd.f32 0.0, %v1646
        %v1648 = vpop.f32.mrf.mxu0
        %v1649 = vadd.f32 0.0, %v1648
        %v1650 = vpop.f32.mrf.mxu0
        %v1651 = vadd.f32 0.0, %v1650
        %1652 = vdwg.mxu0
        %v1653 = vmul.f32 %v1349, %v486
        %v1654 = vmul.f32 %v1353, %v487
        %v1655 = vmul.f32 %v1359, %v488
        %v1656 = vmul.f32 %v1363, %v489
        %v1657 = vmul.f32 %v1369, %v490
        %v1658 = vmul.f32 %v1373, %v491
        %v1659 = vmul.f32 %v1379, %v492
        %v1660 = vmul.f32 %v1383, %v493
        %v1661 = vmul.f32 %v1389, %v494
        %v1662 = vmul.f32 %v1393, %v495
        %v1663 = vmul.f32 %v1399, %v496
        %v1664 = vmul.f32 %v1403, %v497
        %v1665 = vmul.f32 %v1409, %v498
        %v1666 = vmul.f32 %v1413, %v499
        %v1667 = vmul.f32 %v1419, %v500
        %v1668 = vmul.f32 %v1423, %v501
        %1669 = vrot.lane.b32.xlu0 %v1349, 64
        %v1670 = vpop.permute.xlu0 %1669
        %1671 = vrot.lane.b32.xlu0 %v1353, 64
        %v1672 = vpop.permute.xlu0 %1671
        %1673 = vrot.lane.b32.xlu0 %v1359, 64
        %v1674 = vpop.permute.xlu0 %1673
        %1675 = vrot.lane.b32.xlu0 %v1363, 64
        %v1676 = vpop.permute.xlu0 %1675
        %1677 = vrot.lane.b32.xlu0 %v1369, 64
        %v1678 = vpop.permute.xlu0 %1677
        %1679 = vrot.lane.b32.xlu0 %v1373, 64
        %v1680 = vpop.permute.xlu0 %1679
        %1681 = vrot.lane.b32.xlu0 %v1379, 64
        %v1682 = vpop.permute.xlu0 %1681
        %1683 = vrot.lane.b32.xlu0 %v1383, 64
        %v1684 = vpop.permute.xlu0 %1683
        %1685 = vrot.lane.b32.xlu0 %v1389, 64
        %v1686 = vpop.permute.xlu0 %1685
        %1687 = vrot.lane.b32.xlu0 %v1393, 64
        %v1688 = vpop.permute.xlu0 %1687
        %1689 = vrot.lane.b32.xlu0 %v1399, 64
        %v1690 = vpop.permute.xlu0 %1689
        %1691 = vrot.lane.b32.xlu0 %v1403, 64
        %v1692 = vpop.permute.xlu0 %1691
        %1693 = vrot.lane.b32.xlu0 %v1409, 64
        %v1694 = vpop.permute.xlu0 %1693
        %1695 = vrot.lane.b32.xlu0 %v1413, 64
        %v1696 = vpop.permute.xlu0 %1695
        %1697 = vrot.lane.b32.xlu0 %v1419, 64
        %v1698 = vpop.permute.xlu0 %1697
        %1699 = vrot.lane.b32.xlu0 %v1423, 64
        %v1700 = vpop.permute.xlu0 %1699
        %v1701 = vmul.f32 %v1670, %v502
        %v1702 = vmul.f32 %v1672, %v503
        %v1703 = vmul.f32 %v1674, %v504
        %v1704 = vmul.f32 %v1676, %v505
        %v1705 = vmul.f32 %v1678, %v506
        %v1706 = vmul.f32 %v1680, %v507
        %v1707 = vmul.f32 %v1682, %v508
        %v1708 = vmul.f32 %v1684, %v509
        %v1709 = vmul.f32 %v1686, %v510
        %v1710 = vmul.f32 %v1688, %v511
        %v1711 = vmul.f32 %v1690, %v512
        %v1712 = vmul.f32 %v1692, %v513
        %v1713 = vmul.f32 %v1694, %v514
        %v1714 = vmul.f32 %v1696, %v515
        %v1715 = vmul.f32 %v1698, %v516
        %v1716 = vmul.f32 %v1700, %v517
        %v1717 = vadd.f32 %v1653, %v1701
        %v1718 = vadd.f32 %v1654, %v1702
        %v1719 = vadd.f32 %v1655, %v1703
        %v1720 = vadd.f32 %v1656, %v1704
        %v1721 = vadd.f32 %v1657, %v1705
        %v1722 = vadd.f32 %v1658, %v1706
        %v1723 = vadd.f32 %v1659, %v1707
        %v1724 = vadd.f32 %v1660, %v1708
        %v1725 = vadd.f32 %v1661, %v1709
        %v1726 = vadd.f32 %v1662, %v1710
        %v1727 = vadd.f32 %v1663, %v1711
        %v1728 = vadd.f32 %v1664, %v1712
        %v1729 = vadd.f32 %v1665, %v1713
        %v1730 = vadd.f32 %v1666, %v1714
        %v1731 = vadd.f32 %v1667, %v1715
        %v1732 = vadd.f32 %v1668, %v1716
        %v1733 = vmul.f32 %v1462, %v486
        %v1734 = vmul.f32 %v1466, %v487
        %v1735 = vmul.f32 %v1472, %v488
        %v1736 = vmul.f32 %v1476, %v489
        %v1737 = vmul.f32 %v1482, %v490
        %v1738 = vmul.f32 %v1486, %v491
        %v1739 = vmul.f32 %v1492, %v492
        %v1740 = vmul.f32 %v1496, %v493
        %v1741 = vmul.f32 %v1502, %v494
        %v1742 = vmul.f32 %v1506, %v495
        %v1743 = vmul.f32 %v1512, %v496
        %v1744 = vmul.f32 %v1516, %v497
        %v1745 = vmul.f32 %v1522, %v498
        %v1746 = vmul.f32 %v1526, %v499
        %v1747 = vmul.f32 %v1532, %v500
        %v1748 = vmul.f32 %v1536, %v501
        %1749 = vrot.lane.b32.xlu0 %v1462, 64
        %v1750 = vpop.permute.xlu0 %1749
        %1751 = vrot.lane.b32.xlu0 %v1466, 64
        %v1752 = vpop.permute.xlu0 %1751
        %1753 = vrot.lane.b32.xlu0 %v1472, 64
        %v1754 = vpop.permute.xlu0 %1753
        %1755 = vrot.lane.b32.xlu0 %v1476, 64
        %v1756 = vpop.permute.xlu0 %1755
        %1757 = vrot.lane.b32.xlu0 %v1482, 64
        %v1758 = vpop.permute.xlu0 %1757
        %1759 = vrot.lane.b32.xlu0 %v1486, 64
        %v1760 = vpop.permute.xlu0 %1759
        %1761 = vrot.lane.b32.xlu0 %v1492, 64
        %v1762 = vpop.permute.xlu0 %1761
        %1763 = vrot.lane.b32.xlu0 %v1496, 64
        %v1764 = vpop.permute.xlu0 %1763
        %1765 = vrot.lane.b32.xlu0 %v1502, 64
        %v1766 = vpop.permute.xlu0 %1765
        %1767 = vrot.lane.b32.xlu0 %v1506, 64
        %v1768 = vpop.permute.xlu0 %1767
        %1769 = vrot.lane.b32.xlu0 %v1512, 64
        %v1770 = vpop.permute.xlu0 %1769
        %1771 = vrot.lane.b32.xlu0 %v1516, 64
        %v1772 = vpop.permute.xlu0 %1771
        %1773 = vrot.lane.b32.xlu0 %v1522, 64
        %v1774 = vpop.permute.xlu0 %1773
        %1775 = vrot.lane.b32.xlu0 %v1526, 64
        %v1776 = vpop.permute.xlu0 %1775
        %1777 = vrot.lane.b32.xlu0 %v1532, 64
        %v1778 = vpop.permute.xlu0 %1777
        %1779 = vrot.lane.b32.xlu0 %v1536, 64
        %v1780 = vpop.permute.xlu0 %1779
        %v1781 = vmul.f32 %v1750, %v502
        %v1782 = vmul.f32 %v1752, %v503
        %v1783 = vmul.f32 %v1754, %v504
        %v1784 = vmul.f32 %v1756, %v505
        %v1785 = vmul.f32 %v1758, %v506
        %v1786 = vmul.f32 %v1760, %v507
        %v1787 = vmul.f32 %v1762, %v508
        %v1788 = vmul.f32 %v1764, %v509
        %v1789 = vmul.f32 %v1766, %v510
        %v1790 = vmul.f32 %v1768, %v511
        %v1791 = vmul.f32 %v1770, %v512
        %v1792 = vmul.f32 %v1772, %v513
        %v1793 = vmul.f32 %v1774, %v514
        %v1794 = vmul.f32 %v1776, %v515
        %v1795 = vmul.f32 %v1778, %v516
        %v1796 = vmul.f32 %v1780, %v517
        %v1797 = vadd.f32 %v1733, %v1781
        %v1798 = vadd.f32 %v1734, %v1782
        %v1799 = vadd.f32 %v1735, %v1783
        %v1800 = vadd.f32 %v1736, %v1784
        %v1801 = vadd.f32 %v1737, %v1785
        %v1802 = vadd.f32 %v1738, %v1786
        %v1803 = vadd.f32 %v1739, %v1787
        %v1804 = vadd.f32 %v1740, %v1788
        %v1805 = vadd.f32 %v1741, %v1789
        %v1806 = vadd.f32 %v1742, %v1790
        %v1807 = vadd.f32 %v1743, %v1791
        %v1808 = vadd.f32 %v1744, %v1792
        %v1809 = vadd.f32 %v1745, %v1793
        %v1810 = vadd.f32 %v1746, %v1794
        %v1811 = vadd.f32 %v1747, %v1795
        %v1812 = vadd.f32 %v1748, %v1796
        %v1813 = vmul.f32 %v1351, %v486
        %v1814 = vmul.f32 %v1355, %v487
        %v1815 = vmul.f32 %v1361, %v488
        %v1816 = vmul.f32 %v1365, %v489
        %v1817 = vmul.f32 %v1371, %v490
        %v1818 = vmul.f32 %v1375, %v491
        %v1819 = vmul.f32 %v1381, %v492
        %v1820 = vmul.f32 %v1385, %v493
        %v1821 = vmul.f32 %v1391, %v494
        %v1822 = vmul.f32 %v1395, %v495
        %v1823 = vmul.f32 %v1401, %v496
        %v1824 = vmul.f32 %v1405, %v497
        %v1825 = vmul.f32 %v1411, %v498
        %v1826 = vmul.f32 %v1415, %v499
        %v1827 = vmul.f32 %v1421, %v500
        %v1828 = vmul.f32 %v1425, %v501
        %1829 = vrot.lane.b32.xlu0 %v1351, 64
        %v1830 = vpop.permute.xlu0 %1829
        %1831 = vrot.lane.b32.xlu0 %v1355, 64
        %v1832 = vpop.permute.xlu0 %1831
        %1833 = vrot.lane.b32.xlu0 %v1361, 64
        %v1834 = vpop.permute.xlu0 %1833
        %1835 = vrot.lane.b32.xlu0 %v1365, 64
        %v1836 = vpop.permute.xlu0 %1835
        %1837 = vrot.lane.b32.xlu0 %v1371, 64
        %v1838 = vpop.permute.xlu0 %1837
        %1839 = vrot.lane.b32.xlu0 %v1375, 64
        %v1840 = vpop.permute.xlu0 %1839
        %1841 = vrot.lane.b32.xlu0 %v1381, 64
        %v1842 = vpop.permute.xlu0 %1841
        %1843 = vrot.lane.b32.xlu0 %v1385, 64
        %v1844 = vpop.permute.xlu0 %1843
        %1845 = vrot.lane.b32.xlu0 %v1391, 64
        %v1846 = vpop.permute.xlu0 %1845
        %1847 = vrot.lane.b32.xlu0 %v1395, 64
        %v1848 = vpop.permute.xlu0 %1847
        %1849 = vrot.lane.b32.xlu0 %v1401, 64
        %v1850 = vpop.permute.xlu0 %1849
        %1851 = vrot.lane.b32.xlu0 %v1405, 64
        %v1852 = vpop.permute.xlu0 %1851
        %1853 = vrot.lane.b32.xlu0 %v1411, 64
        %v1854 = vpop.permute.xlu0 %1853
        %1855 = vrot.lane.b32.xlu0 %v1415, 64
        %v1856 = vpop.permute.xlu0 %1855
        %1857 = vrot.lane.b32.xlu0 %v1421, 64
        %v1858 = vpop.permute.xlu0 %1857
        %1859 = vrot.lane.b32.xlu0 %v1425, 64
        %v1860 = vpop.permute.xlu0 %1859
        %v1861 = vmul.f32 %v1830, %v502
        %v1862 = vmul.f32 %v1832, %v503
        %v1863 = vmul.f32 %v1834, %v504
        %v1864 = vmul.f32 %v1836, %v505
        %v1865 = vmul.f32 %v1838, %v506
        %v1866 = vmul.f32 %v1840, %v507
        %v1867 = vmul.f32 %v1842, %v508
        %v1868 = vmul.f32 %v1844, %v509
        %v1869 = vmul.f32 %v1846, %v510
        %v1870 = vmul.f32 %v1848, %v511
        %v1871 = vmul.f32 %v1850, %v512
        %v1872 = vmul.f32 %v1852, %v513
        %v1873 = vmul.f32 %v1854, %v514
        %v1874 = vmul.f32 %v1856, %v515
        %v1875 = vmul.f32 %v1858, %v516
        %v1876 = vmul.f32 %v1860, %v517
        %v1877 = vadd.f32 %v1813, %v1861
        %v1878 = vadd.f32 %v1814, %v1862
        %v1879 = vadd.f32 %v1815, %v1863
        %v1880 = vadd.f32 %v1816, %v1864
        %v1881 = vadd.f32 %v1817, %v1865
        %v1882 = vadd.f32 %v1818, %v1866
        %v1883 = vadd.f32 %v1819, %v1867
        %v1884 = vadd.f32 %v1820, %v1868
        %v1885 = vadd.f32 %v1821, %v1869
        %v1886 = vadd.f32 %v1822, %v1870
        %v1887 = vadd.f32 %v1823, %v1871
        %v1888 = vadd.f32 %v1824, %v1872
        %v1889 = vadd.f32 %v1825, %v1873
        %v1890 = vadd.f32 %v1826, %v1874
        %v1891 = vadd.f32 %v1827, %v1875
        %v1892 = vadd.f32 %v1828, %v1876
        %v1893 = vmul.f32 %v1464, %v486
        %v1894 = vmul.f32 %v1468, %v487
        %v1895 = vmul.f32 %v1474, %v488
        %v1896 = vmul.f32 %v1478, %v489
        %v1897 = vmul.f32 %v1484, %v490
        %v1898 = vmul.f32 %v1488, %v491
        %v1899 = vmul.f32 %v1494, %v492
        %v1900 = vmul.f32 %v1498, %v493
        %v1901 = vmul.f32 %v1504, %v494
        %v1902 = vmul.f32 %v1508, %v495
        %v1903 = vmul.f32 %v1514, %v496
        %v1904 = vmul.f32 %v1518, %v497
        %v1905 = vmul.f32 %v1524, %v498
        %v1906 = vmul.f32 %v1528, %v499
        %v1907 = vmul.f32 %v1534, %v500
        %v1908 = vmul.f32 %v1538, %v501
        %1909 = vrot.lane.b32.xlu0 %v1464, 64
        %v1910 = vpop.permute.xlu0 %1909
        %1911 = vrot.lane.b32.xlu0 %v1468, 64
        %v1912 = vpop.permute.xlu0 %1911
        %1913 = vrot.lane.b32.xlu0 %v1474, 64
        %v1914 = vpop.permute.xlu0 %1913
        %1915 = vrot.lane.b32.xlu0 %v1478, 64
        %v1916 = vpop.permute.xlu0 %1915
        %1917 = vrot.lane.b32.xlu0 %v1484, 64
        %v1918 = vpop.permute.xlu0 %1917
        %1919 = vrot.lane.b32.xlu0 %v1488, 64
        %v1920 = vpop.permute.xlu0 %1919
        %1921 = vrot.lane.b32.xlu0 %v1494, 64
        %v1922 = vpop.permute.xlu0 %1921
        %1923 = vrot.lane.b32.xlu0 %v1498, 64
        %v1924 = vpop.permute.xlu0 %1923
        %1925 = vrot.lane.b32.xlu0 %v1504, 64
        %v1926 = vpop.permute.xlu0 %1925
        %1927 = vrot.lane.b32.xlu0 %v1508, 64
        %v1928 = vpop.permute.xlu0 %1927
        %1929 = vrot.lane.b32.xlu0 %v1514, 64
        %v1930 = vpop.permute.xlu0 %1929
        %1931 = vrot.lane.b32.xlu0 %v1518, 64
        %v1932 = vpop.permute.xlu0 %1931
        %1933 = vrot.lane.b32.xlu0 %v1524, 64
        %v1934 = vpop.permute.xlu0 %1933
        %1935 = vrot.lane.b32.xlu0 %v1528, 64
        %v1936 = vpop.permute.xlu0 %1935
        %1937 = vrot.lane.b32.xlu0 %v1534, 64
        %v1938 = vpop.permute.xlu0 %1937
        %1939 = vrot.lane.b32.xlu0 %v1538, 64
        %v1940 = vpop.permute.xlu0 %1939
        %v1941 = vmul.f32 %v1910, %v502
        %v1942 = vmul.f32 %v1912, %v503
        %v1943 = vmul.f32 %v1914, %v504
        %v1944 = vmul.f32 %v1916, %v505
        %v1945 = vmul.f32 %v1918, %v506
        %v1946 = vmul.f32 %v1920, %v507
        %v1947 = vmul.f32 %v1922, %v508
        %v1948 = vmul.f32 %v1924, %v509
        %v1949 = vmul.f32 %v1926, %v510
        %v1950 = vmul.f32 %v1928, %v511
        %v1951 = vmul.f32 %v1930, %v512
        %v1952 = vmul.f32 %v1932, %v513
        %v1953 = vmul.f32 %v1934, %v514
        %v1954 = vmul.f32 %v1936, %v515
        %v1955 = vmul.f32 %v1938, %v516
        %v1956 = vmul.f32 %v1940, %v517
        %v1957 = vadd.f32 %v1893, %v1941
        %v1958 = vadd.f32 %v1894, %v1942
        %v1959 = vadd.f32 %v1895, %v1943
        %v1960 = vadd.f32 %v1896, %v1944
        %v1961 = vadd.f32 %v1897, %v1945
        %v1962 = vadd.f32 %v1898, %v1946
        %v1963 = vadd.f32 %v1899, %v1947
        %v1964 = vadd.f32 %v1900, %v1948
        %v1965 = vadd.f32 %v1901, %v1949
        %v1966 = vadd.f32 %v1902, %v1950
        %v1967 = vadd.f32 %v1903, %v1951
        %v1968 = vadd.f32 %v1904, %v1952
        %v1969 = vadd.f32 %v1905, %v1953
        %v1970 = vadd.f32 %v1906, %v1954
        %v1971 = vadd.f32 %v1907, %v1955
        %v1972 = vadd.f32 %v1908, %v1956
        %v1973 = vpack.c.bf16 %v1718, %v1717
        %v1974 = vpack.c.bf16 %v1878, %v1877
        %v1975 = vpack.c.bf16 %v1720, %v1719
        %v1976 = vpack.c.bf16 %v1880, %v1879
        %v1977 = vpack.c.bf16 %v1722, %v1721
        %v1978 = vpack.c.bf16 %v1882, %v1881
        %v1979 = vpack.c.bf16 %v1724, %v1723
        %v1980 = vpack.c.bf16 %v1884, %v1883
        %v1981 = vpack.c.bf16 %v1726, %v1725
        %v1982 = vpack.c.bf16 %v1886, %v1885
        %v1983 = vpack.c.bf16 %v1728, %v1727
        %v1984 = vpack.c.bf16 %v1888, %v1887
        %v1985 = vpack.c.bf16 %v1730, %v1729
        %v1986 = vpack.c.bf16 %v1890, %v1889
        %v1987 = vpack.c.bf16 %v1732, %v1731
        %v1988 = vpack.c.bf16 %v1892, %v1891
        %v1989 = vpack.c.bf16 %v1798, %v1797
        %v1990 = vpack.c.bf16 %v1958, %v1957
        %v1991 = vpack.c.bf16 %v1800, %v1799
        %v1992 = vpack.c.bf16 %v1960, %v1959
        %v1993 = vpack.c.bf16 %v1802, %v1801
        %v1994 = vpack.c.bf16 %v1962, %v1961
        %v1995 = vpack.c.bf16 %v1804, %v1803
        %v1996 = vpack.c.bf16 %v1964, %v1963
        %v1997 = vpack.c.bf16 %v1806, %v1805
        %v1998 = vpack.c.bf16 %v1966, %v1965
        %v1999 = vpack.c.bf16 %v1808, %v1807
        %v2000 = vpack.c.bf16 %v1968, %v1967
        %v2001 = vpack.c.bf16 %v1810, %v1809
        %v2002 = vpack.c.bf16 %v1970, %v1969
        %v2003 = vpack.c.bf16 %v1812, %v1811
        %v2004 = vpack.c.bf16 %v1972, %v1971
        %v2005 = vpack.c.bf16 %v1579, %v1575
        %v2006 = vpack.c.bf16 %v1581, %v1577
        %v2007 = vpack.c.bf16 %v1589, %v1585
        %v2008 = vpack.c.bf16 %v1591, %v1587
        %v2009 = vpack.c.bf16 %v1599, %v1595
        %v2010 = vpack.c.bf16 %v1601, %v1597
        %v2011 = vpack.c.bf16 %v1609, %v1605
        %v2012 = vpack.c.bf16 %v1611, %v1607
        %v2013 = vpack.c.bf16 %v1619, %v1615
        %v2014 = vpack.c.bf16 %v1621, %v1617
        %v2015 = vpack.c.bf16 %v1629, %v1625
        %v2016 = vpack.c.bf16 %v1631, %v1627
        %v2017 = vpack.c.bf16 %v1639, %v1635
        %v2018 = vpack.c.bf16 %v1641, %v1637
        %v2019 = vpack.c.bf16 %v1649, %v1645
        %v2020 = vpack.c.bf16 %v1651, %v1647
        %v2021 = vlaneseq
        %v2022 = vshrl.u32 %v2021, 7
        %v2023 = vadd.s32 %v2022, 8
        %v2024 = vadd.s32 %v2022, 16
        %v2025 = vadd.s32 %v2022, 24
        %v2026 = vadd.s32 %v2022, 32
        %v2027 = vadd.s32 %v2022, 40
        %v2028 = vadd.s32 %v2022, 48
        %v2029 = vadd.s32 %v2022, 56
        %v2030 = vadd.s32 %v2022, 64
        %v2031 = vadd.s32 %v2022, 72
        %v2032 = vadd.s32 %v2022, 80
        %v2033 = vadd.s32 %v2022, 88
        %v2034 = vadd.s32 %v2022, 96
        %v2035 = vadd.s32 %v2022, 104
        %v2036 = vadd.s32 %v2022, 112
        %v2037 = vadd.s32 %v2022, 120
        %v2038 = vlaneseq
        %v2039 = vand.u32 %v2038, 127
        %vm2040 = vcmp.ge.s32.totalorder %v2022, %v2039
        %vm2041 = vcmp.ge.s32.totalorder %v2023, %v2039
        %vm2042 = vcmp.ge.s32.totalorder %v2024, %v2039
        %vm2043 = vcmp.ge.s32.totalorder %v2025, %v2039
        %vm2044 = vcmp.ge.s32.totalorder %v2026, %v2039
        %vm2045 = vcmp.ge.s32.totalorder %v2027, %v2039
        %vm2046 = vcmp.ge.s32.totalorder %v2028, %v2039
        %vm2047 = vcmp.ge.s32.totalorder %v2029, %v2039
        %vm2048 = vcmp.ge.s32.totalorder %v2030, %v2039
        %vm2049 = vcmp.ge.s32.totalorder %v2031, %v2039
        %vm2050 = vcmp.ge.s32.totalorder %v2032, %v2039
        %vm2051 = vcmp.ge.s32.totalorder %v2033, %v2039
        %vm2052 = vcmp.ge.s32.totalorder %v2034, %v2039
        %vm2053 = vcmp.ge.s32.totalorder %v2035, %v2039
        %vm2054 = vcmp.ge.s32.totalorder %v2036, %v2039
        %vm2055 = vcmp.ge.s32.totalorder %v2037, %v2039
        %2056 = vmatprep.subr.bf16.mxu0 0
        %2057 = vmatpush1.bf16.xpose.msra.mxu0 %v2003
        %2058 = vmatprep.subr.bf16.mxu0 0
        %2059 = vmatpush1.bf16.xpose.msra.mxu0 %v2001
        %2060 = vmatprep.subr.bf16.mxu0 0
        %2061 = vmatpush1.bf16.xpose.msra.mxu0 %v1999
        %2062 = vmatprep.subr.bf16.mxu0 0
        %2063 = vmatpush1.bf16.xpose.msra.mxu0 %v1997
        %2064 = vmatprep.subr.bf16.mxu0 0
        %2065 = vmatpush1.bf16.xpose.msra.mxu0 %v1995
        %2066 = vmatprep.subr.bf16.mxu0 0
        %2067 = vmatpush1.bf16.xpose.msra.mxu0 %v1993
        %2068 = vmatprep.subr.bf16.mxu0 0
        %2069 = vmatpush1.bf16.xpose.msra.mxu0 %v1991
        %2070 = vmatprep.subr.bf16.mxu0 0
        %2071 = vmatpush1.bf16.xpose.msra.mxu0 %v1989
        %2072 = vmatprep.subr.bf16.mxu0 0
        %2073 = vmatpush2.bf16.xpose.msra.mxu0 0
        %2074 = vmatprep.subr.bf16.mxu0 0
        %2075 = vmatpush2.bf16.xpose.msra.mxu0 0
        %2076 = vmatprep.subr.bf16.mxu0 0
        %2077 = vmatpush2.bf16.xpose.msra.mxu0 0
        %2078 = vmatprep.subr.bf16.mxu0 0
        %2079 = vmatpush2.bf16.xpose.msra.mxu0 0
        %2080 = vmatprep.subr.bf16.mxu0 0
        %2081 = vmatpush2.bf16.xpose.msra.mxu0 0
        %2082 = vmatprep.subr.bf16.mxu0 0
        %2083 = vmatpush2.bf16.xpose.msra.mxu0 0
        %2084 = vmatprep.subr.bf16.mxu0 0
        %2085 = vmatpush2.bf16.xpose.msra.mxu0 0
        %2086 = vmatprep.subr.bf16.mxu0 0
        %2087 = vmatpush2.bf16.xpose.msra.mxu0 0
        %2088 = vmatprep.mubr.bf16.mxu0 0
        %2089 = vmatmul.mubr.bf16.gmra.mxu0 %v1973
        %v2090 = vpop.f32.mrf.mxu0
        %v2091 = vadd.f32 0.0, %v2090
        %v2092 = vpop.f32.mrf.mxu0
        %v2093 = vpop.f32.mrf.mxu0
        %v2094 = vadd.f32 0.0, %v2093
        %v2095 = vpop.f32.mrf.mxu0
        %2096 = vmatprep.mubr.bf16.mxu0 0
        %2097 = vmatmul.mubr.bf16.gmra.mxu0 %v1975
        %v2098 = vpop.f32.mrf.mxu0
        %v2099 = vadd.f32 0.0, %v2098
        %v2100 = vpop.f32.mrf.mxu0
        %v2101 = vpop.f32.mrf.mxu0
        %v2102 = vadd.f32 0.0, %v2101
        %v2103 = vpop.f32.mrf.mxu0
        %2104 = vmatprep.mubr.bf16.mxu0 0
        %2105 = vmatmul.mubr.bf16.gmra.mxu0 %v1977
        %v2106 = vpop.f32.mrf.mxu0
        %v2107 = vadd.f32 0.0, %v2106
        %v2108 = vpop.f32.mrf.mxu0
        %v2109 = vpop.f32.mrf.mxu0
        %v2110 = vadd.f32 0.0, %v2109
        %v2111 = vpop.f32.mrf.mxu0
        %2112 = vmatprep.mubr.bf16.mxu0 0
        %2113 = vmatmul.mubr.bf16.gmra.mxu0 %v1979
        %v2114 = vpop.f32.mrf.mxu0
        %v2115 = vadd.f32 0.0, %v2114
        %v2116 = vpop.f32.mrf.mxu0
        %v2117 = vpop.f32.mrf.mxu0
        %v2118 = vadd.f32 0.0, %v2117
        %v2119 = vpop.f32.mrf.mxu0
        %2120 = vmatprep.mubr.bf16.mxu0 0
        %2121 = vmatmul.mubr.bf16.gmra.mxu0 %v1981
        %v2122 = vpop.f32.mrf.mxu0
        %v2123 = vadd.f32 0.0, %v2122
        %v2124 = vpop.f32.mrf.mxu0
        %v2125 = vpop.f32.mrf.mxu0
        %v2126 = vadd.f32 0.0, %v2125
        %v2127 = vpop.f32.mrf.mxu0
        %2128 = vmatprep.mubr.bf16.mxu0 0
        %2129 = vmatmul.mubr.bf16.gmra.mxu0 %v1983
        %v2130 = vpop.f32.mrf.mxu0
        %v2131 = vadd.f32 0.0, %v2130
        %v2132 = vpop.f32.mrf.mxu0
        %v2133 = vpop.f32.mrf.mxu0
        %v2134 = vadd.f32 0.0, %v2133
        %v2135 = vpop.f32.mrf.mxu0
        %2136 = vmatprep.mubr.bf16.mxu0 0
        %2137 = vmatmul.mubr.bf16.gmra.mxu0 %v1985
        %v2138 = vpop.f32.mrf.mxu0
        %v2139 = vadd.f32 0.0, %v2138
        %v2140 = vpop.f32.mrf.mxu0
        %v2141 = vpop.f32.mrf.mxu0
        %v2142 = vadd.f32 0.0, %v2141
        %v2143 = vpop.f32.mrf.mxu0
        %2144 = vmatprep.mubr.bf16.mxu0 0
        %2145 = vmatmul.mubr.bf16.gmra.mxu0 %v1987
        %v2146 = vpop.f32.mrf.mxu0
        %v2147 = vadd.f32 0.0, %v2146
        %v2148 = vpop.f32.mrf.mxu0
        %v2149 = vpop.f32.mrf.mxu0
        %v2150 = vadd.f32 0.0, %v2149
        %v2151 = vpop.f32.mrf.mxu0
        %2152 = vdwg.mxu0
        %v2153 = vsel %vm2040, %v2091, -1e+30
        %v2154 = vsel %vm2041, %v2094, -1e+30
        %v2155 = vsel %vm2042, %v2099, -1e+30
        %v2156 = vsel %vm2043, %v2102, -1e+30
        %v2157 = vsel %vm2044, %v2107, -1e+30
        %v2158 = vsel %vm2045, %v2110, -1e+30
        %v2159 = vsel %vm2046, %v2115, -1e+30
        %v2160 = vsel %vm2047, %v2118, -1e+30
        %v2161 = vsel %vm2048, %v2123, -1e+30
        %v2162 = vsel %vm2049, %v2126, -1e+30
        %v2163 = vsel %vm2050, %v2131, -1e+30
        %v2164 = vsel %vm2051, %v2134, -1e+30
        %v2165 = vsel %vm2052, %v2139, -1e+30
        %v2166 = vsel %vm2053, %v2142, -1e+30
        %v2167 = vsel %vm2054, %v2147, -1e+30
        %v2168 = vsel %vm2055, %v2150, -1e+30
        %2169 = vmax.xlane.f32.xlu0 %v2153
        %v2170 = vpop.xlane.xlu0 %2169
        %2171 = vmax.xlane.f32.xlu0 %v2154
        %v2172 = vpop.xlane.xlu0 %2171
        %2173 = vmax.xlane.f32.xlu0 %v2155
        %v2174 = vpop.xlane.xlu0 %2173
        %2175 = vmax.xlane.f32.xlu0 %v2156
        %v2176 = vpop.xlane.xlu0 %2175
        %2177 = vmax.xlane.f32.xlu0 %v2157
        %v2178 = vpop.xlane.xlu0 %2177
        %2179 = vmax.xlane.f32.xlu0 %v2158
        %v2180 = vpop.xlane.xlu0 %2179
        %2181 = vmax.xlane.f32.xlu0 %v2159
        %v2182 = vpop.xlane.xlu0 %2181
        %2183 = vmax.xlane.f32.xlu0 %v2160
        %v2184 = vpop.xlane.xlu0 %2183
        %2185 = vmax.xlane.f32.xlu0 %v2161
        %v2186 = vpop.xlane.xlu0 %2185
        %2187 = vmax.xlane.f32.xlu0 %v2162
        %v2188 = vpop.xlane.xlu0 %2187
        %2189 = vmax.xlane.f32.xlu0 %v2163
        %v2190 = vpop.xlane.xlu0 %2189
        %2191 = vmax.xlane.f32.xlu0 %v2164
        %v2192 = vpop.xlane.xlu0 %2191
        %2193 = vmax.xlane.f32.xlu0 %v2165
        %v2194 = vpop.xlane.xlu0 %2193
        %2195 = vmax.xlane.f32.xlu0 %v2166
        %v2196 = vpop.xlane.xlu0 %2195
        %2197 = vmax.xlane.f32.xlu0 %v2167
        %v2198 = vpop.xlane.xlu0 %2197
        %2199 = vmax.xlane.f32.xlu0 %v2168
        %v2200 = vpop.xlane.xlu0 %2199
        %v2201 = vsub.f32 -inf, %v2170
        %v2202 = vsub.f32 -inf, %v2172
        %v2203 = vsub.f32 -inf, %v2174
        %v2204 = vsub.f32 -inf, %v2176
        %v2205 = vsub.f32 -inf, %v2178
        %v2206 = vsub.f32 -inf, %v2180
        %v2207 = vsub.f32 -inf, %v2182
        %v2208 = vsub.f32 -inf, %v2184
        %v2209 = vsub.f32 -inf, %v2186
        %v2210 = vsub.f32 -inf, %v2188
        %v2211 = vsub.f32 -inf, %v2190
        %v2212 = vsub.f32 -inf, %v2192
        %v2213 = vsub.f32 -inf, %v2194
        %v2214 = vsub.f32 -inf, %v2196
        %v2215 = vsub.f32 -inf, %v2198
        %v2216 = vsub.f32 -inf, %v2200
        %v2217 = vmul.f32 %v2201, 1.442695
        %v2218 = vpow.pop %v2217
        %v2219 = vmul.f32 %v2202, 1.442695
        %v2220 = vpow.pop %v2219
        %v2221 = vmul.f32 %v2203, 1.442695
        %v2222 = vpow.pop %v2221
        %v2223 = vmul.f32 %v2204, 1.442695
        %v2224 = vpow.pop %v2223
        %v2225 = vmul.f32 %v2205, 1.442695
        %v2226 = vpow.pop %v2225
        %v2227 = vmul.f32 %v2206, 1.442695
        %v2228 = vpow.pop %v2227
        %v2229 = vmul.f32 %v2207, 1.442695
        %v2230 = vpow.pop %v2229
        %v2231 = vmul.f32 %v2208, 1.442695
        %v2232 = vpow.pop %v2231
        %v2233 = vmul.f32 %v2209, 1.442695
        %v2234 = vpow.pop %v2233
        %v2235 = vmul.f32 %v2210, 1.442695
        %v2236 = vpow.pop %v2235
        %v2237 = vmul.f32 %v2211, 1.442695
        %v2238 = vpow.pop %v2237
        %v2239 = vmul.f32 %v2212, 1.442695
        %v2240 = vpow.pop %v2239
        %v2241 = vmul.f32 %v2213, 1.442695
        %v2242 = vpow.pop %v2241
        %v2243 = vmul.f32 %v2214, 1.442695
        %v2244 = vpow.pop %v2243
        %v2245 = vmul.f32 %v2215, 1.442695
        %v2246 = vpow.pop %v2245
        %v2247 = vmul.f32 %v2216, 1.442695
        %v2248 = vpow.pop %v2247
        %v2249 = vsub.f32 %v2153, %v2170
        %v2250 = vsub.f32 %v2154, %v2172
        %v2251 = vsub.f32 %v2155, %v2174
        %v2252 = vsub.f32 %v2156, %v2176
        %v2253 = vsub.f32 %v2157, %v2178
        %v2254 = vsub.f32 %v2158, %v2180
        %v2255 = vsub.f32 %v2159, %v2182
        %v2256 = vsub.f32 %v2160, %v2184
        %v2257 = vsub.f32 %v2161, %v2186
        %v2258 = vsub.f32 %v2162, %v2188
        %v2259 = vsub.f32 %v2163, %v2190
        %v2260 = vsub.f32 %v2164, %v2192
        %v2261 = vsub.f32 %v2165, %v2194
        %v2262 = vsub.f32 %v2166, %v2196
        %v2263 = vsub.f32 %v2167, %v2198
        %v2264 = vsub.f32 %v2168, %v2200
        %v2265 = vmul.f32 %v2249, 1.442695
        %v2266 = vpow.pop %v2265
        %v2267 = vmul.f32 %v2250, 1.442695
        %v2268 = vpow.pop %v2267
        %v2269 = vmul.f32 %v2251, 1.442695
        %v2270 = vpow.pop %v2269
        %v2271 = vmul.f32 %v2252, 1.442695
        %v2272 = vpow.pop %v2271
        %v2273 = vmul.f32 %v2253, 1.442695
        %v2274 = vpow.pop %v2273
        %v2275 = vmul.f32 %v2254, 1.442695
        %v2276 = vpow.pop %v2275
        %v2277 = vmul.f32 %v2255, 1.442695
        %v2278 = vpow.pop %v2277
        %v2279 = vmul.f32 %v2256, 1.442695
        %v2280 = vpow.pop %v2279
        %v2281 = vmul.f32 %v2257, 1.442695
        %v2282 = vpow.pop %v2281
        %v2283 = vmul.f32 %v2258, 1.442695
        %v2284 = vpow.pop %v2283
        %v2285 = vmul.f32 %v2259, 1.442695
        %v2286 = vpow.pop %v2285
        %v2287 = vmul.f32 %v2260, 1.442695
        %v2288 = vpow.pop %v2287
        %v2289 = vmul.f32 %v2261, 1.442695
        %v2290 = vpow.pop %v2289
        %v2291 = vmul.f32 %v2262, 1.442695
        %v2292 = vpow.pop %v2291
        %v2293 = vmul.f32 %v2263, 1.442695
        %v2294 = vpow.pop %v2293
        %v2295 = vmul.f32 %v2264, 1.442695
        %v2296 = vpow.pop %v2295
        %v2297 = vmul.f32 %v2218, 0.0
        %v2298 = vmul.f32 %v2220, 0.0
        %v2299 = vmul.f32 %v2222, 0.0
        %v2300 = vmul.f32 %v2224, 0.0
        %v2301 = vmul.f32 %v2226, 0.0
        %v2302 = vmul.f32 %v2228, 0.0
        %v2303 = vmul.f32 %v2230, 0.0
        %v2304 = vmul.f32 %v2232, 0.0
        %v2305 = vmul.f32 %v2234, 0.0
        %v2306 = vmul.f32 %v2236, 0.0
        %v2307 = vmul.f32 %v2238, 0.0
        %v2308 = vmul.f32 %v2240, 0.0
        %v2309 = vmul.f32 %v2242, 0.0
        %v2310 = vmul.f32 %v2244, 0.0
        %v2311 = vmul.f32 %v2246, 0.0
        %v2312 = vmul.f32 %v2248, 0.0
        %2313 = vadd.xlane.f32.xlu0 %v2266
        %v2314 = vpop.xlane.xlu0 %2313
        %2315 = vadd.xlane.f32.xlu0 %v2268
        %v2316 = vpop.xlane.xlu0 %2315
        %2317 = vadd.xlane.f32.xlu0 %v2270
        %v2318 = vpop.xlane.xlu0 %2317
        %2319 = vadd.xlane.f32.xlu0 %v2272
        %v2320 = vpop.xlane.xlu0 %2319
        %2321 = vadd.xlane.f32.xlu0 %v2274
        %v2322 = vpop.xlane.xlu0 %2321
        %2323 = vadd.xlane.f32.xlu0 %v2276
        %v2324 = vpop.xlane.xlu0 %2323
        %2325 = vadd.xlane.f32.xlu0 %v2278
        %v2326 = vpop.xlane.xlu0 %2325
        %2327 = vadd.xlane.f32.xlu0 %v2280
        %v2328 = vpop.xlane.xlu0 %2327
        %2329 = vadd.xlane.f32.xlu0 %v2282
        %v2330 = vpop.xlane.xlu0 %2329
        %2331 = vadd.xlane.f32.xlu0 %v2284
        %v2332 = vpop.xlane.xlu0 %2331
        %2333 = vadd.xlane.f32.xlu0 %v2286
        %v2334 = vpop.xlane.xlu0 %2333
        %2335 = vadd.xlane.f32.xlu0 %v2288
        %v2336 = vpop.xlane.xlu0 %2335
        %2337 = vadd.xlane.f32.xlu0 %v2290
        %v2338 = vpop.xlane.xlu0 %2337
        %2339 = vadd.xlane.f32.xlu0 %v2292
        %v2340 = vpop.xlane.xlu0 %2339
        %2341 = vadd.xlane.f32.xlu0 %v2294
        %v2342 = vpop.xlane.xlu0 %2341
        %2343 = vadd.xlane.f32.xlu0 %v2296
        %v2344 = vpop.xlane.xlu0 %2343
        %v2345 = vadd.f32 %v2297, %v2314
        %v2346 = vadd.f32 %v2298, %v2316
        %v2347 = vadd.f32 %v2299, %v2318
        %v2348 = vadd.f32 %v2300, %v2320
        %v2349 = vadd.f32 %v2301, %v2322
        %v2350 = vadd.f32 %v2302, %v2324
        %v2351 = vadd.f32 %v2303, %v2326
        %v2352 = vadd.f32 %v2304, %v2328
        %v2353 = vadd.f32 %v2305, %v2330
        %v2354 = vadd.f32 %v2306, %v2332
        %v2355 = vadd.f32 %v2307, %v2334
        %v2356 = vadd.f32 %v2308, %v2336
        %v2357 = vadd.f32 %v2309, %v2338
        %v2358 = vadd.f32 %v2310, %v2340
        %v2359 = vadd.f32 %v2311, %v2342
        %v2360 = vadd.f32 %v2312, %v2344
        %v2361 = vpack.c.bf16 %v2268, %v2266
        %v2362 = vpack.c.bf16 %v2272, %v2270
        %v2363 = vpack.c.bf16 %v2276, %v2274
        %v2364 = vpack.c.bf16 %v2280, %v2278
        %v2365 = vpack.c.bf16 %v2284, %v2282
        %v2366 = vpack.c.bf16 %v2288, %v2286
        %v2367 = vpack.c.bf16 %v2292, %v2290
        %v2368 = vpack.c.bf16 %v2296, %v2294
        %2369 = vmatprep.subr.bf16.mxu0 0
        %2370 = vmatpush1.bf16.msra.mxu0 %v2019
        %2371 = vmatprep.subr.bf16.mxu0 0
        %2372 = vmatpush1.bf16.msra.mxu0 %v2017
        %2373 = vmatprep.subr.bf16.mxu0 0
        %2374 = vmatpush1.bf16.msra.mxu0 %v2015
        %2375 = vmatprep.subr.bf16.mxu0 0
        %2376 = vmatpush1.bf16.msra.mxu0 %v2013
        %2377 = vmatprep.subr.bf16.mxu0 0
        %2378 = vmatpush1.bf16.msra.mxu0 %v2011
        %2379 = vmatprep.subr.bf16.mxu0 0
        %2380 = vmatpush1.bf16.msra.mxu0 %v2009
        %2381 = vmatprep.subr.bf16.mxu0 0
        %2382 = vmatpush1.bf16.msra.mxu0 %v2007
        %2383 = vmatprep.subr.bf16.mxu0 0
        %2384 = vmatpush1.bf16.msra.mxu0 %v2005
        %2385 = vmatprep.subr.bf16.mxu0 0
        %2386 = vmatpush2.bf16.msra.mxu0 0
        %2387 = vmatprep.subr.bf16.mxu0 0
        %2388 = vmatpush2.bf16.msra.mxu0 0
        %2389 = vmatprep.subr.bf16.mxu0 0
        %2390 = vmatpush2.bf16.msra.mxu0 0
        %2391 = vmatprep.subr.bf16.mxu0 0
        %2392 = vmatpush2.bf16.msra.mxu0 0
        %2393 = vmatprep.subr.bf16.mxu0 0
        %2394 = vmatpush2.bf16.msra.mxu0 0
        %2395 = vmatprep.subr.bf16.mxu0 0
        %2396 = vmatpush2.bf16.msra.mxu0 0
        %2397 = vmatprep.subr.bf16.mxu0 0
        %2398 = vmatpush2.bf16.msra.mxu0 0
        %2399 = vmatprep.subr.bf16.mxu0 0
        %2400 = vmatpush2.bf16.msra.mxu0 0
        %2401 = vmatprep.mubr.bf16.mxu0 0
        %2402 = vmatmul.mubr.bf16.gmra.mxu0 %v2361
        %v2403 = vpop.f32.mrf.mxu0
        %v2404 = vadd.f32 0.0, %v2403
        %v2405 = vpop.f32.mrf.mxu0
        %v2406 = vpop.f32.mrf.mxu0
        %v2407 = vadd.f32 0.0, %v2406
        %v2408 = vpop.f32.mrf.mxu0
        %2409 = vmatprep.mubr.bf16.mxu0 0
        %2410 = vmatmul.mubr.bf16.gmra.mxu0 %v2362
        %v2411 = vpop.f32.mrf.mxu0
        %v2412 = vadd.f32 0.0, %v2411
        %v2413 = vpop.f32.mrf.mxu0
        %v2414 = vpop.f32.mrf.mxu0
        %v2415 = vadd.f32 0.0, %v2414
        %v2416 = vpop.f32.mrf.mxu0
        %2417 = vmatprep.mubr.bf16.mxu0 0
        %2418 = vmatmul.mubr.bf16.gmra.mxu0 %v2363
        %v2419 = vpop.f32.mrf.mxu0
        %v2420 = vadd.f32 0.0, %v2419
        %v2421 = vpop.f32.mrf.mxu0
        %v2422 = vpop.f32.mrf.mxu0
        %v2423 = vadd.f32 0.0, %v2422
        %v2424 = vpop.f32.mrf.mxu0
        %2425 = vmatprep.mubr.bf16.mxu0 0
        %2426 = vmatmul.mubr.bf16.gmra.mxu0 %v2364
        %v2427 = vpop.f32.mrf.mxu0
        %v2428 = vadd.f32 0.0, %v2427
        %v2429 = vpop.f32.mrf.mxu0
        %v2430 = vpop.f32.mrf.mxu0
        %v2431 = vadd.f32 0.0, %v2430
        %v2432 = vpop.f32.mrf.mxu0
        %2433 = vmatprep.mubr.bf16.mxu0 0
        %2434 = vmatmul.mubr.bf16.gmra.mxu0 %v2365
        %v2435 = vpop.f32.mrf.mxu0
        %v2436 = vadd.f32 0.0, %v2435
        %v2437 = vpop.f32.mrf.mxu0
        %v2438 = vpop.f32.mrf.mxu0
        %v2439 = vadd.f32 0.0, %v2438
        %v2440 = vpop.f32.mrf.mxu0
        %2441 = vmatprep.mubr.bf16.mxu0 0
        %2442 = vmatmul.mubr.bf16.gmra.mxu0 %v2366
        %v2443 = vpop.f32.mrf.mxu0
        %v2444 = vadd.f32 0.0, %v2443
        %v2445 = vpop.f32.mrf.mxu0
        %v2446 = vpop.f32.mrf.mxu0
        %v2447 = vadd.f32 0.0, %v2446
        %v2448 = vpop.f32.mrf.mxu0
        %2449 = vmatprep.mubr.bf16.mxu0 0
        %2450 = vmatmul.mubr.bf16.gmra.mxu0 %v2367
        %v2451 = vpop.f32.mrf.mxu0
        %v2452 = vadd.f32 0.0, %v2451
        %v2453 = vpop.f32.mrf.mxu0
        %v2454 = vpop.f32.mrf.mxu0
        %v2455 = vadd.f32 0.0, %v2454
        %v2456 = vpop.f32.mrf.mxu0
        %2457 = vmatprep.mubr.bf16.mxu0 0
        %2458 = vmatmul.mubr.bf16.gmra.mxu0 %v2368
        %v2459 = vpop.f32.mrf.mxu0
        %v2460 = vadd.f32 0.0, %v2459
        %v2461 = vpop.f32.mrf.mxu0
        %v2462 = vpop.f32.mrf.mxu0
        %v2463 = vadd.f32 0.0, %v2462
        %v2464 = vpop.f32.mrf.mxu0
        %2465 = vdwg.mxu0
        %v2466 = vadd.f32 %v2297, %v2404
        %v2467 = vadd.f32 %v2298, %v2407
        %v2468 = vadd.f32 %v2299, %v2412
        %v2469 = vadd.f32 %v2300, %v2415
        %v2470 = vadd.f32 %v2301, %v2420
        %v2471 = vadd.f32 %v2302, %v2423
        %v2472 = vadd.f32 %v2303, %v2428
        %v2473 = vadd.f32 %v2304, %v2431
        %v2474 = vadd.f32 %v2305, %v2436
        %v2475 = vadd.f32 %v2306, %v2439
        %v2476 = vadd.f32 %v2307, %v2444
        %v2477 = vadd.f32 %v2308, %v2447
        %v2478 = vadd.f32 %v2309, %v2452
        %v2479 = vadd.f32 %v2310, %v2455
        %v2480 = vadd.f32 %v2311, %v2460
        %v2481 = vadd.f32 %v2312, %v2463
        %v2482 = vrcp.pop %v2345
        %v2483 = vrcp.pop %v2346
        %v2484 = vrcp.pop %v2347
        %v2485 = vrcp.pop %v2348
        %v2486 = vrcp.pop %v2349
        %v2487 = vrcp.pop %v2350
        %v2488 = vrcp.pop %v2351
        %v2489 = vrcp.pop %v2352
        %v2490 = vrcp.pop %v2353
        %v2491 = vrcp.pop %v2354
        %v2492 = vrcp.pop %v2355
        %v2493 = vrcp.pop %v2356
        %v2494 = vrcp.pop %v2357
        %v2495 = vrcp.pop %v2358
        %v2496 = vrcp.pop %v2359
        %v2497 = vrcp.pop %v2360
        %v2498 = vmul.f32 %v2466, %v2482
        %v2499 = vmul.f32 %v2467, %v2483
        %v2500 = vmul.f32 %v2468, %v2484
        %v2501 = vmul.f32 %v2469, %v2485
        %v2502 = vmul.f32 %v2470, %v2486
        %v2503 = vmul.f32 %v2471, %v2487
        %v2504 = vmul.f32 %v2472, %v2488
        %v2505 = vmul.f32 %v2473, %v2489
        %v2506 = vmul.f32 %v2474, %v2490
        %v2507 = vmul.f32 %v2475, %v2491
        %v2508 = vmul.f32 %v2476, %v2492
        %v2509 = vmul.f32 %v2477, %v2493
        %v2510 = vmul.f32 %v2478, %v2494
        %v2511 = vmul.f32 %v2479, %v2495
        %v2512 = vmul.f32 %v2480, %v2496
        %v2513 = vmul.f32 %v2481, %v2497
        %v2514 = vpack.c.bf16 %v2499, %v2498
        %v2515 = vpack.c.bf16 %v2501, %v2500
        %v2516 = vpack.c.bf16 %v2503, %v2502
        %v2517 = vpack.c.bf16 %v2505, %v2504
        %v2518 = vpack.c.bf16 %v2507, %v2506
        %v2519 = vpack.c.bf16 %v2509, %v2508
        %v2520 = vpack.c.bf16 %v2511, %v2510
        %v2521 = vpack.c.bf16 %v2513, %v2512
        %v2530 = vunpack.c.l.b16 %v2514
        %v2531 = vunpack.c.h.b16 %v2514
        %v2532 = vunpack.c.l.b16 %v2515
        %v2533 = vunpack.c.h.b16 %v2515
        %v2534 = vunpack.c.l.b16 %v2516
        %v2535 = vunpack.c.h.b16 %v2516
        %v2536 = vunpack.c.l.b16 %v2517
        %v2537 = vunpack.c.h.b16 %v2517
        %v2538 = vunpack.c.l.b16 %v2518
        %v2539 = vunpack.c.h.b16 %v2518
        %v2540 = vunpack.c.l.b16 %v2519
        %v2541 = vunpack.c.h.b16 %v2519
        %v2542 = vunpack.c.l.b16 %v2520
        %v2543 = vunpack.c.h.b16 %v2520
        %v2544 = vunpack.c.l.b16 %v2521
        %v2545 = vunpack.c.h.b16 %v2521
        %v2546 = vpack.c.b16 %v2530, %v2530
        %v2547 = vpack.c.b16 %v2531, %v2531
        %v2548 = vpack.c.b16 %v2532, %v2532
        %v2549 = vpack.c.b16 %v2533, %v2533
        %v2550 = vpack.c.b16 %v2534, %v2534
        %v2551 = vpack.c.b16 %v2535, %v2535
        %v2552 = vpack.c.b16 %v2536, %v2536
        %v2553 = vpack.c.b16 %v2537, %v2537
        %v2554 = vpack.c.b16 %v2538, %v2538
        %v2555 = vpack.c.b16 %v2539, %v2539
        %v2556 = vpack.c.b16 %v2540, %v2540
        %v2557 = vpack.c.b16 %v2541, %v2541
        %v2558 = vpack.c.b16 %v2542, %v2542
        %v2559 = vpack.c.b16 %v2543, %v2543
        %v2560 = vpack.c.b16 %v2544, %v2544
        %v2561 = vpack.c.b16 %v2545, %v2545
        %2578 = vst [vmem:[#allocation2] sm:$0xf] %v2546
        %2579 = vst [vmem:[#allocation2 + $0x8] sm:$0xf] %v2547
        %2580 = vst [vmem:[#allocation2 + $0x10] sm:$0xf] %v2548
        %2581 = vst [vmem:[#allocation2 + $0x18] sm:$0xf] %v2549
        %2582 = vst [vmem:[#allocation2 + $0x20] sm:$0xf] %v2550
        %2583 = vst [vmem:[#allocation2 + $0x28] sm:$0xf] %v2551
        %2584 = vst [vmem:[#allocation2 + $0x30] sm:$0xf] %v2552
        %2585 = vst [vmem:[#allocation2 + $0x38] sm:$0xf] %v2553
        %2586 = vst [vmem:[#allocation2 + $0x40] sm:$0xf] %v2554
        %2587 = vst [vmem:[#allocation2 + $0x48] sm:$0xf] %v2555
        %2588 = vst [vmem:[#allocation2 + $0x50] sm:$0xf] %v2556
        %2589 = vst [vmem:[#allocation2 + $0x58] sm:$0xf] %v2557
        %2590 = vst [vmem:[#allocation2 + $0x60] sm:$0xf] %v2558
        %2591 = vst [vmem:[#allocation2 + $0x68] sm:$0xf] %v2559
        %2592 = vst [vmem:[#allocation2 + $0x70] sm:$0xf] %v2560
        %2593 = vst [vmem:[#allocation2 + $0x78] sm:$0xf] %v2561
        %2594 = vmatprep.subr.bf16.mxu0 0
        %2595 = vmatpush1.bf16.xpose.msra.mxu0 %v2004
        %2596 = vmatprep.subr.bf16.mxu0 0
        %2597 = vmatpush1.bf16.xpose.msra.mxu0 %v2002
        %2598 = vmatprep.subr.bf16.mxu0 0
        %2599 = vmatpush1.bf16.xpose.msra.mxu0 %v2000
        %2600 = vmatprep.subr.bf16.mxu0 0
        %2601 = vmatpush1.bf16.xpose.msra.mxu0 %v1998
        %2602 = vmatprep.subr.bf16.mxu0 0
        %2603 = vmatpush1.bf16.xpose.msra.mxu0 %v1996
        %2604 = vmatprep.subr.bf16.mxu0 0
        %2605 = vmatpush1.bf16.xpose.msra.mxu0 %v1994
        %2606 = vmatprep.subr.bf16.mxu0 0
        %2607 = vmatpush1.bf16.xpose.msra.mxu0 %v1992
        %2608 = vmatprep.subr.bf16.mxu0 0
        %2609 = vmatpush1.bf16.xpose.msra.mxu0 %v1990
        %2610 = vmatprep.subr.bf16.mxu0 0
        %2611 = vmatpush2.bf16.xpose.msra.mxu0 0
        %2612 = vmatprep.subr.bf16.mxu0 0
        %2613 = vmatpush2.bf16.xpose.msra.mxu0 0
        %2614 = vmatprep.subr.bf16.mxu0 0
        %2615 = vmatpush2.bf16.xpose.msra.mxu0 0
        %2616 = vmatprep.subr.bf16.mxu0 0
        %2617 = vmatpush2.bf16.xpose.msra.mxu0 0
        %2618 = vmatprep.subr.bf16.mxu0 0
        %2619 = vmatpush2.bf16.xpose.msra.mxu0 0
        %2620 = vmatprep.subr.bf16.mxu0 0
        %2621 = vmatpush2.bf16.xpose.msra.mxu0 0
        %2622 = vmatprep.subr.bf16.mxu0 0
        %2623 = vmatpush2.bf16.xpose.msra.mxu0 0
        %2624 = vmatprep.subr.bf16.mxu0 0
        %2625 = vmatpush2.bf16.xpose.msra.mxu0 0
        %2626 = vmatprep.mubr.bf16.mxu0 0
        %2627 = vmatmul.mubr.bf16.gmra.mxu0 %v1974
        %v2628 = vpop.f32.mrf.mxu0
        %v2629 = vadd.f32 0.0, %v2628
        %v2630 = vpop.f32.mrf.mxu0
        %v2631 = vpop.f32.mrf.mxu0
        %v2632 = vadd.f32 0.0, %v2631
        %v2633 = vpop.f32.mrf.mxu0
        %2634 = vmatprep.mubr.bf16.mxu0 0
        %2635 = vmatmul.mubr.bf16.gmra.mxu0 %v1976
        %v2636 = vpop.f32.mrf.mxu0
        %v2637 = vadd.f32 0.0, %v2636
        %v2638 = vpop.f32.mrf.mxu0
        %v2639 = vpop.f32.mrf.mxu0
        %v2640 = vadd.f32 0.0, %v2639
        %v2641 = vpop.f32.mrf.mxu0
        %2642 = vmatprep.mubr.bf16.mxu0 0
        %2643 = vmatmul.mubr.bf16.gmra.mxu0 %v1978
        %v2644 = vpop.f32.mrf.mxu0
        %v2645 = vadd.f32 0.0, %v2644
        %v2646 = vpop.f32.mrf.mxu0
        %v2647 = vpop.f32.mrf.mxu0
        %v2648 = vadd.f32 0.0, %v2647
        %v2649 = vpop.f32.mrf.mxu0
        %2650 = vmatprep.mubr.bf16.mxu0 0
        %2651 = vmatmul.mubr.bf16.gmra.mxu0 %v1980
        %v2652 = vpop.f32.mrf.mxu0
        %v2653 = vadd.f32 0.0, %v2652
        %v2654 = vpop.f32.mrf.mxu0
        %v2655 = vpop.f32.mrf.mxu0
        %v2656 = vadd.f32 0.0, %v2655
        %v2657 = vpop.f32.mrf.mxu0
        %2658 = vmatprep.mubr.bf16.mxu0 0
        %2659 = vmatmul.mubr.bf16.gmra.mxu0 %v1982
        %v2660 = vpop.f32.mrf.mxu0
        %v2661 = vadd.f32 0.0, %v2660
        %v2662 = vpop.f32.mrf.mxu0
        %v2663 = vpop.f32.mrf.mxu0
        %v2664 = vadd.f32 0.0, %v2663
        %v2665 = vpop.f32.mrf.mxu0
        %2666 = vmatprep.mubr.bf16.mxu0 0
        %2667 = vmatmul.mubr.bf16.gmra.mxu0 %v1984
        %v2668 = vpop.f32.mrf.mxu0
        %v2669 = vadd.f32 0.0, %v2668
        %v2670 = vpop.f32.mrf.mxu0
        %v2671 = vpop.f32.mrf.mxu0
        %v2672 = vadd.f32 0.0, %v2671
        %v2673 = vpop.f32.mrf.mxu0
        %2674 = vmatprep.mubr.bf16.mxu0 0
        %2675 = vmatmul.mubr.bf16.gmra.mxu0 %v1986
        %v2676 = vpop.f32.mrf.mxu0
        %v2677 = vadd.f32 0.0, %v2676
        %v2678 = vpop.f32.mrf.mxu0
        %v2679 = vpop.f32.mrf.mxu0
        %v2680 = vadd.f32 0.0, %v2679
        %v2681 = vpop.f32.mrf.mxu0
        %2682 = vmatprep.mubr.bf16.mxu0 0
        %2683 = vmatmul.mubr.bf16.gmra.mxu0 %v1988
        %v2684 = vpop.f32.mrf.mxu0
        %v2685 = vadd.f32 0.0, %v2684
        %v2686 = vpop.f32.mrf.mxu0
        %v2687 = vpop.f32.mrf.mxu0
        %v2688 = vadd.f32 0.0, %v2687
        %v2689 = vpop.f32.mrf.mxu0
        %2690 = vdwg.mxu0
        %v2691 = vsel %vm2040, %v2629, -1e+30
        %v2692 = vsel %vm2041, %v2632, -1e+30
        %v2693 = vsel %vm2042, %v2637, -1e+30
        %v2694 = vsel %vm2043, %v2640, -1e+30
        %v2695 = vsel %vm2044, %v2645, -1e+30
        %v2696 = vsel %vm2045, %v2648, -1e+30
        %v2697 = vsel %vm2046, %v2653, -1e+30
        %v2698 = vsel %vm2047, %v2656, -1e+30
        %v2699 = vsel %vm2048, %v2661, -1e+30
        %v2700 = vsel %vm2049, %v2664, -1e+30
        %v2701 = vsel %vm2050, %v2669, -1e+30
        %v2702 = vsel %vm2051, %v2672, -1e+30
        %v2703 = vsel %vm2052, %v2677, -1e+30
        %v2704 = vsel %vm2053, %v2680, -1e+30
        %v2705 = vsel %vm2054, %v2685, -1e+30
        %v2706 = vsel %vm2055, %v2688, -1e+30
        %2707 = vmax.xlane.f32.xlu0 %v2691
        %v2708 = vpop.xlane.xlu0 %2707
        %2709 = vmax.xlane.f32.xlu0 %v2692
        %v2710 = vpop.xlane.xlu0 %2709
        %2711 = vmax.xlane.f32.xlu0 %v2693
        %v2712 = vpop.xlane.xlu0 %2711
        %2713 = vmax.xlane.f32.xlu0 %v2694
        %v2714 = vpop.xlane.xlu0 %2713
        %2715 = vmax.xlane.f32.xlu0 %v2695
        %v2716 = vpop.xlane.xlu0 %2715
        %2717 = vmax.xlane.f32.xlu0 %v2696
        %v2718 = vpop.xlane.xlu0 %2717
        %2719 = vmax.xlane.f32.xlu0 %v2697
        %v2720 = vpop.xlane.xlu0 %2719
        %2721 = vmax.xlane.f32.xlu0 %v2698
        %v2722 = vpop.xlane.xlu0 %2721
        %2723 = vmax.xlane.f32.xlu0 %v2699
        %v2724 = vpop.xlane.xlu0 %2723
        %2725 = vmax.xlane.f32.xlu0 %v2700
        %v2726 = vpop.xlane.xlu0 %2725
        %2727 = vmax.xlane.f32.xlu0 %v2701
        %v2728 = vpop.xlane.xlu0 %2727
        %2729 = vmax.xlane.f32.xlu0 %v2702
        %v2730 = vpop.xlane.xlu0 %2729
        %2731 = vmax.xlane.f32.xlu0 %v2703
        %v2732 = vpop.xlane.xlu0 %2731
        %2733 = vmax.xlane.f32.xlu0 %v2704
        %v2734 = vpop.xlane.xlu0 %2733
        %2735 = vmax.xlane.f32.xlu0 %v2705
        %v2736 = vpop.xlane.xlu0 %2735
        %2737 = vmax.xlane.f32.xlu0 %v2706
        %v2738 = vpop.xlane.xlu0 %2737
        %v2739 = vsub.f32 -inf, %v2708
        %v2740 = vsub.f32 -inf, %v2710
        %v2741 = vsub.f32 -inf, %v2712
        %v2742 = vsub.f32 -inf, %v2714
        %v2743 = vsub.f32 -inf, %v2716
        %v2744 = vsub.f32 -inf, %v2718
        %v2745 = vsub.f32 -inf, %v2720
        %v2746 = vsub.f32 -inf, %v2722
        %v2747 = vsub.f32 -inf, %v2724
        %v2748 = vsub.f32 -inf, %v2726
        %v2749 = vsub.f32 -inf, %v2728
        %v2750 = vsub.f32 -inf, %v2730
        %v2751 = vsub.f32 -inf, %v2732
        %v2752 = vsub.f32 -inf, %v2734
        %v2753 = vsub.f32 -inf, %v2736
        %v2754 = vsub.f32 -inf, %v2738
        %v2755 = vmul.f32 %v2739, 1.442695
        %v2756 = vpow.pop %v2755
        %v2757 = vmul.f32 %v2740, 1.442695
        %v2758 = vpow.pop %v2757
        %v2759 = vmul.f32 %v2741, 1.442695
        %v2760 = vpow.pop %v2759
        %v2761 = vmul.f32 %v2742, 1.442695
        %v2762 = vpow.pop %v2761
        %v2763 = vmul.f32 %v2743, 1.442695
        %v2764 = vpow.pop %v2763
        %v2765 = vmul.f32 %v2744, 1.442695
        %v2766 = vpow.pop %v2765
        %v2767 = vmul.f32 %v2745, 1.442695
        %v2768 = vpow.pop %v2767
        %v2769 = vmul.f32 %v2746, 1.442695
        %v2770 = vpow.pop %v2769
        %v2771 = vmul.f32 %v2747, 1.442695
        %v2772 = vpow.pop %v2771
        %v2773 = vmul.f32 %v2748, 1.442695
        %v2774 = vpow.pop %v2773
        %v2775 = vmul.f32 %v2749, 1.442695
        %v2776 = vpow.pop %v2775
        %v2777 = vmul.f32 %v2750, 1.442695
        %v2778 = vpow.pop %v2777
        %v2779 = vmul.f32 %v2751, 1.442695
        %v2780 = vpow.pop %v2779
        %v2781 = vmul.f32 %v2752, 1.442695
        %v2782 = vpow.pop %v2781
        %v2783 = vmul.f32 %v2753, 1.442695
        %v2784 = vpow.pop %v2783
        %v2785 = vmul.f32 %v2754, 1.442695
        %v2786 = vpow.pop %v2785
        %v2787 = vsub.f32 %v2691, %v2708
        %v2788 = vsub.f32 %v2692, %v2710
        %v2789 = vsub.f32 %v2693, %v2712
        %v2790 = vsub.f32 %v2694, %v2714
        %v2791 = vsub.f32 %v2695, %v2716
        %v2792 = vsub.f32 %v2696, %v2718
        %v2793 = vsub.f32 %v2697, %v2720
        %v2794 = vsub.f32 %v2698, %v2722
        %v2795 = vsub.f32 %v2699, %v2724
        %v2796 = vsub.f32 %v2700, %v2726
        %v2797 = vsub.f32 %v2701, %v2728
        %v2798 = vsub.f32 %v2702, %v2730
        %v2799 = vsub.f32 %v2703, %v2732
        %v2800 = vsub.f32 %v2704, %v2734
        %v2801 = vsub.f32 %v2705, %v2736
        %v2802 = vsub.f32 %v2706, %v2738
        %v2803 = vmul.f32 %v2787, 1.442695
        %v2804 = vpow.pop %v2803
        %v2805 = vmul.f32 %v2788, 1.442695
        %v2806 = vpow.pop %v2805
        %v2807 = vmul.f32 %v2789, 1.442695
        %v2808 = vpow.pop %v2807
        %v2809 = vmul.f32 %v2790, 1.442695
        %v2810 = vpow.pop %v2809
        %v2811 = vmul.f32 %v2791, 1.442695
        %v2812 = vpow.pop %v2811
        %v2813 = vmul.f32 %v2792, 1.442695
        %v2814 = vpow.pop %v2813
        %v2815 = vmul.f32 %v2793, 1.442695
        %v2816 = vpow.pop %v2815
        %v2817 = vmul.f32 %v2794, 1.442695
        %v2818 = vpow.pop %v2817
        %v2819 = vmul.f32 %v2795, 1.442695
        %v2820 = vpow.pop %v2819
        %v2821 = vmul.f32 %v2796, 1.442695
        %v2822 = vpow.pop %v2821
        %v2823 = vmul.f32 %v2797, 1.442695
        %v2824 = vpow.pop %v2823
        %v2825 = vmul.f32 %v2798, 1.442695
        %v2826 = vpow.pop %v2825
        %v2827 = vmul.f32 %v2799, 1.442695
        %v2828 = vpow.pop %v2827
        %v2829 = vmul.f32 %v2800, 1.442695
        %v2830 = vpow.pop %v2829
        %v2831 = vmul.f32 %v2801, 1.442695
        %v2832 = vpow.pop %v2831
        %v2833 = vmul.f32 %v2802, 1.442695
        %v2834 = vpow.pop %v2833
        %v2835 = vmul.f32 %v2756, 0.0
        %v2836 = vmul.f32 %v2758, 0.0
        %v2837 = vmul.f32 %v2760, 0.0
        %v2838 = vmul.f32 %v2762, 0.0
        %v2839 = vmul.f32 %v2764, 0.0
        %v2840 = vmul.f32 %v2766, 0.0
        %v2841 = vmul.f32 %v2768, 0.0
        %v2842 = vmul.f32 %v2770, 0.0
        %v2843 = vmul.f32 %v2772, 0.0
        %v2844 = vmul.f32 %v2774, 0.0
        %v2845 = vmul.f32 %v2776, 0.0
        %v2846 = vmul.f32 %v2778, 0.0
        %v2847 = vmul.f32 %v2780, 0.0
        %v2848 = vmul.f32 %v2782, 0.0
        %v2849 = vmul.f32 %v2784, 0.0
        %v2850 = vmul.f32 %v2786, 0.0
        %2851 = vadd.xlane.f32.xlu0 %v2804
        %v2852 = vpop.xlane.xlu0 %2851
        %2853 = vadd.xlane.f32.xlu0 %v2806
        %v2854 = vpop.xlane.xlu0 %2853
        %2855 = vadd.xlane.f32.xlu0 %v2808
        %v2856 = vpop.xlane.xlu0 %2855
        %2857 = vadd.xlane.f32.xlu0 %v2810
        %v2858 = vpop.xlane.xlu0 %2857
        %2859 = vadd.xlane.f32.xlu0 %v2812
        %v2860 = vpop.xlane.xlu0 %2859
        %2861 = vadd.xlane.f32.xlu0 %v2814
        %v2862 = vpop.xlane.xlu0 %2861
        %2863 = vadd.xlane.f32.xlu0 %v2816
        %v2864 = vpop.xlane.xlu0 %2863
        %2865 = vadd.xlane.f32.xlu0 %v2818
        %v2866 = vpop.xlane.xlu0 %2865
        %2867 = vadd.xlane.f32.xlu0 %v2820
        %v2868 = vpop.xlane.xlu0 %2867
        %2869 = vadd.xlane.f32.xlu0 %v2822
        %v2870 = vpop.xlane.xlu0 %2869
        %2871 = vadd.xlane.f32.xlu0 %v2824
        %v2872 = vpop.xlane.xlu0 %2871
        %2873 = vadd.xlane.f32.xlu0 %v2826
        %v2874 = vpop.xlane.xlu0 %2873
        %2875 = vadd.xlane.f32.xlu0 %v2828
        %v2876 = vpop.xlane.xlu0 %2875
        %2877 = vadd.xlane.f32.xlu0 %v2830
        %v2878 = vpop.xlane.xlu0 %2877
        %2879 = vadd.xlane.f32.xlu0 %v2832
        %v2880 = vpop.xlane.xlu0 %2879
        %2881 = vadd.xlane.f32.xlu0 %v2834
        %v2882 = vpop.xlane.xlu0 %2881
        %v2883 = vadd.f32 %v2835, %v2852
        %v2884 = vadd.f32 %v2836, %v2854
        %v2885 = vadd.f32 %v2837, %v2856
        %v2886 = vadd.f32 %v2838, %v2858
        %v2887 = vadd.f32 %v2839, %v2860
        %v2888 = vadd.f32 %v2840, %v2862
        %v2889 = vadd.f32 %v2841, %v2864
        %v2890 = vadd.f32 %v2842, %v2866
        %v2891 = vadd.f32 %v2843, %v2868
        %v2892 = vadd.f32 %v2844, %v2870
        %v2893 = vadd.f32 %v2845, %v2872
        %v2894 = vadd.f32 %v2846, %v2874
        %v2895 = vadd.f32 %v2847, %v2876
        %v2896 = vadd.f32 %v2848, %v2878
        %v2897 = vadd.f32 %v2849, %v2880
        %v2898 = vadd.f32 %v2850, %v2882
        %v2899 = vpack.c.bf16 %v2806, %v2804
        %v2900 = vpack.c.bf16 %v2810, %v2808
        %v2901 = vpack.c.bf16 %v2814, %v2812
        %v2902 = vpack.c.bf16 %v2818, %v2816
        %v2903 = vpack.c.bf16 %v2822, %v2820
        %v2904 = vpack.c.bf16 %v2826, %v2824
        %v2905 = vpack.c.bf16 %v2830, %v2828
        %v2906 = vpack.c.bf16 %v2834, %v2832
        %2907 = vmatprep.subr.bf16.mxu0 0
        %2908 = vmatpush1.bf16.msra.mxu0 %v2020
        %2909 = vmatprep.subr.bf16.mxu0 0
        %2910 = vmatpush1.bf16.msra.mxu0 %v2018
        %2911 = vmatprep.subr.bf16.mxu0 0
        %2912 = vmatpush1.bf16.msra.mxu0 %v2016
        %2913 = vmatprep.subr.bf16.mxu0 0
        %2914 = vmatpush1.bf16.msra.mxu0 %v2014
        %2915 = vmatprep.subr.bf16.mxu0 0
        %2916 = vmatpush1.bf16.msra.mxu0 %v2012
        %2917 = vmatprep.subr.bf16.mxu0 0
        %2918 = vmatpush1.bf16.msra.mxu0 %v2010
        %2919 = vmatprep.subr.bf16.mxu0 0
        %2920 = vmatpush1.bf16.msra.mxu0 %v2008
        %2921 = vmatprep.subr.bf16.mxu0 0
        %2922 = vmatpush1.bf16.msra.mxu0 %v2006
        %2923 = vmatprep.subr.bf16.mxu0 0
        %2924 = vmatpush2.bf16.msra.mxu0 0
        %2925 = vmatprep.subr.bf16.mxu0 0
        %2926 = vmatpush2.bf16.msra.mxu0 0
        %2927 = vmatprep.subr.bf16.mxu0 0
        %2928 = vmatpush2.bf16.msra.mxu0 0
        %2929 = vmatprep.subr.bf16.mxu0 0
        %2930 = vmatpush2.bf16.msra.mxu0 0
        %2931 = vmatprep.subr.bf16.mxu0 0
        %2932 = vmatpush2.bf16.msra.mxu0 0
        %2933 = vmatprep.subr.bf16.mxu0 0
        %2934 = vmatpush2.bf16.msra.mxu0 0
        %2935 = vmatprep.subr.bf16.mxu0 0
        %2936 = vmatpush2.bf16.msra.mxu0 0
        %2937 = vmatprep.subr.bf16.mxu0 0
        %2938 = vmatpush2.bf16.msra.mxu0 0
        %2939 = vmatprep.mubr.bf16.mxu0 0
        %2940 = vmatmul.mubr.bf16.gmra.mxu0 %v2899
        %v2941 = vpop.f32.mrf.mxu0
        %v2942 = vadd.f32 0.0, %v2941
        %v2943 = vpop.f32.mrf.mxu0
        %v2944 = vpop.f32.mrf.mxu0
        %v2945 = vadd.f32 0.0, %v2944
        %v2946 = vpop.f32.mrf.mxu0
        %2947 = vmatprep.mubr.bf16.mxu0 0
        %2948 = vmatmul.mubr.bf16.gmra.mxu0 %v2900
        %v2949 = vpop.f32.mrf.mxu0
        %v2950 = vadd.f32 0.0, %v2949
        %v2951 = vpop.f32.mrf.mxu0
        %v2952 = vpop.f32.mrf.mxu0
        %v2953 = vadd.f32 0.0, %v2952
        %v2954 = vpop.f32.mrf.mxu0
        %2955 = vmatprep.mubr.bf16.mxu0 0
        %2956 = vmatmul.mubr.bf16.gmra.mxu0 %v2901
        %v2957 = vpop.f32.mrf.mxu0
        %v2958 = vadd.f32 0.0, %v2957
        %v2959 = vpop.f32.mrf.mxu0
        %v2960 = vpop.f32.mrf.mxu0
        %v2961 = vadd.f32 0.0, %v2960
        %v2962 = vpop.f32.mrf.mxu0
        %2963 = vmatprep.mubr.bf16.mxu0 0
        %2964 = vmatmul.mubr.bf16.gmra.mxu0 %v2902
        %v2965 = vpop.f32.mrf.mxu0
        %v2966 = vadd.f32 0.0, %v2965
        %v2967 = vpop.f32.mrf.mxu0
        %v2968 = vpop.f32.mrf.mxu0
        %v2969 = vadd.f32 0.0, %v2968
        %v2970 = vpop.f32.mrf.mxu0
        %2971 = vmatprep.mubr.bf16.mxu0 0
        %2972 = vmatmul.mubr.bf16.gmra.mxu0 %v2903
        %v2973 = vpop.f32.mrf.mxu0
        %v2974 = vadd.f32 0.0, %v2973
        %v2975 = vpop.f32.mrf.mxu0
        %v2976 = vpop.f32.mrf.mxu0
        %v2977 = vadd.f32 0.0, %v2976
        %v2978 = vpop.f32.mrf.mxu0
        %2979 = vmatprep.mubr.bf16.mxu0 0
        %2980 = vmatmul.mubr.bf16.gmra.mxu0 %v2904
        %v2981 = vpop.f32.mrf.mxu0
        %v2982 = vadd.f32 0.0, %v2981
        %v2983 = vpop.f32.mrf.mxu0
        %v2984 = vpop.f32.mrf.mxu0
        %v2985 = vadd.f32 0.0, %v2984
        %v2986 = vpop.f32.mrf.mxu0
        %2987 = vmatprep.mubr.bf16.mxu0 0
        %2988 = vmatmul.mubr.bf16.gmra.mxu0 %v2905
        %v2989 = vpop.f32.mrf.mxu0
        %v2990 = vadd.f32 0.0, %v2989
        %v2991 = vpop.f32.mrf.mxu0
        %v2992 = vpop.f32.mrf.mxu0
        %v2993 = vadd.f32 0.0, %v2992
        %v2994 = vpop.f32.mrf.mxu0
        %2995 = vmatprep.mubr.bf16.mxu0 0
        %2996 = vmatmul.mubr.bf16.gmra.mxu0 %v2906
        %v2997 = vpop.f32.mrf.mxu0
        %v2998 = vadd.f32 0.0, %v2997
        %v2999 = vpop.f32.mrf.mxu0
        %v3000 = vpop.f32.mrf.mxu0
        %v3001 = vadd.f32 0.0, %v3000
        %v3002 = vpop.f32.mrf.mxu0
        %3003 = vdwg.mxu0
        %v3004 = vadd.f32 %v2835, %v2942
        %v3005 = vadd.f32 %v2836, %v2945
        %v3006 = vadd.f32 %v2837, %v2950
        %v3007 = vadd.f32 %v2838, %v2953
        %v3008 = vadd.f32 %v2839, %v2958
        %v3009 = vadd.f32 %v2840, %v2961
        %v3010 = vadd.f32 %v2841, %v2966
        %v3011 = vadd.f32 %v2842, %v2969
        %v3012 = vadd.f32 %v2843, %v2974
        %v3013 = vadd.f32 %v2844, %v2977
        %v3014 = vadd.f32 %v2845, %v2982
        %v3015 = vadd.f32 %v2846, %v2985
        %v3016 = vadd.f32 %v2847, %v2990
        %v3017 = vadd.f32 %v2848, %v2993
        %v3018 = vadd.f32 %v2849, %v2998
        %v3019 = vadd.f32 %v2850, %v3001
        %v3020 = vrcp.pop %v2883
        %v3021 = vrcp.pop %v2884
        %v3022 = vrcp.pop %v2885
        %v3023 = vrcp.pop %v2886
        %v3024 = vrcp.pop %v2887
        %v3025 = vrcp.pop %v2888
        %v3026 = vrcp.pop %v2889
        %v3027 = vrcp.pop %v2890
        %v3028 = vrcp.pop %v2891
        %v3029 = vrcp.pop %v2892
        %v3030 = vrcp.pop %v2893
        %v3031 = vrcp.pop %v2894
        %v3032 = vrcp.pop %v2895
        %v3033 = vrcp.pop %v2896
        %v3034 = vrcp.pop %v2897
        %v3035 = vrcp.pop %v2898
        %v3036 = vmul.f32 %v3004, %v3020
        %v3037 = vmul.f32 %v3005, %v3021
        %v3038 = vmul.f32 %v3006, %v3022
        %v3039 = vmul.f32 %v3007, %v3023
        %v3040 = vmul.f32 %v3008, %v3024
        %v3041 = vmul.f32 %v3009, %v3025
        %v3042 = vmul.f32 %v3010, %v3026
        %v3043 = vmul.f32 %v3011, %v3027
        %v3044 = vmul.f32 %v3012, %v3028
        %v3045 = vmul.f32 %v3013, %v3029
        %v3046 = vmul.f32 %v3014, %v3030
        %v3047 = vmul.f32 %v3015, %v3031
        %v3048 = vmul.f32 %v3016, %v3032
        %v3049 = vmul.f32 %v3017, %v3033
        %v3050 = vmul.f32 %v3018, %v3034
        %v3051 = vmul.f32 %v3019, %v3035
        %v3052 = vpack.c.bf16 %v3037, %v3036
        %v3053 = vpack.c.bf16 %v3039, %v3038
        %v3054 = vpack.c.bf16 %v3041, %v3040
        %v3055 = vpack.c.bf16 %v3043, %v3042
        %v3056 = vpack.c.bf16 %v3045, %v3044
        %v3057 = vpack.c.bf16 %v3047, %v3046
        %v3058 = vpack.c.bf16 %v3049, %v3048
        %v3059 = vpack.c.bf16 %v3051, %v3050
        %v3068 = vunpack.c.l.b16 %v3052
        %v3069 = vunpack.c.h.b16 %v3052
        %v3070 = vunpack.c.l.b16 %v3053
        %v3071 = vunpack.c.h.b16 %v3053
        %v3072 = vunpack.c.l.b16 %v3054
        %v3073 = vunpack.c.h.b16 %v3054
        %v3074 = vunpack.c.l.b16 %v3055
        %v3075 = vunpack.c.h.b16 %v3055
        %v3076 = vunpack.c.l.b16 %v3056
        %v3077 = vunpack.c.h.b16 %v3056
        %v3078 = vunpack.c.l.b16 %v3057
        %v3079 = vunpack.c.h.b16 %v3057
        %v3080 = vunpack.c.l.b16 %v3058
        %v3081 = vunpack.c.h.b16 %v3058
        %v3082 = vunpack.c.l.b16 %v3059
        %v3083 = vunpack.c.h.b16 %v3059
        %v3084 = vpack.c.b16 %v3068, %v3068
        %v3085 = vpack.c.b16 %v3069, %v3069
        %v3086 = vpack.c.b16 %v3070, %v3070
        %v3087 = vpack.c.b16 %v3071, %v3071
        %v3088 = vpack.c.b16 %v3072, %v3072
        %v3089 = vpack.c.b16 %v3073, %v3073
        %v3090 = vpack.c.b16 %v3074, %v3074
        %v3091 = vpack.c.b16 %v3075, %v3075
        %v3092 = vpack.c.b16 %v3076, %v3076
        %v3093 = vpack.c.b16 %v3077, %v3077
        %v3094 = vpack.c.b16 %v3078, %v3078
        %v3095 = vpack.c.b16 %v3079, %v3079
        %v3096 = vpack.c.b16 %v3080, %v3080
        %v3097 = vpack.c.b16 %v3081, %v3081
        %v3098 = vpack.c.b16 %v3082, %v3082
        %v3099 = vpack.c.b16 %v3083, %v3083
        %3116 = vst [vmem:[#allocation2 + $0x4] sm:$0xf] %v3084
        %3117 = vst [vmem:[#allocation2 + $0xc] sm:$0xf] %v3085
        %3118 = vst [vmem:[#allocation2 + $0x14] sm:$0xf] %v3086
        %3119 = vst [vmem:[#allocation2 + $0x1c] sm:$0xf] %v3087
        %3120 = vst [vmem:[#allocation2 + $0x24] sm:$0xf] %v3088
        %3121 = vst [vmem:[#allocation2 + $0x2c] sm:$0xf] %v3089
        %3122 = vst [vmem:[#allocation2 + $0x34] sm:$0xf] %v3090
        %3123 = vst [vmem:[#allocation2 + $0x3c] sm:$0xf] %v3091
        %3124 = vst [vmem:[#allocation2 + $0x44] sm:$0xf] %v3092
        %3125 = vst [vmem:[#allocation2 + $0x4c] sm:$0xf] %v3093
        %3126 = vst [vmem:[#allocation2 + $0x54] sm:$0xf] %v3094
        %3127 = vst [vmem:[#allocation2 + $0x5c] sm:$0xf] %v3095
        %3128 = vst [vmem:[#allocation2 + $0x64] sm:$0xf] %v3096
        %3129 = vst [vmem:[#allocation2 + $0x6c] sm:$0xf] %v3097
        %3130 = vst [vmem:[#allocation2 + $0x74] sm:$0xf] %v3098
        %3131 = vst [vmem:[#allocation2 + $0x7c] sm:$0xf] %v3099
        %v3132 = vld [vmem:[#allocation2] sm:$0xff]
        %v3133 = vld [vmem:[#allocation2 + $0x8] sm:$0xff]
        %v3134 = vld [vmem:[#allocation2 + $0x10] sm:$0xff]
        %v3135 = vld [vmem:[#allocation2 + $0x18] sm:$0xff]
        %v3136 = vld [vmem:[#allocation2 + $0x20] sm:$0xff]
        %v3137 = vld [vmem:[#allocation2 + $0x28] sm:$0xff]
        %v3138 = vld [vmem:[#allocation2 + $0x30] sm:$0xff]
        %v3139 = vld [vmem:[#allocation2 + $0x38] sm:$0xff]
        %v3140 = vld [vmem:[#allocation2 + $0x40] sm:$0xff]
        %v3141 = vld [vmem:[#allocation2 + $0x48] sm:$0xff]
        %v3142 = vld [vmem:[#allocation2 + $0x50] sm:$0xff]
        %v3143 = vld [vmem:[#allocation2 + $0x58] sm:$0xff]
        %v3144 = vld [vmem:[#allocation2 + $0x60] sm:$0xff]
        %v3145 = vld [vmem:[#allocation2 + $0x68] sm:$0xff]
        %v3146 = vld [vmem:[#allocation2 + $0x70] sm:$0xff]
        %v3147 = vld [vmem:[#allocation2 + $0x78] sm:$0xff]
        %v3148 = vld [vmem:[#allocation9] sm:$0xff]
        %v3149 = vld [vmem:[#allocation9 + $0x8] sm:$0xff]
        %v3150 = vld [vmem:[#allocation9 + $0x10] sm:$0xff]
        %v3151 = vld [vmem:[#allocation9 + $0x18] sm:$0xff]
        %v3152 = vld [vmem:[#allocation9 + $0x20] sm:$0xff]
        %v3153 = vld [vmem:[#allocation9 + $0x28] sm:$0xff]
        %v3154 = vld [vmem:[#allocation9 + $0x30] sm:$0xff]
        %v3155 = vld [vmem:[#allocation9 + $0x38] sm:$0xff]
        %v3156 = vld [vmem:[#allocation9 + $0x40] sm:$0xff]
        %v3157 = vld [vmem:[#allocation9 + $0x48] sm:$0xff]
        %v3158 = vld [vmem:[#allocation9 + $0x50] sm:$0xff]
        %v3159 = vld [vmem:[#allocation9 + $0x58] sm:$0xff]
        %v3160 = vld [vmem:[#allocation9 + $0x60] sm:$0xff]
        %v3161 = vld [vmem:[#allocation9 + $0x68] sm:$0xff]
        %v3162 = vld [vmem:[#allocation9 + $0x70] sm:$0xff]
        %v3163 = vld [vmem:[#allocation9 + $0x78] sm:$0xff]
        %v3164 = vld [vmem:[#allocation9 + $0x80] sm:$0xff]
        %v3165 = vld [vmem:[#allocation9 + $0x88] sm:$0xff]
        %v3166 = vld [vmem:[#allocation9 + $0x90] sm:$0xff]
        %v3167 = vld [vmem:[#allocation9 + $0x98] sm:$0xff]
        %v3168 = vld [vmem:[#allocation9 + $0xa0] sm:$0xff]
        %v3169 = vld [vmem:[#allocation9 + $0xa8] sm:$0xff]
        %v3170 = vld [vmem:[#allocation9 + $0xb0] sm:$0xff]
        %v3171 = vld [vmem:[#allocation9 + $0xb8] sm:$0xff]
        %v3172 = vld [vmem:[#allocation9 + $0xc0] sm:$0xff]
        %v3173 = vld [vmem:[#allocation9 + $0xc8] sm:$0xff]
        %v3174 = vld [vmem:[#allocation9 + $0xd0] sm:$0xff]
        %v3175 = vld [vmem:[#allocation9 + $0xd8] sm:$0xff]
        %v3176 = vld [vmem:[#allocation9 + $0xe0] sm:$0xff]
        %v3177 = vld [vmem:[#allocation9 + $0xe8] sm:$0xff]
        %v3178 = vld [vmem:[#allocation9 + $0xf0] sm:$0xff]
        %v3179 = vld [vmem:[#allocation9 + $0xf8] sm:$0xff]
        %v3196 = vunpack.c.l.b16 %v3132
        %v3197 = vunpack.c.h.b16 %v3132
        %v3198 = vunpack.c.l.b16 %v3133
        %v3199 = vunpack.c.h.b16 %v3133
        %v3200 = vunpack.c.l.b16 %v3134
        %v3201 = vunpack.c.h.b16 %v3134
        %v3202 = vunpack.c.l.b16 %v3135
        %v3203 = vunpack.c.h.b16 %v3135
        %v3204 = vunpack.c.l.b16 %v3136
        %v3205 = vunpack.c.h.b16 %v3136
        %v3206 = vunpack.c.l.b16 %v3137
        %v3207 = vunpack.c.h.b16 %v3137
        %v3208 = vunpack.c.l.b16 %v3138
        %v3209 = vunpack.c.h.b16 %v3138
        %v3210 = vunpack.c.l.b16 %v3139
        %v3211 = vunpack.c.h.b16 %v3139
        %v3212 = vunpack.c.l.b16 %v3140
        %v3213 = vunpack.c.h.b16 %v3140
        %v3214 = vunpack.c.l.b16 %v3141
        %v3215 = vunpack.c.h.b16 %v3141
        %v3216 = vunpack.c.l.b16 %v3142
        %v3217 = vunpack.c.h.b16 %v3142
        %v3218 = vunpack.c.l.b16 %v3143
        %v3219 = vunpack.c.h.b16 %v3143
        %v3220 = vunpack.c.l.b16 %v3144
        %v3221 = vunpack.c.h.b16 %v3144
        %v3222 = vunpack.c.l.b16 %v3145
        %v3223 = vunpack.c.h.b16 %v3145
        %v3224 = vunpack.c.l.b16 %v3146
        %v3225 = vunpack.c.h.b16 %v3146
        %v3226 = vunpack.c.l.b16 %v3147
        %v3227 = vunpack.c.h.b16 %v3147
        %v3228 = vpack.c.b16 %v3198, %v3196
        %v3229 = vpack.c.b16 %v3199, %v3197
        %v3230 = vpack.c.b16 %v3202, %v3200
        %v3231 = vpack.c.b16 %v3203, %v3201
        %v3232 = vpack.c.b16 %v3206, %v3204
        %v3233 = vpack.c.b16 %v3207, %v3205
        %v3234 = vpack.c.b16 %v3210, %v3208
        %v3235 = vpack.c.b16 %v3211, %v3209
        %v3236 = vpack.c.b16 %v3214, %v3212
        %v3237 = vpack.c.b16 %v3215, %v3213
        %v3238 = vpack.c.b16 %v3218, %v3216
        %v3239 = vpack.c.b16 %v3219, %v3217
        %v3240 = vpack.c.b16 %v3222, %v3220
        %v3241 = vpack.c.b16 %v3223, %v3221
        %v3242 = vpack.c.b16 %v3226, %v3224
        %v3243 = vpack.c.b16 %v3227, %v3225
        %v3292 = vunpack.c.l.b16 %v3148
        %v3293 = vunpack.c.h.b16 %v3148
        %v3294 = vunpack.c.l.b16 %v3149
        %v3295 = vunpack.c.h.b16 %v3149
        %v3296 = vunpack.c.l.b16 %v3150
        %v3297 = vunpack.c.h.b16 %v3150
        %v3298 = vunpack.c.l.b16 %v3151
        %v3299 = vunpack.c.h.b16 %v3151
        %v3300 = vunpack.c.l.b16 %v3152
        %v3301 = vunpack.c.h.b16 %v3152
        %v3302 = vunpack.c.l.b16 %v3153
        %v3303 = vunpack.c.h.b16 %v3153
        %v3304 = vunpack.c.l.b16 %v3154
        %v3305 = vunpack.c.h.b16 %v3154
        %v3306 = vunpack.c.l.b16 %v3155
        %v3307 = vunpack.c.h.b16 %v3155
        %v3308 = vunpack.c.l.b16 %v3156
        %v3309 = vunpack.c.h.b16 %v3156
        %v3310 = vunpack.c.l.b16 %v3157
        %v3311 = vunpack.c.h.b16 %v3157
        %v3312 = vunpack.c.l.b16 %v3158
        %v3313 = vunpack.c.h.b16 %v3158
        %v3314 = vunpack.c.l.b16 %v3159
        %v3315 = vunpack.c.h.b16 %v3159
        %v3316 = vunpack.c.l.b16 %v3160
        %v3317 = vunpack.c.h.b16 %v3160
        %v3318 = vunpack.c.l.b16 %v3161
        %v3319 = vunpack.c.h.b16 %v3161
        %v3320 = vunpack.c.l.b16 %v3162
        %v3321 = vunpack.c.h.b16 %v3162
        %v3322 = vunpack.c.l.b16 %v3163
        %v3323 = vunpack.c.h.b16 %v3163
        %v3324 = vunpack.c.l.b16 %v3164
        %v3325 = vunpack.c.h.b16 %v3164
        %v3326 = vunpack.c.l.b16 %v3165
        %v3327 = vunpack.c.h.b16 %v3165
        %v3328 = vunpack.c.l.b16 %v3166
        %v3329 = vunpack.c.h.b16 %v3166
        %v3330 = vunpack.c.l.b16 %v3167
        %v3331 = vunpack.c.h.b16 %v3167
        %v3332 = vunpack.c.l.b16 %v3168
        %v3333 = vunpack.c.h.b16 %v3168
        %v3334 = vunpack.c.l.b16 %v3169
        %v3335 = vunpack.c.h.b16 %v3169
        %v3336 = vunpack.c.l.b16 %v3170
        %v3337 = vunpack.c.h.b16 %v3170
        %v3338 = vunpack.c.l.b16 %v3171
        %v3339 = vunpack.c.h.b16 %v3171
        %v3340 = vunpack.c.l.b16 %v3172
        %v3341 = vunpack.c.h.b16 %v3172
        %v3342 = vunpack.c.l.b16 %v3173
        %v3343 = vunpack.c.h.b16 %v3173
        %v3344 = vunpack.c.l.b16 %v3174
        %v3345 = vunpack.c.h.b16 %v3174
        %v3346 = vunpack.c.l.b16 %v3175
        %v3347 = vunpack.c.h.b16 %v3175
        %v3348 = vunpack.c.l.b16 %v3176
        %v3349 = vunpack.c.h.b16 %v3176
        %v3350 = vunpack.c.l.b16 %v3177
        %v3351 = vunpack.c.h.b16 %v3177
        %v3352 = vunpack.c.l.b16 %v3178
        %v3353 = vunpack.c.h.b16 %v3178
        %v3354 = vunpack.c.l.b16 %v3179
        %v3355 = vunpack.c.h.b16 %v3179
        %v3356 = vpack.c.b16 %v3294, %v3292
        %v3357 = vpack.c.b16 %v3295, %v3293
        %v3358 = vpack.c.b16 %v3298, %v3296
        %v3359 = vpack.c.b16 %v3299, %v3297
        %v3360 = vpack.c.b16 %v3302, %v3300
        %v3361 = vpack.c.b16 %v3303, %v3301
        %v3362 = vpack.c.b16 %v3306, %v3304
        %v3363 = vpack.c.b16 %v3307, %v3305
        %v3364 = vpack.c.b16 %v3310, %v3308
        %v3365 = vpack.c.b16 %v3311, %v3309
        %v3366 = vpack.c.b16 %v3314, %v3312
        %v3367 = vpack.c.b16 %v3315, %v3313
        %v3368 = vpack.c.b16 %v3318, %v3316
        %v3369 = vpack.c.b16 %v3319, %v3317
        %v3370 = vpack.c.b16 %v3322, %v3320
        %v3371 = vpack.c.b16 %v3323, %v3321
        %v3372 = vpack.c.b16 %v3326, %v3324
        %v3373 = vpack.c.b16 %v3327, %v3325
        %v3374 = vpack.c.b16 %v3330, %v3328
        %v3375 = vpack.c.b16 %v3331, %v3329
        %v3376 = vpack.c.b16 %v3334, %v3332
        %v3377 = vpack.c.b16 %v3335, %v3333
        %v3378 = vpack.c.b16 %v3338, %v3336
        %v3379 = vpack.c.b16 %v3339, %v3337
        %v3380 = vpack.c.b16 %v3342, %v3340
        %v3381 = vpack.c.b16 %v3343, %v3341
        %v3382 = vpack.c.b16 %v3346, %v3344
        %v3383 = vpack.c.b16 %v3347, %v3345
        %v3384 = vpack.c.b16 %v3350, %v3348
        %v3385 = vpack.c.b16 %v3351, %v3349
        %v3386 = vpack.c.b16 %v3354, %v3352
        %v3387 = vpack.c.b16 %v3355, %v3353
        %3420 = vmatprep.subr.bf16.mxu0 %v3371
        %3421 = vmatpush1.bf16.msra.mxu0 %v3370
        %3422 = vmatprep.subr.bf16.mxu0 %v3369
        %3423 = vmatpush1.bf16.msra.mxu0 %v3368
        %3424 = vmatprep.subr.bf16.mxu0 %v3367
        %3425 = vmatpush1.bf16.msra.mxu0 %v3366
        %3426 = vmatprep.subr.bf16.mxu0 %v3365
        %3427 = vmatpush1.bf16.msra.mxu0 %v3364
        %3428 = vmatprep.subr.bf16.mxu0 %v3363
        %3429 = vmatpush1.bf16.msra.mxu0 %v3362
        %3430 = vmatprep.subr.bf16.mxu0 %v3361
        %3431 = vmatpush1.bf16.msra.mxu0 %v3360
        %3432 = vmatprep.subr.bf16.mxu0 %v3359
        %3433 = vmatpush1.bf16.msra.mxu0 %v3358
        %3434 = vmatprep.subr.bf16.mxu0 %v3357
        %3435 = vmatpush1.bf16.msra.mxu0 %v3356
        %3436 = vmatprep.subr.bf16.mxu0 %v3387
        %3437 = vmatpush2.bf16.msra.mxu0 %v3386
        %3438 = vmatprep.subr.bf16.mxu0 %v3385
        %3439 = vmatpush2.bf16.msra.mxu0 %v3384
        %3440 = vmatprep.subr.bf16.mxu0 %v3383
        %3441 = vmatpush2.bf16.msra.mxu0 %v3382
        %3442 = vmatprep.subr.bf16.mxu0 %v3381
        %3443 = vmatpush2.bf16.msra.mxu0 %v3380
        %3444 = vmatprep.subr.bf16.mxu0 %v3379
        %3445 = vmatpush2.bf16.msra.mxu0 %v3378
        %3446 = vmatprep.subr.bf16.mxu0 %v3377
        %3447 = vmatpush2.bf16.msra.mxu0 %v3376
        %3448 = vmatprep.subr.bf16.mxu0 %v3375
        %3449 = vmatpush2.bf16.msra.mxu0 %v3374
        %3450 = vmatprep.subr.bf16.mxu0 %v3373
        %3451 = vmatpush2.bf16.msra.mxu0 %v3372
        %3452 = vmatprep.mubr.bf16.mxu0 %v3229
        %3453 = vmatmul.mubr.bf16.gmra.mxu0 %v3228
        %v3454 = vpop.f32.mrf.mxu0
        %v3455 = vadd.f32 0.0, %v3454
        %v3456 = vpop.f32.mrf.mxu0
        %v3457 = vadd.f32 0.0, %v3456
        %v3458 = vpop.f32.mrf.mxu0
        %v3459 = vadd.f32 0.0, %v3458
        %v3460 = vpop.f32.mrf.mxu0
        %v3461 = vadd.f32 0.0, %v3460
        %3462 = vmatprep.mubr.bf16.mxu0 %v3231
        %3463 = vmatmul.mubr.bf16.gmra.mxu0 %v3230
        %v3464 = vpop.f32.mrf.mxu0
        %v3465 = vadd.f32 0.0, %v3464
        %v3466 = vpop.f32.mrf.mxu0
        %v3467 = vadd.f32 0.0, %v3466
        %v3468 = vpop.f32.mrf.mxu0
        %v3469 = vadd.f32 0.0, %v3468
        %v3470 = vpop.f32.mrf.mxu0
        %v3471 = vadd.f32 0.0, %v3470
        %3472 = vmatprep.mubr.bf16.mxu0 %v3233
        %3473 = vmatmul.mubr.bf16.gmra.mxu0 %v3232
        %v3474 = vpop.f32.mrf.mxu0
        %v3475 = vadd.f32 0.0, %v3474
        %v3476 = vpop.f32.mrf.mxu0
        %v3477 = vadd.f32 0.0, %v3476
        %v3478 = vpop.f32.mrf.mxu0
        %v3479 = vadd.f32 0.0, %v3478
        %v3480 = vpop.f32.mrf.mxu0
        %v3481 = vadd.f32 0.0, %v3480
        %3482 = vmatprep.mubr.bf16.mxu0 %v3235
        %3483 = vmatmul.mubr.bf16.gmra.mxu0 %v3234
        %v3484 = vpop.f32.mrf.mxu0
        %v3485 = vadd.f32 0.0, %v3484
        %v3486 = vpop.f32.mrf.mxu0
        %v3487 = vadd.f32 0.0, %v3486
        %v3488 = vpop.f32.mrf.mxu0
        %v3489 = vadd.f32 0.0, %v3488
        %v3490 = vpop.f32.mrf.mxu0
        %v3491 = vadd.f32 0.0, %v3490
        %3492 = vmatprep.mubr.bf16.mxu0 %v3237
        %3493 = vmatmul.mubr.bf16.gmra.mxu0 %v3236
        %v3494 = vpop.f32.mrf.mxu0
        %v3495 = vadd.f32 0.0, %v3494
        %v3496 = vpop.f32.mrf.mxu0
        %v3497 = vadd.f32 0.0, %v3496
        %v3498 = vpop.f32.mrf.mxu0
        %v3499 = vadd.f32 0.0, %v3498
        %v3500 = vpop.f32.mrf.mxu0
        %v3501 = vadd.f32 0.0, %v3500
        %3502 = vmatprep.mubr.bf16.mxu0 %v3239
        %3503 = vmatmul.mubr.bf16.gmra.mxu0 %v3238
        %v3504 = vpop.f32.mrf.mxu0
        %v3505 = vadd.f32 0.0, %v3504
        %v3506 = vpop.f32.mrf.mxu0
        %v3507 = vadd.f32 0.0, %v3506
        %v3508 = vpop.f32.mrf.mxu0
        %v3509 = vadd.f32 0.0, %v3508
        %v3510 = vpop.f32.mrf.mxu0
        %v3511 = vadd.f32 0.0, %v3510
        %3512 = vmatprep.mubr.bf16.mxu0 %v3241
        %3513 = vmatmul.mubr.bf16.gmra.mxu0 %v3240
        %v3514 = vpop.f32.mrf.mxu0
        %v3515 = vadd.f32 0.0, %v3514
        %v3516 = vpop.f32.mrf.mxu0
        %v3517 = vadd.f32 0.0, %v3516
        %v3518 = vpop.f32.mrf.mxu0
        %v3519 = vadd.f32 0.0, %v3518
        %v3520 = vpop.f32.mrf.mxu0
        %v3521 = vadd.f32 0.0, %v3520
        %3522 = vmatprep.mubr.bf16.mxu0 %v3243
        %3523 = vmatmul.mubr.bf16.gmra.mxu0 %v3242
        %v3524 = vpop.f32.mrf.mxu0
        %v3525 = vadd.f32 0.0, %v3524
        %v3526 = vpop.f32.mrf.mxu0
        %v3527 = vadd.f32 0.0, %v3526
        %v3528 = vpop.f32.mrf.mxu0
        %v3529 = vadd.f32 0.0, %v3528
        %v3530 = vpop.f32.mrf.mxu0
        %v3531 = vadd.f32 0.0, %v3530
        %3532 = vdwg.mxu0
        %v3533 = vadd.f32 %v452, %v3455
        %v3534 = vadd.f32 %v453, %v3457
        %v3535 = vadd.f32 %v454, %v3459
        %v3536 = vadd.f32 %v455, %v3461
        %v3537 = vadd.f32 %v456, %v3465
        %v3538 = vadd.f32 %v457, %v3467
        %v3539 = vadd.f32 %v458, %v3469
        %v3540 = vadd.f32 %v459, %v3471
        %v3541 = vadd.f32 %v460, %v3475
        %v3542 = vadd.f32 %v461, %v3477
        %v3543 = vadd.f32 %v462, %v3479
        %v3544 = vadd.f32 %v463, %v3481
        %v3545 = vadd.f32 %v464, %v3485
        %v3546 = vadd.f32 %v465, %v3487
        %v3547 = vadd.f32 %v466, %v3489
        %v3548 = vadd.f32 %v467, %v3491
        %v3549 = vadd.f32 %v468, %v3495
        %v3550 = vadd.f32 %v469, %v3497
        %v3551 = vadd.f32 %v470, %v3499
        %v3552 = vadd.f32 %v471, %v3501
        %v3553 = vadd.f32 %v472, %v3505
        %v3554 = vadd.f32 %v473, %v3507
        %v3555 = vadd.f32 %v474, %v3509
        %v3556 = vadd.f32 %v475, %v3511
        %v3557 = vadd.f32 %v476, %v3515
        %v3558 = vadd.f32 %v477, %v3517
        %v3559 = vadd.f32 %v478, %v3519
        %v3560 = vadd.f32 %v479, %v3521
        %v3561 = vadd.f32 %v480, %v3525
        %v3562 = vadd.f32 %v481, %v3527
        %v3563 = vadd.f32 %v482, %v3529
        %v3564 = vadd.f32 %v483, %v3531
        %v3565 = vmul.f32 %v3533, %v3533
        %v3566 = vmul.f32 %v3534, %v3534
        %v3567 = vmul.f32 %v3535, %v3535
        %v3568 = vmul.f32 %v3536, %v3536
        %v3569 = vmul.f32 %v3537, %v3537
        %v3570 = vmul.f32 %v3538, %v3538
        %v3571 = vmul.f32 %v3539, %v3539
        %v3572 = vmul.f32 %v3540, %v3540
        %v3573 = vmul.f32 %v3541, %v3541
        %v3574 = vmul.f32 %v3542, %v3542
        %v3575 = vmul.f32 %v3543, %v3543
        %v3576 = vmul.f32 %v3544, %v3544
        %v3577 = vmul.f32 %v3545, %v3545
        %v3578 = vmul.f32 %v3546, %v3546
        %v3579 = vmul.f32 %v3547, %v3547
        %v3580 = vmul.f32 %v3548, %v3548
        %v3581 = vmul.f32 %v3549, %v3549
        %v3582 = vmul.f32 %v3550, %v3550
        %v3583 = vmul.f32 %v3551, %v3551
        %v3584 = vmul.f32 %v3552, %v3552
        %v3585 = vmul.f32 %v3553, %v3553
        %v3586 = vmul.f32 %v3554, %v3554
        %v3587 = vmul.f32 %v3555, %v3555
        %v3588 = vmul.f32 %v3556, %v3556
        %v3589 = vmul.f32 %v3557, %v3557
        %v3590 = vmul.f32 %v3558, %v3558
        %v3591 = vmul.f32 %v3559, %v3559
        %v3592 = vmul.f32 %v3560, %v3560
        %v3593 = vmul.f32 %v3561, %v3561
        %v3594 = vmul.f32 %v3562, %v3562
        %v3595 = vmul.f32 %v3563, %v3563
        %v3596 = vmul.f32 %v3564, %v3564
        %v3597 = vadd.f32 %v3565, %v3566
        %3598 = vadd.xlane.f32.xlu0 %v3597
        %v3599 = vpop.xlane.xlu0 %3598
        %v3600 = vadd.f32 %v3567, %v3568
        %3601 = vadd.xlane.f32.xlu0 %v3600
        %v3602 = vpop.xlane.xlu0 %3601
        %v3603 = vadd.f32 %v3569, %v3570
        %3604 = vadd.xlane.f32.xlu0 %v3603
        %v3605 = vpop.xlane.xlu0 %3604
        %v3606 = vadd.f32 %v3571, %v3572
        %3607 = vadd.xlane.f32.xlu0 %v3606
        %v3608 = vpop.xlane.xlu0 %3607
        %v3609 = vadd.f32 %v3573, %v3574
        %3610 = vadd.xlane.f32.xlu0 %v3609
        %v3611 = vpop.xlane.xlu0 %3610
        %v3612 = vadd.f32 %v3575, %v3576
        %3613 = vadd.xlane.f32.xlu0 %v3612
        %v3614 = vpop.xlane.xlu0 %3613
        %v3615 = vadd.f32 %v3577, %v3578
        %3616 = vadd.xlane.f32.xlu0 %v3615
        %v3617 = vpop.xlane.xlu0 %3616
        %v3618 = vadd.f32 %v3579, %v3580
        %3619 = vadd.xlane.f32.xlu0 %v3618
        %v3620 = vpop.xlane.xlu0 %3619
        %v3621 = vadd.f32 %v3581, %v3582
        %3622 = vadd.xlane.f32.xlu0 %v3621
        %v3623 = vpop.xlane.xlu0 %3622
        %v3624 = vadd.f32 %v3583, %v3584
        %3625 = vadd.xlane.f32.xlu0 %v3624
        %v3626 = vpop.xlane.xlu0 %3625
        %v3627 = vadd.f32 %v3585, %v3586
        %3628 = vadd.xlane.f32.xlu0 %v3627
        %v3629 = vpop.xlane.xlu0 %3628
        %v3630 = vadd.f32 %v3587, %v3588
        %3631 = vadd.xlane.f32.xlu0 %v3630
        %v3632 = vpop.xlane.xlu0 %3631
        %v3633 = vadd.f32 %v3589, %v3590
        %3634 = vadd.xlane.f32.xlu0 %v3633
        %v3635 = vpop.xlane.xlu0 %3634
        %v3636 = vadd.f32 %v3591, %v3592
        %3637 = vadd.xlane.f32.xlu0 %v3636
        %v3638 = vpop.xlane.xlu0 %3637
        %v3639 = vadd.f32 %v3593, %v3594
        %3640 = vadd.xlane.f32.xlu0 %v3639
        %v3641 = vpop.xlane.xlu0 %3640
        %v3642 = vadd.f32 %v3595, %v3596
        %3643 = vadd.xlane.f32.xlu0 %v3642
        %v3644 = vpop.xlane.xlu0 %3643
        %v3645 = vmul.f32 %v3599, %v598
        %v3646 = vmul.f32 %v3602, %v598
        %v3647 = vmul.f32 %v3605, %v598
        %v3648 = vmul.f32 %v3608, %v598
        %v3649 = vmul.f32 %v3611, %v598
        %v3650 = vmul.f32 %v3614, %v598
        %v3651 = vmul.f32 %v3617, %v598
        %v3652 = vmul.f32 %v3620, %v598
        %v3653 = vmul.f32 %v3623, %v598
        %v3654 = vmul.f32 %v3626, %v598
        %v3655 = vmul.f32 %v3629, %v598
        %v3656 = vmul.f32 %v3632, %v598
        %v3657 = vmul.f32 %v3635, %v598
        %v3658 = vmul.f32 %v3638, %v598
        %v3659 = vmul.f32 %v3641, %v598
        %v3660 = vmul.f32 %v3644, %v598
        %v3661 = vadd.f32 %v3645, 1e-05
        %v3662 = vadd.f32 %v3646, 1e-05
        %v3663 = vadd.f32 %v3647, 1e-05
        %v3664 = vadd.f32 %v3648, 1e-05
        %v3665 = vadd.f32 %v3649, 1e-05
        %v3666 = vadd.f32 %v3650, 1e-05
        %v3667 = vadd.f32 %v3651, 1e-05
        %v3668 = vadd.f32 %v3652, 1e-05
        %v3669 = vadd.f32 %v3653, 1e-05
        %v3670 = vadd.f32 %v3654, 1e-05
        %v3671 = vadd.f32 %v3655, 1e-05
        %v3672 = vadd.f32 %v3656, 1e-05
        %v3673 = vadd.f32 %v3657, 1e-05
        %v3674 = vadd.f32 %v3658, 1e-05
        %v3675 = vadd.f32 %v3659, 1e-05
        %v3676 = vadd.f32 %v3660, 1e-05
        %v3677 = vrsqrt.pop %v3661
        %v3678 = vrsqrt.pop %v3662
        %v3679 = vrsqrt.pop %v3663
        %v3680 = vrsqrt.pop %v3664
        %v3681 = vrsqrt.pop %v3665
        %v3682 = vrsqrt.pop %v3666
        %v3683 = vrsqrt.pop %v3667
        %v3684 = vrsqrt.pop %v3668
        %v3685 = vrsqrt.pop %v3669
        %v3686 = vrsqrt.pop %v3670
        %v3687 = vrsqrt.pop %v3671
        %v3688 = vrsqrt.pop %v3672
        %v3689 = vrsqrt.pop %v3673
        %v3690 = vrsqrt.pop %v3674
        %v3691 = vrsqrt.pop %v3675
        %v3692 = vrsqrt.pop %v3676
        %v3693 = vmul.f32 %v3533, %v3677
        %v3694 = vmul.f32 %v3534, %v3677
        %v3695 = vmul.f32 %v3535, %v3678
        %v3696 = vmul.f32 %v3536, %v3678
        %v3697 = vmul.f32 %v3537, %v3679
        %v3698 = vmul.f32 %v3538, %v3679
        %v3699 = vmul.f32 %v3539, %v3680
        %v3700 = vmul.f32 %v3540, %v3680
        %v3701 = vmul.f32 %v3541, %v3681
        %v3702 = vmul.f32 %v3542, %v3681
        %v3703 = vmul.f32 %v3543, %v3682
        %v3704 = vmul.f32 %v3544, %v3682
        %v3705 = vmul.f32 %v3545, %v3683
        %v3706 = vmul.f32 %v3546, %v3683
        %v3707 = vmul.f32 %v3547, %v3684
        %v3708 = vmul.f32 %v3548, %v3684
        %v3709 = vmul.f32 %v3549, %v3685
        %v3710 = vmul.f32 %v3550, %v3685
        %v3711 = vmul.f32 %v3551, %v3686
        %v3712 = vmul.f32 %v3552, %v3686
        %v3713 = vmul.f32 %v3553, %v3687
        %v3714 = vmul.f32 %v3554, %v3687
        %v3715 = vmul.f32 %v3555, %v3688
        %v3716 = vmul.f32 %v3556, %v3688
        %v3717 = vmul.f32 %v3557, %v3689
        %v3718 = vmul.f32 %v3558, %v3689
        %v3719 = vmul.f32 %v3559, %v3690
        %v3720 = vmul.f32 %v3560, %v3690
        %v3721 = vmul.f32 %v3561, %v3691
        %v3722 = vmul.f32 %v3562, %v3691
        %v3723 = vmul.f32 %v3563, %v3692
        %v3724 = vmul.f32 %v3564, %v3692
        %v3726 = vlaneseq
        %v3727 = vshrl.u32 %v3726, 7
        %v3728 = vsub.s32 0, %v3727
        %v3729 = vrot.slane %v485, %v3728
        %v3730 = vlaneseq
        %v3731 = vshrl.u32 %v3730, 7
        %v3732 = vsub.s32 1, %v3731
        %v3733 = vrot.slane %v485, %v3732
        %v3736 = vmul.f32 %v3693, %v3729
        %v3737 = vmul.f32 %v3694, %v3733
        %v3738 = vmul.f32 %v3695, %v3729
        %v3739 = vmul.f32 %v3696, %v3733
        %v3740 = vmul.f32 %v3697, %v3729
        %v3741 = vmul.f32 %v3698, %v3733
        %v3742 = vmul.f32 %v3699, %v3729
        %v3743 = vmul.f32 %v3700, %v3733
        %v3744 = vmul.f32 %v3701, %v3729
        %v3745 = vmul.f32 %v3702, %v3733
        %v3746 = vmul.f32 %v3703, %v3729
        %v3747 = vmul.f32 %v3704, %v3733
        %v3748 = vmul.f32 %v3705, %v3729
        %v3749 = vmul.f32 %v3706, %v3733
        %v3750 = vmul.f32 %v3707, %v3729
        %v3751 = vmul.f32 %v3708, %v3733
        %v3752 = vmul.f32 %v3709, %v3729
        %v3753 = vmul.f32 %v3710, %v3733
        %v3754 = vmul.f32 %v3711, %v3729
        %v3755 = vmul.f32 %v3712, %v3733
        %v3756 = vmul.f32 %v3713, %v3729
        %v3757 = vmul.f32 %v3714, %v3733
        %v3758 = vmul.f32 %v3715, %v3729
        %v3759 = vmul.f32 %v3716, %v3733
        %v3760 = vmul.f32 %v3717, %v3729
        %v3761 = vmul.f32 %v3718, %v3733
        %v3762 = vmul.f32 %v3719, %v3729
        %v3763 = vmul.f32 %v3720, %v3733
        %v3764 = vmul.f32 %v3721, %v3729
        %v3765 = vmul.f32 %v3722, %v3733
        %v3766 = vmul.f32 %v3723, %v3729
        %v3767 = vmul.f32 %v3724, %v3733
        %v3768 = vpack.c.bf16 %v3738, %v3736
        %v3769 = vpack.c.bf16 %v3739, %v3737
        %v3770 = vpack.c.bf16 %v3742, %v3740
        %v3771 = vpack.c.bf16 %v3743, %v3741
        %v3772 = vpack.c.bf16 %v3746, %v3744
        %v3773 = vpack.c.bf16 %v3747, %v3745
        %v3774 = vpack.c.bf16 %v3750, %v3748
        %v3775 = vpack.c.bf16 %v3751, %v3749
        %v3776 = vpack.c.bf16 %v3754, %v3752
        %v3777 = vpack.c.bf16 %v3755, %v3753
        %v3778 = vpack.c.bf16 %v3758, %v3756
        %v3779 = vpack.c.bf16 %v3759, %v3757
        %v3780 = vpack.c.bf16 %v3762, %v3760
        %v3781 = vpack.c.bf16 %v3763, %v3761
        %v3782 = vpack.c.bf16 %v3766, %v3764
        %v3783 = vpack.c.bf16 %v3767, %v3765
        %v3784 = vld [vmem:[#allocation11] sm:$0xff]
        %v3785 = vld [vmem:[#allocation11 + $0x8] sm:$0xff]
        %v3786 = vld [vmem:[#allocation11 + $0x10] sm:$0xff]
        %v3787 = vld [vmem:[#allocation11 + $0x18] sm:$0xff]
        %v3788 = vld [vmem:[#allocation11 + $0x20] sm:$0xff]
        %v3789 = vld [vmem:[#allocation11 + $0x28] sm:$0xff]
        %v3790 = vld [vmem:[#allocation11 + $0x30] sm:$0xff]
        %v3791 = vld [vmem:[#allocation11 + $0x38] sm:$0xff]
        %v3792 = vld [vmem:[#allocation11 + $0x40] sm:$0xff]
        %v3793 = vld [vmem:[#allocation11 + $0x48] sm:$0xff]
        %v3794 = vld [vmem:[#allocation11 + $0x50] sm:$0xff]
        %v3795 = vld [vmem:[#allocation11 + $0x58] sm:$0xff]
        %v3796 = vld [vmem:[#allocation11 + $0x60] sm:$0xff]
        %v3797 = vld [vmem:[#allocation11 + $0x68] sm:$0xff]
        %v3798 = vld [vmem:[#allocation11 + $0x70] sm:$0xff]
        %v3799 = vld [vmem:[#allocation11 + $0x78] sm:$0xff]
        %v3800 = vld [vmem:[#allocation11 + $0x80] sm:$0xff]
        %v3801 = vld [vmem:[#allocation11 + $0x88] sm:$0xff]
        %v3802 = vld [vmem:[#allocation11 + $0x90] sm:$0xff]
        %v3803 = vld [vmem:[#allocation11 + $0x98] sm:$0xff]
        %v3804 = vld [vmem:[#allocation11 + $0xa0] sm:$0xff]
        %v3805 = vld [vmem:[#allocation11 + $0xa8] sm:$0xff]
        %v3806 = vld [vmem:[#allocation11 + $0xb0] sm:$0xff]
        %v3807 = vld [vmem:[#allocation11 + $0xb8] sm:$0xff]
        %v3808 = vld [vmem:[#allocation11 + $0xc0] sm:$0xff]
        %v3809 = vld [vmem:[#allocation11 + $0xc8] sm:$0xff]
        %v3810 = vld [vmem:[#allocation11 + $0xd0] sm:$0xff]
        %v3811 = vld [vmem:[#allocation11 + $0xd8] sm:$0xff]
        %v3812 = vld [vmem:[#allocation11 + $0xe0] sm:$0xff]
        %v3813 = vld [vmem:[#allocation11 + $0xe8] sm:$0xff]
        %v3814 = vld [vmem:[#allocation11 + $0xf0] sm:$0xff]
        %v3815 = vld [vmem:[#allocation11 + $0xf8] sm:$0xff]
        %v3816 = vld [vmem:[#allocation11 + $0x100] sm:$0xff]
        %v3817 = vld [vmem:[#allocation11 + $0x108] sm:$0xff]
        %v3818 = vld [vmem:[#allocation11 + $0x110] sm:$0xff]
        %v3819 = vld [vmem:[#allocation11 + $0x118] sm:$0xff]
        %v3820 = vld [vmem:[#allocation11 + $0x120] sm:$0xff]
        %v3821 = vld [vmem:[#allocation11 + $0x128] sm:$0xff]
        %v3822 = vld [vmem:[#allocation11 + $0x130] sm:$0xff]
        %v3823 = vld [vmem:[#allocation11 + $0x138] sm:$0xff]
        %v3824 = vld [vmem:[#allocation11 + $0x140] sm:$0xff]
        %v3825 = vld [vmem:[#allocation11 + $0x148] sm:$0xff]
        %v3826 = vld [vmem:[#allocation11 + $0x150] sm:$0xff]
        %v3827 = vld [vmem:[#allocation11 + $0x158] sm:$0xff]
        %v3828 = vld [vmem:[#allocation11 + $0x160] sm:$0xff]
        %v3829 = vld [vmem:[#allocation11 + $0x168] sm:$0xff]
        %v3830 = vld [vmem:[#allocation11 + $0x170] sm:$0xff]
        %v3831 = vld [vmem:[#allocation11 + $0x178] sm:$0xff]
        %v3832 = vld [vmem:[#allocation11 + $0x180] sm:$0xff]
        %v3833 = vld [vmem:[#allocation11 + $0x188] sm:$0xff]
        %v3834 = vld [vmem:[#allocation11 + $0x190] sm:$0xff]
        %v3835 = vld [vmem:[#allocation11 + $0x198] sm:$0xff]
        %v3836 = vld [vmem:[#allocation11 + $0x1a0] sm:$0xff]
        %v3837 = vld [vmem:[#allocation11 + $0x1a8] sm:$0xff]
        %v3838 = vld [vmem:[#allocation11 + $0x1b0] sm:$0xff]
        %v3839 = vld [vmem:[#allocation11 + $0x1b8] sm:$0xff]
        %v3840 = vld [vmem:[#allocation11 + $0x1c0] sm:$0xff]
        %v3841 = vld [vmem:[#allocation11 + $0x1c8] sm:$0xff]
        %v3842 = vld [vmem:[#allocation11 + $0x1d0] sm:$0xff]
        %v3843 = vld [vmem:[#allocation11 + $0x1d8] sm:$0xff]
        %v3844 = vld [vmem:[#allocation11 + $0x1e0] sm:$0xff]
        %v3845 = vld [vmem:[#allocation11 + $0x1e8] sm:$0xff]
        %v3846 = vld [vmem:[#allocation11 + $0x1f0] sm:$0xff]
        %v3847 = vld [vmem:[#allocation11 + $0x1f8] sm:$0xff]
        %v3848 = vld [vmem:[#allocation11 + $0x200] sm:$0xff]
        %v3849 = vld [vmem:[#allocation11 + $0x208] sm:$0xff]
        %v3850 = vld [vmem:[#allocation11 + $0x210] sm:$0xff]
        %v3851 = vld [vmem:[#allocation11 + $0x218] sm:$0xff]
        %v3852 = vld [vmem:[#allocation11 + $0x220] sm:$0xff]
        %v3853 = vld [vmem:[#allocation11 + $0x228] sm:$0xff]
        %v3854 = vld [vmem:[#allocation11 + $0x230] sm:$0xff]
        %v3855 = vld [vmem:[#allocation11 + $0x238] sm:$0xff]
        %v3856 = vld [vmem:[#allocation11 + $0x240] sm:$0xff]
        %v3857 = vld [vmem:[#allocation11 + $0x248] sm:$0xff]
        %v3858 = vld [vmem:[#allocation11 + $0x250] sm:$0xff]
        %v3859 = vld [vmem:[#allocation11 + $0x258] sm:$0xff]
        %v3860 = vld [vmem:[#allocation11 + $0x260] sm:$0xff]
        %v3861 = vld [vmem:[#allocation11 + $0x268] sm:$0xff]
        %v3862 = vld [vmem:[#allocation11 + $0x270] sm:$0xff]
        %v3863 = vld [vmem:[#allocation11 + $0x278] sm:$0xff]
        %v3864 = vld [vmem:[#allocation11 + $0x280] sm:$0xff]
        %v3865 = vld [vmem:[#allocation11 + $0x288] sm:$0xff]
        %v3866 = vld [vmem:[#allocation11 + $0x290] sm:$0xff]
        %v3867 = vld [vmem:[#allocation11 + $0x298] sm:$0xff]
        %v3868 = vld [vmem:[#allocation11 + $0x2a0] sm:$0xff]
        %v3869 = vld [vmem:[#allocation11 + $0x2a8] sm:$0xff]
        %v3870 = vld [vmem:[#allocation11 + $0x2b0] sm:$0xff]
        %v3871 = vld [vmem:[#allocation11 + $0x2b8] sm:$0xff]
        %v3872 = vld [vmem:[#allocation11 + $0x2c0] sm:$0xff]
        %v3873 = vld [vmem:[#allocation11 + $0x2c8] sm:$0xff]
        %v3874 = vld [vmem:[#allocation11 + $0x2d0] sm:$0xff]
        %v3875 = vld [vmem:[#allocation11 + $0x2d8] sm:$0xff]
        %v3876 = vld [vmem:[#allocation11 + $0x2e0] sm:$0xff]
        %v3877 = vld [vmem:[#allocation11 + $0x2e8] sm:$0xff]
        %v3878 = vld [vmem:[#allocation11 + $0x2f0] sm:$0xff]
        %v3879 = vld [vmem:[#allocation11 + $0x2f8] sm:$0xff]
        %v3880 = vld [vmem:[#allocation11 + $0x300] sm:$0xff]
        %v3881 = vld [vmem:[#allocation11 + $0x308] sm:$0xff]
        %v3882 = vld [vmem:[#allocation11 + $0x310] sm:$0xff]
        %v3883 = vld [vmem:[#allocation11 + $0x318] sm:$0xff]
        %v3884 = vld [vmem:[#allocation11 + $0x320] sm:$0xff]
        %v3885 = vld [vmem:[#allocation11 + $0x328] sm:$0xff]
        %v3886 = vld [vmem:[#allocation11 + $0x330] sm:$0xff]
        %v3887 = vld [vmem:[#allocation11 + $0x338] sm:$0xff]
        %v3888 = vld [vmem:[#allocation11 + $0x340] sm:$0xff]
        %v3889 = vld [vmem:[#allocation11 + $0x348] sm:$0xff]
        %v3890 = vld [vmem:[#allocation11 + $0x350] sm:$0xff]
        %v3891 = vld [vmem:[#allocation11 + $0x358] sm:$0xff]
        %v3892 = vld [vmem:[#allocation11 + $0x360] sm:$0xff]
        %v3893 = vld [vmem:[#allocation11 + $0x368] sm:$0xff]
        %v3894 = vld [vmem:[#allocation11 + $0x370] sm:$0xff]
        %v3895 = vld [vmem:[#allocation11 + $0x378] sm:$0xff]
        %v3896 = vld [vmem:[#allocation11 + $0x380] sm:$0xff]
        %v3897 = vld [vmem:[#allocation11 + $0x388] sm:$0xff]
        %v3898 = vld [vmem:[#allocation11 + $0x390] sm:$0xff]
        %v3899 = vld [vmem:[#allocation11 + $0x398] sm:$0xff]
        %v3900 = vld [vmem:[#allocation11 + $0x3a0] sm:$0xff]
        %v3901 = vld [vmem:[#allocation11 + $0x3a8] sm:$0xff]
        %v3902 = vld [vmem:[#allocation11 + $0x3b0] sm:$0xff]
        %v3903 = vld [vmem:[#allocation11 + $0x3b8] sm:$0xff]
        %v3904 = vld [vmem:[#allocation11 + $0x3c0] sm:$0xff]
        %v3905 = vld [vmem:[#allocation11 + $0x3c8] sm:$0xff]
        %v3906 = vld [vmem:[#allocation11 + $0x3d0] sm:$0xff]
        %v3907 = vld [vmem:[#allocation11 + $0x3d8] sm:$0xff]
        %v3908 = vld [vmem:[#allocation11 + $0x3e0] sm:$0xff]
        %v3909 = vld [vmem:[#allocation11 + $0x3e8] sm:$0xff]
        %v3910 = vld [vmem:[#allocation11 + $0x3f0] sm:$0xff]
        %v3911 = vld [vmem:[#allocation11 + $0x3f8] sm:$0xff]
        %v4040 = vunpack.c.l.b16 %v3784
        %v4041 = vunpack.c.h.b16 %v3784
        %v4042 = vunpack.c.l.b16 %v3785
        %v4043 = vunpack.c.h.b16 %v3785
        %v4044 = vunpack.c.l.b16 %v3786
        %v4045 = vunpack.c.h.b16 %v3786
        %v4046 = vunpack.c.l.b16 %v3787
        %v4047 = vunpack.c.h.b16 %v3787
        %v4048 = vunpack.c.l.b16 %v3788
        %v4049 = vunpack.c.h.b16 %v3788
        %v4050 = vunpack.c.l.b16 %v3789
        %v4051 = vunpack.c.h.b16 %v3789
        %v4052 = vunpack.c.l.b16 %v3790
        %v4053 = vunpack.c.h.b16 %v3790
        %v4054 = vunpack.c.l.b16 %v3791
        %v4055 = vunpack.c.h.b16 %v3791
        %v4056 = vunpack.c.l.b16 %v3792
        %v4057 = vunpack.c.h.b16 %v3792
        %v4058 = vunpack.c.l.b16 %v3793
        %v4059 = vunpack.c.h.b16 %v3793
        %v4060 = vunpack.c.l.b16 %v3794
        %v4061 = vunpack.c.h.b16 %v3794
        %v4062 = vunpack.c.l.b16 %v3795
        %v4063 = vunpack.c.h.b16 %v3795
        %v4064 = vunpack.c.l.b16 %v3796
        %v4065 = vunpack.c.h.b16 %v3796
        %v4066 = vunpack.c.l.b16 %v3797
        %v4067 = vunpack.c.h.b16 %v3797
        %v4068 = vunpack.c.l.b16 %v3798
        %v4069 = vunpack.c.h.b16 %v3798
        %v4070 = vunpack.c.l.b16 %v3799
        %v4071 = vunpack.c.h.b16 %v3799
        %v4072 = vunpack.c.l.b16 %v3800
        %v4073 = vunpack.c.h.b16 %v3800
        %v4074 = vunpack.c.l.b16 %v3801
        %v4075 = vunpack.c.h.b16 %v3801
        %v4076 = vunpack.c.l.b16 %v3802
        %v4077 = vunpack.c.h.b16 %v3802
        %v4078 = vunpack.c.l.b16 %v3803
        %v4079 = vunpack.c.h.b16 %v3803
        %v4080 = vunpack.c.l.b16 %v3804
        %v4081 = vunpack.c.h.b16 %v3804
        %v4082 = vunpack.c.l.b16 %v3805
        %v4083 = vunpack.c.h.b16 %v3805
        %v4084 = vunpack.c.l.b16 %v3806
        %v4085 = vunpack.c.h.b16 %v3806
        %v4086 = vunpack.c.l.b16 %v3807
        %v4087 = vunpack.c.h.b16 %v3807
        %v4088 = vunpack.c.l.b16 %v3808
        %v4089 = vunpack.c.h.b16 %v3808
        %v4090 = vunpack.c.l.b16 %v3809
        %v4091 = vunpack.c.h.b16 %v3809
        %v4092 = vunpack.c.l.b16 %v3810
        %v4093 = vunpack.c.h.b16 %v3810
        %v4094 = vunpack.c.l.b16 %v3811
        %v4095 = vunpack.c.h.b16 %v3811
        %v4096 = vunpack.c.l.b16 %v3812
        %v4097 = vunpack.c.h.b16 %v3812
        %v4098 = vunpack.c.l.b16 %v3813
        %v4099 = vunpack.c.h.b16 %v3813
        %v4100 = vunpack.c.l.b16 %v3814
        %v4101 = vunpack.c.h.b16 %v3814
        %v4102 = vunpack.c.l.b16 %v3815
        %v4103 = vunpack.c.h.b16 %v3815
        %v4104 = vunpack.c.l.b16 %v3816
        %v4105 = vunpack.c.h.b16 %v3816
        %v4106 = vunpack.c.l.b16 %v3817
        %v4107 = vunpack.c.h.b16 %v3817
        %v4108 = vunpack.c.l.b16 %v3818
        %v4109 = vunpack.c.h.b16 %v3818
        %v4110 = vunpack.c.l.b16 %v3819
        %v4111 = vunpack.c.h.b16 %v3819
        %v4112 = vunpack.c.l.b16 %v3820
        %v4113 = vunpack.c.h.b16 %v3820
        %v4114 = vunpack.c.l.b16 %v3821
        %v4115 = vunpack.c.h.b16 %v3821
        %v4116 = vunpack.c.l.b16 %v3822
        %v4117 = vunpack.c.h.b16 %v3822
        %v4118 = vunpack.c.l.b16 %v3823
        %v4119 = vunpack.c.h.b16 %v3823
        %v4120 = vunpack.c.l.b16 %v3824
        %v4121 = vunpack.c.h.b16 %v3824
        %v4122 = vunpack.c.l.b16 %v3825
        %v4123 = vunpack.c.h.b16 %v3825
        %v4124 = vunpack.c.l.b16 %v3826
        %v4125 = vunpack.c.h.b16 %v3826
        %v4126 = vunpack.c.l.b16 %v3827
        %v4127 = vunpack.c.h.b16 %v3827
        %v4128 = vunpack.c.l.b16 %v3828
        %v4129 = vunpack.c.h.b16 %v3828
        %v4130 = vunpack.c.l.b16 %v3829
        %v4131 = vunpack.c.h.b16 %v3829
        %v4132 = vunpack.c.l.b16 %v3830
        %v4133 = vunpack.c.h.b16 %v3830
        %v4134 = vunpack.c.l.b16 %v3831
        %v4135 = vunpack.c.h.b16 %v3831
        %v4136 = vunpack.c.l.b16 %v3832
        %v4137 = vunpack.c.h.b16 %v3832
        %v4138 = vunpack.c.l.b16 %v3833
        %v4139 = vunpack.c.h.b16 %v3833
        %v4140 = vunpack.c.l.b16 %v3834
        %v4141 = vunpack.c.h.b16 %v3834
        %v4142 = vunpack.c.l.b16 %v3835
        %v4143 = vunpack.c.h.b16 %v3835
        %v4144 = vunpack.c.l.b16 %v3836
        %v4145 = vunpack.c.h.b16 %v3836
        %v4146 = vunpack.c.l.b16 %v3837
        %v4147 = vunpack.c.h.b16 %v3837
        %v4148 = vunpack.c.l.b16 %v3838
        %v4149 = vunpack.c.h.b16 %v3838
        %v4150 = vunpack.c.l.b16 %v3839
        %v4151 = vunpack.c.h.b16 %v3839
        %v4152 = vunpack.c.l.b16 %v3840
        %v4153 = vunpack.c.h.b16 %v3840
        %v4154 = vunpack.c.l.b16 %v3841
        %v4155 = vunpack.c.h.b16 %v3841
        %v4156 = vunpack.c.l.b16 %v3842
        %v4157 = vunpack.c.h.b16 %v3842
        %v4158 = vunpack.c.l.b16 %v3843
        %v4159 = vunpack.c.h.b16 %v3843
        %v4160 = vunpack.c.l.b16 %v3844
        %v4161 = vunpack.c.h.b16 %v3844
        %v4162 = vunpack.c.l.b16 %v3845
        %v4163 = vunpack.c.h.b16 %v3845
        %v4164 = vunpack.c.l.b16 %v3846
        %v4165 = vunpack.c.h.b16 %v3846
        %v4166 = vunpack.c.l.b16 %v3847
        %v4167 = vunpack.c.h.b16 %v3847
        %v4168 = vunpack.c.l.b16 %v3848
        %v4169 = vunpack.c.h.b16 %v3848
        %v4170 = vunpack.c.l.b16 %v3849
        %v4171 = vunpack.c.h.b16 %v3849
        %v4172 = vunpack.c.l.b16 %v3850
        %v4173 = vunpack.c.h.b16 %v3850
        %v4174 = vunpack.c.l.b16 %v3851
        %v4175 = vunpack.c.h.b16 %v3851
        %v4176 = vunpack.c.l.b16 %v3852
        %v4177 = vunpack.c.h.b16 %v3852
        %v4178 = vunpack.c.l.b16 %v3853
        %v4179 = vunpack.c.h.b16 %v3853
        %v4180 = vunpack.c.l.b16 %v3854
        %v4181 = vunpack.c.h.b16 %v3854
        %v4182 = vunpack.c.l.b16 %v3855
        %v4183 = vunpack.c.h.b16 %v3855
        %v4184 = vunpack.c.l.b16 %v3856
        %v4185 = vunpack.c.h.b16 %v3856
        %v4186 = vunpack.c.l.b16 %v3857
        %v4187 = vunpack.c.h.b16 %v3857
        %v4188 = vunpack.c.l.b16 %v3858
        %v4189 = vunpack.c.h.b16 %v3858
        %v4190 = vunpack.c.l.b16 %v3859
        %v4191 = vunpack.c.h.b16 %v3859
        %v4192 = vunpack.c.l.b16 %v3860
        %v4193 = vunpack.c.h.b16 %v3860
        %v4194 = vunpack.c.l.b16 %v3861
        %v4195 = vunpack.c.h.b16 %v3861
        %v4196 = vunpack.c.l.b16 %v3862
        %v4197 = vunpack.c.h.b16 %v3862
        %v4198 = vunpack.c.l.b16 %v3863
        %v4199 = vunpack.c.h.b16 %v3863
        %v4200 = vunpack.c.l.b16 %v3864
        %v4201 = vunpack.c.h.b16 %v3864
        %v4202 = vunpack.c.l.b16 %v3865
        %v4203 = vunpack.c.h.b16 %v3865
        %v4204 = vunpack.c.l.b16 %v3866
        %v4205 = vunpack.c.h.b16 %v3866
        %v4206 = vunpack.c.l.b16 %v3867
        %v4207 = vunpack.c.h.b16 %v3867
        %v4208 = vunpack.c.l.b16 %v3868
        %v4209 = vunpack.c.h.b16 %v3868
        %v4210 = vunpack.c.l.b16 %v3869
        %v4211 = vunpack.c.h.b16 %v3869
        %v4212 = vunpack.c.l.b16 %v3870
        %v4213 = vunpack.c.h.b16 %v3870
        %v4214 = vunpack.c.l.b16 %v3871
        %v4215 = vunpack.c.h.b16 %v3871
        %v4216 = vunpack.c.l.b16 %v3872
        %v4217 = vunpack.c.h.b16 %v3872
        %v4218 = vunpack.c.l.b16 %v3873
        %v4219 = vunpack.c.h.b16 %v3873
        %v4220 = vunpack.c.l.b16 %v3874
        %v4221 = vunpack.c.h.b16 %v3874
        %v4222 = vunpack.c.l.b16 %v3875
        %v4223 = vunpack.c.h.b16 %v3875
        %v4224 = vunpack.c.l.b16 %v3876
        %v4225 = vunpack.c.h.b16 %v3876
        %v4226 = vunpack.c.l.b16 %v3877
        %v4227 = vunpack.c.h.b16 %v3877
        %v4228 = vunpack.c.l.b16 %v3878
        %v4229 = vunpack.c.h.b16 %v3878
        %v4230 = vunpack.c.l.b16 %v3879
        %v4231 = vunpack.c.h.b16 %v3879
        %v4232 = vunpack.c.l.b16 %v3880
        %v4233 = vunpack.c.h.b16 %v3880
        %v4234 = vunpack.c.l.b16 %v3881
        %v4235 = vunpack.c.h.b16 %v3881
        %v4236 = vunpack.c.l.b16 %v3882
        %v4237 = vunpack.c.h.b16 %v3882
        %v4238 = vunpack.c.l.b16 %v3883
        %v4239 = vunpack.c.h.b16 %v3883
        %v4240 = vunpack.c.l.b16 %v3884
        %v4241 = vunpack.c.h.b16 %v3884
        %v4242 = vunpack.c.l.b16 %v3885
        %v4243 = vunpack.c.h.b16 %v3885
        %v4244 = vunpack.c.l.b16 %v3886
        %v4245 = vunpack.c.h.b16 %v3886
        %v4246 = vunpack.c.l.b16 %v3887
        %v4247 = vunpack.c.h.b16 %v3887
        %v4248 = vunpack.c.l.b16 %v3888
        %v4249 = vunpack.c.h.b16 %v3888
        %v4250 = vunpack.c.l.b16 %v3889
        %v4251 = vunpack.c.h.b16 %v3889
        %v4252 = vunpack.c.l.b16 %v3890
        %v4253 = vunpack.c.h.b16 %v3890
        %v4254 = vunpack.c.l.b16 %v3891
        %v4255 = vunpack.c.h.b16 %v3891
        %v4256 = vunpack.c.l.b16 %v3892
        %v4257 = vunpack.c.h.b16 %v3892
        %v4258 = vunpack.c.l.b16 %v3893
        %v4259 = vunpack.c.h.b16 %v3893
        %v4260 = vunpack.c.l.b16 %v3894
        %v4261 = vunpack.c.h.b16 %v3894
        %v4262 = vunpack.c.l.b16 %v3895
        %v4263 = vunpack.c.h.b16 %v3895
        %v4264 = vunpack.c.l.b16 %v3896
        %v4265 = vunpack.c.h.b16 %v3896
        %v4266 = vunpack.c.l.b16 %v3897
        %v4267 = vunpack.c.h.b16 %v3897
        %v4268 = vunpack.c.l.b16 %v3898
        %v4269 = vunpack.c.h.b16 %v3898
        %v4270 = vunpack.c.l.b16 %v3899
        %v4271 = vunpack.c.h.b16 %v3899
        %v4272 = vunpack.c.l.b16 %v3900
        %v4273 = vunpack.c.h.b16 %v3900
        %v4274 = vunpack.c.l.b16 %v3901
        %v4275 = vunpack.c.h.b16 %v3901
        %v4276 = vunpack.c.l.b16 %v3902
        %v4277 = vunpack.c.h.b16 %v3902
        %v4278 = vunpack.c.l.b16 %v3903
        %v4279 = vunpack.c.h.b16 %v3903
        %v4280 = vunpack.c.l.b16 %v3904
        %v4281 = vunpack.c.h.b16 %v3904
        %v4282 = vunpack.c.l.b16 %v3905
        %v4283 = vunpack.c.h.b16 %v3905
        %v4284 = vunpack.c.l.b16 %v3906
        %v4285 = vunpack.c.h.b16 %v3906
        %v4286 = vunpack.c.l.b16 %v3907
        %v4287 = vunpack.c.h.b16 %v3907
        %v4288 = vunpack.c.l.b16 %v3908
        %v4289 = vunpack.c.h.b16 %v3908
        %v4290 = vunpack.c.l.b16 %v3909
        %v4291 = vunpack.c.h.b16 %v3909
        %v4292 = vunpack.c.l.b16 %v3910
        %v4293 = vunpack.c.h.b16 %v3910
        %v4294 = vunpack.c.l.b16 %v3911
        %v4295 = vunpack.c.h.b16 %v3911
        %v4296 = vpack.c.b16 %v4048, %v4040
        %v4297 = vpack.c.b16 %v4049, %v4041
        %v4298 = vpack.c.b16 %v4050, %v4042
        %v4299 = vpack.c.b16 %v4051, %v4043
        %v4300 = vpack.c.b16 %v4052, %v4044
        %v4301 = vpack.c.b16 %v4053, %v4045
        %v4302 = vpack.c.b16 %v4054, %v4046
        %v4303 = vpack.c.b16 %v4055, %v4047
        %v4304 = vpack.c.b16 %v4064, %v4056
        %v4305 = vpack.c.b16 %v4065, %v4057
        %v4306 = vpack.c.b16 %v4066, %v4058
        %v4307 = vpack.c.b16 %v4067, %v4059
        %v4308 = vpack.c.b16 %v4068, %v4060
        %v4309 = vpack.c.b16 %v4069, %v4061
        %v4310 = vpack.c.b16 %v4070, %v4062
        %v4311 = vpack.c.b16 %v4071, %v4063
        %v4312 = vpack.c.b16 %v4080, %v4072
        %v4313 = vpack.c.b16 %v4081, %v4073
        %v4314 = vpack.c.b16 %v4082, %v4074
        %v4315 = vpack.c.b16 %v4083, %v4075
        %v4316 = vpack.c.b16 %v4084, %v4076
        %v4317 = vpack.c.b16 %v4085, %v4077
        %v4318 = vpack.c.b16 %v4086, %v4078
        %v4319 = vpack.c.b16 %v4087, %v4079
        %v4320 = vpack.c.b16 %v4096, %v4088
        %v4321 = vpack.c.b16 %v4097, %v4089
        %v4322 = vpack.c.b16 %v4098, %v4090
        %v4323 = vpack.c.b16 %v4099, %v4091
        %v4324 = vpack.c.b16 %v4100, %v4092
        %v4325 = vpack.c.b16 %v4101, %v4093
        %v4326 = vpack.c.b16 %v4102, %v4094
        %v4327 = vpack.c.b16 %v4103, %v4095
        %v4328 = vpack.c.b16 %v4112, %v4104
        %v4329 = vpack.c.b16 %v4113, %v4105
        %v4330 = vpack.c.b16 %v4114, %v4106
        %v4331 = vpack.c.b16 %v4115, %v4107
        %v4332 = vpack.c.b16 %v4116, %v4108
        %v4333 = vpack.c.b16 %v4117, %v4109
        %v4334 = vpack.c.b16 %v4118, %v4110
        %v4335 = vpack.c.b16 %v4119, %v4111
        %v4336 = vpack.c.b16 %v4128, %v4120
        %v4337 = vpack.c.b16 %v4129, %v4121
        %v4338 = vpack.c.b16 %v4130, %v4122
        %v4339 = vpack.c.b16 %v4131, %v4123
        %v4340 = vpack.c.b16 %v4132, %v4124
        %v4341 = vpack.c.b16 %v4133, %v4125
        %v4342 = vpack.c.b16 %v4134, %v4126
        %v4343 = vpack.c.b16 %v4135, %v4127
        %v4344 = vpack.c.b16 %v4144, %v4136
        %v4345 = vpack.c.b16 %v4145, %v4137
        %v4346 = vpack.c.b16 %v4146, %v4138
        %v4347 = vpack.c.b16 %v4147, %v4139
        %v4348 = vpack.c.b16 %v4148, %v4140
        %v4349 = vpack.c.b16 %v4149, %v4141
        %v4350 = vpack.c.b16 %v4150, %v4142
        %v4351 = vpack.c.b16 %v4151, %v4143
        %v4352 = vpack.c.b16 %v4160, %v4152
        %v4353 = vpack.c.b16 %v4161, %v4153
        %v4354 = vpack.c.b16 %v4162, %v4154
        %v4355 = vpack.c.b16 %v4163, %v4155
        %v4356 = vpack.c.b16 %v4164, %v4156
        %v4357 = vpack.c.b16 %v4165, %v4157
        %v4358 = vpack.c.b16 %v4166, %v4158
        %v4359 = vpack.c.b16 %v4167, %v4159
        %v4360 = vpack.c.b16 %v4176, %v4168
        %v4361 = vpack.c.b16 %v4177, %v4169
        %v4362 = vpack.c.b16 %v4178, %v4170
        %v4363 = vpack.c.b16 %v4179, %v4171
        %v4364 = vpack.c.b16 %v4180, %v4172
        %v4365 = vpack.c.b16 %v4181, %v4173
        %v4366 = vpack.c.b16 %v4182, %v4174
        %v4367 = vpack.c.b16 %v4183, %v4175
        %v4368 = vpack.c.b16 %v4192, %v4184
        %v4369 = vpack.c.b16 %v4193, %v4185
        %v4370 = vpack.c.b16 %v4194, %v4186
        %v4371 = vpack.c.b16 %v4195, %v4187
        %v4372 = vpack.c.b16 %v4196, %v4188
        %v4373 = vpack.c.b16 %v4197, %v4189
        %v4374 = vpack.c.b16 %v4198, %v4190
        %v4375 = vpack.c.b16 %v4199, %v4191
        %v4376 = vpack.c.b16 %v4208, %v4200
        %v4377 = vpack.c.b16 %v4209, %v4201
        %v4378 = vpack.c.b16 %v4210, %v4202
        %v4379 = vpack.c.b16 %v4211, %v4203
        %v4380 = vpack.c.b16 %v4212, %v4204
        %v4381 = vpack.c.b16 %v4213, %v4205
        %v4382 = vpack.c.b16 %v4214, %v4206
        %v4383 = vpack.c.b16 %v4215, %v4207
        %v4384 = vpack.c.b16 %v4224, %v4216
        %v4385 = vpack.c.b16 %v4225, %v4217
        %v4386 = vpack.c.b16 %v4226, %v4218
        %v4387 = vpack.c.b16 %v4227, %v4219
        %v4388 = vpack.c.b16 %v4228, %v4220
        %v4389 = vpack.c.b16 %v4229, %v4221
        %v4390 = vpack.c.b16 %v4230, %v4222
        %v4391 = vpack.c.b16 %v4231, %v4223
        %v4392 = vpack.c.b16 %v4240, %v4232
        %v4393 = vpack.c.b16 %v4241, %v4233
        %v4394 = vpack.c.b16 %v4242, %v4234
        %v4395 = vpack.c.b16 %v4243, %v4235
        %v4396 = vpack.c.b16 %v4244, %v4236
        %v4397 = vpack.c.b16 %v4245, %v4237
        %v4398 = vpack.c.b16 %v4246, %v4238
        %v4399 = vpack.c.b16 %v4247, %v4239
        %v4400 = vpack.c.b16 %v4256, %v4248
        %v4401 = vpack.c.b16 %v4257, %v4249
        %v4402 = vpack.c.b16 %v4258, %v4250
        %v4403 = vpack.c.b16 %v4259, %v4251
        %v4404 = vpack.c.b16 %v4260, %v4252
        %v4405 = vpack.c.b16 %v4261, %v4253
        %v4406 = vpack.c.b16 %v4262, %v4254
        %v4407 = vpack.c.b16 %v4263, %v4255
        %v4408 = vpack.c.b16 %v4272, %v4264
        %v4409 = vpack.c.b16 %v4273, %v4265
        %v4410 = vpack.c.b16 %v4274, %v4266
        %v4411 = vpack.c.b16 %v4275, %v4267
        %v4412 = vpack.c.b16 %v4276, %v4268
        %v4413 = vpack.c.b16 %v4277, %v4269
        %v4414 = vpack.c.b16 %v4278, %v4270
        %v4415 = vpack.c.b16 %v4279, %v4271
        %v4416 = vpack.c.b16 %v4288, %v4280
        %v4417 = vpack.c.b16 %v4289, %v4281
        %v4418 = vpack.c.b16 %v4290, %v4282
        %v4419 = vpack.c.b16 %v4291, %v4283
        %v4420 = vpack.c.b16 %v4292, %v4284
        %v4421 = vpack.c.b16 %v4293, %v4285
        %v4422 = vpack.c.b16 %v4294, %v4286
        %v4423 = vpack.c.b16 %v4295, %v4287
        %4552 = vmatprep.subr.bf16.mxu0 %v4353
        %4553 = vmatpush1.bf16.msra.mxu0 %v4352
        %4554 = vmatprep.subr.bf16.mxu0 %v4345
        %4555 = vmatpush1.bf16.msra.mxu0 %v4344
        %4556 = vmatprep.subr.bf16.mxu0 %v4337
        %4557 = vmatpush1.bf16.msra.mxu0 %v4336
        %4558 = vmatprep.subr.bf16.mxu0 %v4329
        %4559 = vmatpush1.bf16.msra.mxu0 %v4328
        %4560 = vmatprep.subr.bf16.mxu0 %v4321
        %4561 = vmatpush1.bf16.msra.mxu0 %v4320
        %4562 = vmatprep.subr.bf16.mxu0 %v4313
        %4563 = vmatpush1.bf16.msra.mxu0 %v4312
        %4564 = vmatprep.subr.bf16.mxu0 %v4305
        %4565 = vmatpush1.bf16.msra.mxu0 %v4304
        %4566 = vmatprep.subr.bf16.mxu0 %v4297
        %4567 = vmatpush1.bf16.msra.mxu0 %v4296
        %4568 = vmatprep.subr.bf16.mxu0 %v4417
        %4569 = vmatpush2.bf16.msra.mxu0 %v4416
        %4570 = vmatprep.subr.bf16.mxu0 %v4409
        %4571 = vmatpush2.bf16.msra.mxu0 %v4408
        %4572 = vmatprep.subr.bf16.mxu0 %v4401
        %4573 = vmatpush2.bf16.msra.mxu0 %v4400
        %4574 = vmatprep.subr.bf16.mxu0 %v4393
        %4575 = vmatpush2.bf16.msra.mxu0 %v4392
        %4576 = vmatprep.subr.bf16.mxu0 %v4385
        %4577 = vmatpush2.bf16.msra.mxu0 %v4384
        %4578 = vmatprep.subr.bf16.mxu0 %v4377
        %4579 = vmatpush2.bf16.msra.mxu0 %v4376
        %4580 = vmatprep.subr.bf16.mxu0 %v4369
        %4581 = vmatpush2.bf16.msra.mxu0 %v4368
        %4582 = vmatprep.subr.bf16.mxu0 %v4361
        %4583 = vmatpush2.bf16.msra.mxu0 %v4360
        %4584 = vmatprep.mubr.bf16.mxu0 %v3769
        %4585 = vmatmul.mubr.bf16.gmra.mxu0 %v3768
        %v4586 = vpop.f32.mrf.mxu0
        %v4587 = vadd.f32 0.0, %v4586
        %v4588 = vpop.f32.mrf.mxu0
        %v4589 = vadd.f32 0.0, %v4588
        %v4590 = vpop.f32.mrf.mxu0
        %v4591 = vadd.f32 0.0, %v4590
        %v4592 = vpop.f32.mrf.mxu0
        %v4593 = vadd.f32 0.0, %v4592
        %4594 = vmatprep.mubr.bf16.mxu0 %v3771
        %4595 = vmatmul.mubr.bf16.gmra.mxu0 %v3770
        %v4596 = vpop.f32.mrf.mxu0
        %v4597 = vadd.f32 0.0, %v4596
        %v4598 = vpop.f32.mrf.mxu0
        %v4599 = vadd.f32 0.0, %v4598
        %v4600 = vpop.f32.mrf.mxu0
        %v4601 = vadd.f32 0.0, %v4600
        %v4602 = vpop.f32.mrf.mxu0
        %v4603 = vadd.f32 0.0, %v4602
        %4604 = vmatprep.mubr.bf16.mxu0 %v3773
        %4605 = vmatmul.mubr.bf16.gmra.mxu0 %v3772
        %v4606 = vpop.f32.mrf.mxu0
        %v4607 = vadd.f32 0.0, %v4606
        %v4608 = vpop.f32.mrf.mxu0
        %v4609 = vadd.f32 0.0, %v4608
        %v4610 = vpop.f32.mrf.mxu0
        %v4611 = vadd.f32 0.0, %v4610
        %v4612 = vpop.f32.mrf.mxu0
        %v4613 = vadd.f32 0.0, %v4612
        %4614 = vmatprep.mubr.bf16.mxu0 %v3775
        %4615 = vmatmul.mubr.bf16.gmra.mxu0 %v3774
        %v4616 = vpop.f32.mrf.mxu0
        %v4617 = vadd.f32 0.0, %v4616
        %v4618 = vpop.f32.mrf.mxu0
        %v4619 = vadd.f32 0.0, %v4618
        %v4620 = vpop.f32.mrf.mxu0
        %v4621 = vadd.f32 0.0, %v4620
        %v4622 = vpop.f32.mrf.mxu0
        %v4623 = vadd.f32 0.0, %v4622
        %4624 = vmatprep.mubr.bf16.mxu0 %v3777
        %4625 = vmatmul.mubr.bf16.gmra.mxu0 %v3776
        %v4626 = vpop.f32.mrf.mxu0
        %v4627 = vadd.f32 0.0, %v4626
        %v4628 = vpop.f32.mrf.mxu0
        %v4629 = vadd.f32 0.0, %v4628
        %v4630 = vpop.f32.mrf.mxu0
        %v4631 = vadd.f32 0.0, %v4630
        %v4632 = vpop.f32.mrf.mxu0
        %v4633 = vadd.f32 0.0, %v4632
        %4634 = vmatprep.mubr.bf16.mxu0 %v3779
        %4635 = vmatmul.mubr.bf16.gmra.mxu0 %v3778
        %v4636 = vpop.f32.mrf.mxu0
        %v4637 = vadd.f32 0.0, %v4636
        %v4638 = vpop.f32.mrf.mxu0
        %v4639 = vadd.f32 0.0, %v4638
        %v4640 = vpop.f32.mrf.mxu0
        %v4641 = vadd.f32 0.0, %v4640
        %v4642 = vpop.f32.mrf.mxu0
        %v4643 = vadd.f32 0.0, %v4642
        %4644 = vmatprep.mubr.bf16.mxu0 %v3781
        %4645 = vmatmul.mubr.bf16.gmra.mxu0 %v3780
        %v4646 = vpop.f32.mrf.mxu0
        %v4647 = vadd.f32 0.0, %v4646
        %v4648 = vpop.f32.mrf.mxu0
        %v4649 = vadd.f32 0.0, %v4648
        %v4650 = vpop.f32.mrf.mxu0
        %v4651 = vadd.f32 0.0, %v4650
        %v4652 = vpop.f32.mrf.mxu0
        %v4653 = vadd.f32 0.0, %v4652
        %4654 = vmatprep.mubr.bf16.mxu0 %v3783
        %4655 = vmatmul.mubr.bf16.gmra.mxu0 %v3782
        %v4656 = vpop.f32.mrf.mxu0
        %v4657 = vadd.f32 0.0, %v4656
        %v4658 = vpop.f32.mrf.mxu0
        %v4659 = vadd.f32 0.0, %v4658
        %v4660 = vpop.f32.mrf.mxu0
        %v4661 = vadd.f32 0.0, %v4660
        %v4662 = vpop.f32.mrf.mxu0
        %v4663 = vadd.f32 0.0, %v4662
        %4664 = vdwg.mxu0
        %4665 = vmatprep.subr.bf16.mxu0 %v4355
        %4666 = vmatpush1.bf16.msra.mxu0 %v4354
        %4667 = vmatprep.subr.bf16.mxu0 %v4347
        %4668 = vmatpush1.bf16.msra.mxu0 %v4346
        %4669 = vmatprep.subr.bf16.mxu0 %v4339
        %4670 = vmatpush1.bf16.msra.mxu0 %v4338
        %4671 = vmatprep.subr.bf16.mxu0 %v4331
        %4672 = vmatpush1.bf16.msra.mxu0 %v4330
        %4673 = vmatprep.subr.bf16.mxu0 %v4323
        %4674 = vmatpush1.bf16.msra.mxu0 %v4322
        %4675 = vmatprep.subr.bf16.mxu0 %v4315
        %4676 = vmatpush1.bf16.msra.mxu0 %v4314
        %4677 = vmatprep.subr.bf16.mxu0 %v4307
        %4678 = vmatpush1.bf16.msra.mxu0 %v4306
        %4679 = vmatprep.subr.bf16.mxu0 %v4299
        %4680 = vmatpush1.bf16.msra.mxu0 %v4298
        %4681 = vmatprep.subr.bf16.mxu0 %v4419
        %4682 = vmatpush2.bf16.msra.mxu0 %v4418
        %4683 = vmatprep.subr.bf16.mxu0 %v4411
        %4684 = vmatpush2.bf16.msra.mxu0 %v4410
        %4685 = vmatprep.subr.bf16.mxu0 %v4403
        %4686 = vmatpush2.bf16.msra.mxu0 %v4402
        %4687 = vmatprep.subr.bf16.mxu0 %v4395
        %4688 = vmatpush2.bf16.msra.mxu0 %v4394
        %4689 = vmatprep.subr.bf16.mxu0 %v4387
        %4690 = vmatpush2.bf16.msra.mxu0 %v4386
        %4691 = vmatprep.subr.bf16.mxu0 %v4379
        %4692 = vmatpush2.bf16.msra.mxu0 %v4378
        %4693 = vmatprep.subr.bf16.mxu0 %v4371
        %4694 = vmatpush2.bf16.msra.mxu0 %v4370
        %4695 = vmatprep.subr.bf16.mxu0 %v4363
        %4696 = vmatpush2.bf16.msra.mxu0 %v4362
        %4697 = vmatprep.mubr.bf16.mxu0 %v3769
        %4698 = vmatmul.mubr.bf16.gmra.mxu0 %v3768
        %v4699 = vpop.f32.mrf.mxu0
        %v4700 = vadd.f32 0.0, %v4699
        %v4701 = vpop.f32.mrf.mxu0
        %v4702 = vadd.f32 0.0, %v4701
        %v4703 = vpop.f32.mrf.mxu0
        %v4704 = vadd.f32 0.0, %v4703
        %v4705 = vpop.f32.mrf.mxu0
        %v4706 = vadd.f32 0.0, %v4705
        %4707 = vmatprep.mubr.bf16.mxu0 %v3771
        %4708 = vmatmul.mubr.bf16.gmra.mxu0 %v3770
        %v4709 = vpop.f32.mrf.mxu0
        %v4710 = vadd.f32 0.0, %v4709
        %v4711 = vpop.f32.mrf.mxu0
        %v4712 = vadd.f32 0.0, %v4711
        %v4713 = vpop.f32.mrf.mxu0
        %v4714 = vadd.f32 0.0, %v4713
        %v4715 = vpop.f32.mrf.mxu0
        %v4716 = vadd.f32 0.0, %v4715
        %4717 = vmatprep.mubr.bf16.mxu0 %v3773
        %4718 = vmatmul.mubr.bf16.gmra.mxu0 %v3772
        %v4719 = vpop.f32.mrf.mxu0
        %v4720 = vadd.f32 0.0, %v4719
        %v4721 = vpop.f32.mrf.mxu0
        %v4722 = vadd.f32 0.0, %v4721
        %v4723 = vpop.f32.mrf.mxu0
        %v4724 = vadd.f32 0.0, %v4723
        %v4725 = vpop.f32.mrf.mxu0
        %v4726 = vadd.f32 0.0, %v4725
        %4727 = vmatprep.mubr.bf16.mxu0 %v3775
        %4728 = vmatmul.mubr.bf16.gmra.mxu0 %v3774
        %v4729 = vpop.f32.mrf.mxu0
        %v4730 = vadd.f32 0.0, %v4729
        %v4731 = vpop.f32.mrf.mxu0
        %v4732 = vadd.f32 0.0, %v4731
        %v4733 = vpop.f32.mrf.mxu0
        %v4734 = vadd.f32 0.0, %v4733
        %v4735 = vpop.f32.mrf.mxu0
        %v4736 = vadd.f32 0.0, %v4735
        %4737 = vmatprep.mubr.bf16.mxu0 %v3777
        %4738 = vmatmul.mubr.bf16.gmra.mxu0 %v3776
        %v4739 = vpop.f32.mrf.mxu0
        %v4740 = vadd.f32 0.0, %v4739
        %v4741 = vpop.f32.mrf.mxu0
        %v4742 = vadd.f32 0.0, %v4741
        %v4743 = vpop.f32.mrf.mxu0
        %v4744 = vadd.f32 0.0, %v4743
        %v4745 = vpop.f32.mrf.mxu0
        %v4746 = vadd.f32 0.0, %v4745
        %4747 = vmatprep.mubr.bf16.mxu0 %v3779
        %4748 = vmatmul.mubr.bf16.gmra.mxu0 %v3778
        %v4749 = vpop.f32.mrf.mxu0
        %v4750 = vadd.f32 0.0, %v4749
        %v4751 = vpop.f32.mrf.mxu0
        %v4752 = vadd.f32 0.0, %v4751
        %v4753 = vpop.f32.mrf.mxu0
        %v4754 = vadd.f32 0.0, %v4753
        %v4755 = vpop.f32.mrf.mxu0
        %v4756 = vadd.f32 0.0, %v4755
        %4757 = vmatprep.mubr.bf16.mxu0 %v3781
        %4758 = vmatmul.mubr.bf16.gmra.mxu0 %v3780
        %v4759 = vpop.f32.mrf.mxu0
        %v4760 = vadd.f32 0.0, %v4759
        %v4761 = vpop.f32.mrf.mxu0
        %v4762 = vadd.f32 0.0, %v4761
        %v4763 = vpop.f32.mrf.mxu0
        %v4764 = vadd.f32 0.0, %v4763
        %v4765 = vpop.f32.mrf.mxu0
        %v4766 = vadd.f32 0.0, %v4765
        %4767 = vmatprep.mubr.bf16.mxu0 %v3783
        %4768 = vmatmul.mubr.bf16.gmra.mxu0 %v3782
        %v4769 = vpop.f32.mrf.mxu0
        %v4770 = vadd.f32 0.0, %v4769
        %v4771 = vpop.f32.mrf.mxu0
        %v4772 = vadd.f32 0.0, %v4771
        %v4773 = vpop.f32.mrf.mxu0
        %v4774 = vadd.f32 0.0, %v4773
        %v4775 = vpop.f32.mrf.mxu0
        %v4776 = vadd.f32 0.0, %v4775
        %4777 = vdwg.mxu0
        %4778 = vmatprep.subr.bf16.mxu0 %v4357
        %4779 = vmatpush1.bf16.msra.mxu0 %v4356
        %4780 = vmatprep.subr.bf16.mxu0 %v4349
        %4781 = vmatpush1.bf16.msra.mxu0 %v4348
        %4782 = vmatprep.subr.bf16.mxu0 %v4341
        %4783 = vmatpush1.bf16.msra.mxu0 %v4340
        %4784 = vmatprep.subr.bf16.mxu0 %v4333
        %4785 = vmatpush1.bf16.msra.mxu0 %v4332
        %4786 = vmatprep.subr.bf16.mxu0 %v4325
        %4787 = vmatpush1.bf16.msra.mxu0 %v4324
        %4788 = vmatprep.subr.bf16.mxu0 %v4317
        %4789 = vmatpush1.bf16.msra.mxu0 %v4316
        %4790 = vmatprep.subr.bf16.mxu0 %v4309
        %4791 = vmatpush1.bf16.msra.mxu0 %v4308
        %4792 = vmatprep.subr.bf16.mxu0 %v4301
        %4793 = vmatpush1.bf16.msra.mxu0 %v4300
        %4794 = vmatprep.subr.bf16.mxu0 %v4421
        %4795 = vmatpush2.bf16.msra.mxu0 %v4420
        %4796 = vmatprep.subr.bf16.mxu0 %v4413
        %4797 = vmatpush2.bf16.msra.mxu0 %v4412
        %4798 = vmatprep.subr.bf16.mxu0 %v4405
        %4799 = vmatpush2.bf16.msra.mxu0 %v4404
        %4800 = vmatprep.subr.bf16.mxu0 %v4397
        %4801 = vmatpush2.bf16.msra.mxu0 %v4396
        %4802 = vmatprep.subr.bf16.mxu0 %v4389
        %4803 = vmatpush2.bf16.msra.mxu0 %v4388
        %4804 = vmatprep.subr.bf16.mxu0 %v4381
        %4805 = vmatpush2.bf16.msra.mxu0 %v4380
        %4806 = vmatprep.subr.bf16.mxu0 %v4373
        %4807 = vmatpush2.bf16.msra.mxu0 %v4372
        %4808 = vmatprep.subr.bf16.mxu0 %v4365
        %4809 = vmatpush2.bf16.msra.mxu0 %v4364
        %4810 = vmatprep.mubr.bf16.mxu0 %v3769
        %4811 = vmatmul.mubr.bf16.gmra.mxu0 %v3768
        %v4812 = vpop.f32.mrf.mxu0
        %v4813 = vadd.f32 0.0, %v4812
        %v4814 = vpop.f32.mrf.mxu0
        %v4815 = vadd.f32 0.0, %v4814
        %v4816 = vpop.f32.mrf.mxu0
        %v4817 = vadd.f32 0.0, %v4816
        %v4818 = vpop.f32.mrf.mxu0
        %v4819 = vadd.f32 0.0, %v4818
        %4820 = vmatprep.mubr.bf16.mxu0 %v3771
        %4821 = vmatmul.mubr.bf16.gmra.mxu0 %v3770
        %v4822 = vpop.f32.mrf.mxu0
        %v4823 = vadd.f32 0.0, %v4822
        %v4824 = vpop.f32.mrf.mxu0
        %v4825 = vadd.f32 0.0, %v4824
        %v4826 = vpop.f32.mrf.mxu0
        %v4827 = vadd.f32 0.0, %v4826
        %v4828 = vpop.f32.mrf.mxu0
        %v4829 = vadd.f32 0.0, %v4828
        %4830 = vmatprep.mubr.bf16.mxu0 %v3773
        %4831 = vmatmul.mubr.bf16.gmra.mxu0 %v3772
        %v4832 = vpop.f32.mrf.mxu0
        %v4833 = vadd.f32 0.0, %v4832
        %v4834 = vpop.f32.mrf.mxu0
        %v4835 = vadd.f32 0.0, %v4834
        %v4836 = vpop.f32.mrf.mxu0
        %v4837 = vadd.f32 0.0, %v4836
        %v4838 = vpop.f32.mrf.mxu0
        %v4839 = vadd.f32 0.0, %v4838
        %4840 = vmatprep.mubr.bf16.mxu0 %v3775
        %4841 = vmatmul.mubr.bf16.gmra.mxu0 %v3774
        %v4842 = vpop.f32.mrf.mxu0
        %v4843 = vadd.f32 0.0, %v4842
        %v4844 = vpop.f32.mrf.mxu0
        %v4845 = vadd.f32 0.0, %v4844
        %v4846 = vpop.f32.mrf.mxu0
        %v4847 = vadd.f32 0.0, %v4846
        %v4848 = vpop.f32.mrf.mxu0
        %v4849 = vadd.f32 0.0, %v4848
        %4850 = vmatprep.mubr.bf16.mxu0 %v3777
        %4851 = vmatmul.mubr.bf16.gmra.mxu0 %v3776
        %v4852 = vpop.f32.mrf.mxu0
        %v4853 = vadd.f32 0.0, %v4852
        %v4854 = vpop.f32.mrf.mxu0
        %v4855 = vadd.f32 0.0, %v4854
        %v4856 = vpop.f32.mrf.mxu0
        %v4857 = vadd.f32 0.0, %v4856
        %v4858 = vpop.f32.mrf.mxu0
        %v4859 = vadd.f32 0.0, %v4858
        %4860 = vmatprep.mubr.bf16.mxu0 %v3779
        %4861 = vmatmul.mubr.bf16.gmra.mxu0 %v3778
        %v4862 = vpop.f32.mrf.mxu0
        %v4863 = vadd.f32 0.0, %v4862
        %v4864 = vpop.f32.mrf.mxu0
        %v4865 = vadd.f32 0.0, %v4864
        %v4866 = vpop.f32.mrf.mxu0
        %v4867 = vadd.f32 0.0, %v4866
        %v4868 = vpop.f32.mrf.mxu0
        %v4869 = vadd.f32 0.0, %v4868
        %4870 = vmatprep.mubr.bf16.mxu0 %v3781
        %4871 = vmatmul.mubr.bf16.gmra.mxu0 %v3780
        %v4872 = vpop.f32.mrf.mxu0
        %v4873 = vadd.f32 0.0, %v4872
        %v4874 = vpop.f32.mrf.mxu0
        %v4875 = vadd.f32 0.0, %v4874
        %v4876 = vpop.f32.mrf.mxu0
        %v4877 = vadd.f32 0.0, %v4876
        %v4878 = vpop.f32.mrf.mxu0
        %v4879 = vadd.f32 0.0, %v4878
        %4880 = vmatprep.mubr.bf16.mxu0 %v3783
        %4881 = vmatmul.mubr.bf16.gmra.mxu0 %v3782
        %v4882 = vpop.f32.mrf.mxu0
        %v4883 = vadd.f32 0.0, %v4882
        %v4884 = vpop.f32.mrf.mxu0
        %v4885 = vadd.f32 0.0, %v4884
        %v4886 = vpop.f32.mrf.mxu0
        %v4887 = vadd.f32 0.0, %v4886
        %v4888 = vpop.f32.mrf.mxu0
        %v4889 = vadd.f32 0.0, %v4888
        %4890 = vdwg.mxu0
        %4891 = vmatprep.subr.bf16.mxu0 %v4359
        %4892 = vmatpush1.bf16.msra.mxu0 %v4358
        %4893 = vmatprep.subr.bf16.mxu0 %v4351
        %4894 = vmatpush1.bf16.msra.mxu0 %v4350
        %4895 = vmatprep.subr.bf16.mxu0 %v4343
        %4896 = vmatpush1.bf16.msra.mxu0 %v4342
        %4897 = vmatprep.subr.bf16.mxu0 %v4335
        %4898 = vmatpush1.bf16.msra.mxu0 %v4334
        %4899 = vmatprep.subr.bf16.mxu0 %v4327
        %4900 = vmatpush1.bf16.msra.mxu0 %v4326
        %4901 = vmatprep.subr.bf16.mxu0 %v4319
        %4902 = vmatpush1.bf16.msra.mxu0 %v4318
        %4903 = vmatprep.subr.bf16.mxu0 %v4311
        %4904 = vmatpush1.bf16.msra.mxu0 %v4310
        %4905 = vmatprep.subr.bf16.mxu0 %v4303
        %4906 = vmatpush1.bf16.msra.mxu0 %v4302
        %4907 = vmatprep.subr.bf16.mxu0 %v4423
        %4908 = vmatpush2.bf16.msra.mxu0 %v4422
        %4909 = vmatprep.subr.bf16.mxu0 %v4415
        %4910 = vmatpush2.bf16.msra.mxu0 %v4414
        %4911 = vmatprep.subr.bf16.mxu0 %v4407
        %4912 = vmatpush2.bf16.msra.mxu0 %v4406
        %4913 = vmatprep.subr.bf16.mxu0 %v4399
        %4914 = vmatpush2.bf16.msra.mxu0 %v4398
        %4915 = vmatprep.subr.bf16.mxu0 %v4391
        %4916 = vmatpush2.bf16.msra.mxu0 %v4390
        %4917 = vmatprep.subr.bf16.mxu0 %v4383
        %4918 = vmatpush2.bf16.msra.mxu0 %v4382
        %4919 = vmatprep.subr.bf16.mxu0 %v4375
        %4920 = vmatpush2.bf16.msra.mxu0 %v4374
        %4921 = vmatprep.subr.bf16.mxu0 %v4367
        %4922 = vmatpush2.bf16.msra.mxu0 %v4366
        %4923 = vmatprep.mubr.bf16.mxu0 %v3769
        %4924 = vmatmul.mubr.bf16.gmra.mxu0 %v3768
        %v4925 = vpop.f32.mrf.mxu0
        %v4926 = vadd.f32 0.0, %v4925
        %v4927 = vpop.f32.mrf.mxu0
        %v4928 = vadd.f32 0.0, %v4927
        %v4929 = vpop.f32.mrf.mxu0
        %v4930 = vadd.f32 0.0, %v4929
        %v4931 = vpop.f32.mrf.mxu0
        %v4932 = vadd.f32 0.0, %v4931
        %4933 = vmatprep.mubr.bf16.mxu0 %v3771
        %4934 = vmatmul.mubr.bf16.gmra.mxu0 %v3770
        %v4935 = vpop.f32.mrf.mxu0
        %v4936 = vadd.f32 0.0, %v4935
        %v4937 = vpop.f32.mrf.mxu0
        %v4938 = vadd.f32 0.0, %v4937
        %v4939 = vpop.f32.mrf.mxu0
        %v4940 = vadd.f32 0.0, %v4939
        %v4941 = vpop.f32.mrf.mxu0
        %v4942 = vadd.f32 0.0, %v4941
        %4943 = vmatprep.mubr.bf16.mxu0 %v3773
        %4944 = vmatmul.mubr.bf16.gmra.mxu0 %v3772
        %v4945 = vpop.f32.mrf.mxu0
        %v4946 = vadd.f32 0.0, %v4945
        %v4947 = vpop.f32.mrf.mxu0
        %v4948 = vadd.f32 0.0, %v4947
        %v4949 = vpop.f32.mrf.mxu0
        %v4950 = vadd.f32 0.0, %v4949
        %v4951 = vpop.f32.mrf.mxu0
        %v4952 = vadd.f32 0.0, %v4951
        %4953 = vmatprep.mubr.bf16.mxu0 %v3775
        %4954 = vmatmul.mubr.bf16.gmra.mxu0 %v3774
        %v4955 = vpop.f32.mrf.mxu0
        %v4956 = vadd.f32 0.0, %v4955
        %v4957 = vpop.f32.mrf.mxu0
        %v4958 = vadd.f32 0.0, %v4957
        %v4959 = vpop.f32.mrf.mxu0
        %v4960 = vadd.f32 0.0, %v4959
        %v4961 = vpop.f32.mrf.mxu0
        %v4962 = vadd.f32 0.0, %v4961
        %4963 = vmatprep.mubr.bf16.mxu0 %v3777
        %4964 = vmatmul.mubr.bf16.gmra.mxu0 %v3776
        %v4965 = vpop.f32.mrf.mxu0
        %v4966 = vadd.f32 0.0, %v4965
        %v4967 = vpop.f32.mrf.mxu0
        %v4968 = vadd.f32 0.0, %v4967
        %v4969 = vpop.f32.mrf.mxu0
        %v4970 = vadd.f32 0.0, %v4969
        %v4971 = vpop.f32.mrf.mxu0
        %v4972 = vadd.f32 0.0, %v4971
        %4973 = vmatprep.mubr.bf16.mxu0 %v3779
        %4974 = vmatmul.mubr.bf16.gmra.mxu0 %v3778
        %v4975 = vpop.f32.mrf.mxu0
        %v4976 = vadd.f32 0.0, %v4975
        %v4977 = vpop.f32.mrf.mxu0
        %v4978 = vadd.f32 0.0, %v4977
        %v4979 = vpop.f32.mrf.mxu0
        %v4980 = vadd.f32 0.0, %v4979
        %v4981 = vpop.f32.mrf.mxu0
        %v4982 = vadd.f32 0.0, %v4981
        %4983 = vmatprep.mubr.bf16.mxu0 %v3781
        %4984 = vmatmul.mubr.bf16.gmra.mxu0 %v3780
        %v4985 = vpop.f32.mrf.mxu0
        %v4986 = vadd.f32 0.0, %v4985
        %v4987 = vpop.f32.mrf.mxu0
        %v4988 = vadd.f32 0.0, %v4987
        %v4989 = vpop.f32.mrf.mxu0
        %v4990 = vadd.f32 0.0, %v4989
        %v4991 = vpop.f32.mrf.mxu0
        %v4992 = vadd.f32 0.0, %v4991
        %4993 = vmatprep.mubr.bf16.mxu0 %v3783
        %4994 = vmatmul.mubr.bf16.gmra.mxu0 %v3782
        %v4995 = vpop.f32.mrf.mxu0
        %v4996 = vadd.f32 0.0, %v4995
        %v4997 = vpop.f32.mrf.mxu0
        %v4998 = vadd.f32 0.0, %v4997
        %v4999 = vpop.f32.mrf.mxu0
        %v5000 = vadd.f32 0.0, %v4999
        %v5001 = vpop.f32.mrf.mxu0
        %v5002 = vadd.f32 0.0, %v5001
        %5003 = vdwg.mxu0
        %v5004 = vsub.f32 0.0, %v4587
        %v5005 = vsub.f32 0.0, %v4589
        %v5006 = vsub.f32 0.0, %v4700
        %v5007 = vsub.f32 0.0, %v4702
        %v5008 = vsub.f32 0.0, %v4591
        %v5009 = vsub.f32 0.0, %v4593
        %v5010 = vsub.f32 0.0, %v4704
        %v5011 = vsub.f32 0.0, %v4706
        %v5012 = vsub.f32 0.0, %v4597
        %v5013 = vsub.f32 0.0, %v4599
        %v5014 = vsub.f32 0.0, %v4710
        %v5015 = vsub.f32 0.0, %v4712
        %v5016 = vsub.f32 0.0, %v4601
        %v5017 = vsub.f32 0.0, %v4603
        %v5018 = vsub.f32 0.0, %v4714
        %v5019 = vsub.f32 0.0, %v4716
        %v5020 = vsub.f32 0.0, %v4607
        %v5021 = vsub.f32 0.0, %v4609
        %v5022 = vsub.f32 0.0, %v4720
        %v5023 = vsub.f32 0.0, %v4722
        %v5024 = vsub.f32 0.0, %v4611
        %v5025 = vsub.f32 0.0, %v4613
        %v5026 = vsub.f32 0.0, %v4724
        %v5027 = vsub.f32 0.0, %v4726
        %v5028 = vsub.f32 0.0, %v4617
        %v5029 = vsub.f32 0.0, %v4619
        %v5030 = vsub.f32 0.0, %v4730
        %v5031 = vsub.f32 0.0, %v4732
        %v5032 = vsub.f32 0.0, %v4621
        %v5033 = vsub.f32 0.0, %v4623
        %v5034 = vsub.f32 0.0, %v4734
        %v5035 = vsub.f32 0.0, %v4736
        %v5036 = vsub.f32 0.0, %v4627
        %v5037 = vsub.f32 0.0, %v4629
        %v5038 = vsub.f32 0.0, %v4740
        %v5039 = vsub.f32 0.0, %v4742
        %v5040 = vsub.f32 0.0, %v4631
        %v5041 = vsub.f32 0.0, %v4633
        %v5042 = vsub.f32 0.0, %v4744
        %v5043 = vsub.f32 0.0, %v4746
        %v5044 = vsub.f32 0.0, %v4637
        %v5045 = vsub.f32 0.0, %v4639
        %v5046 = vsub.f32 0.0, %v4750
        %v5047 = vsub.f32 0.0, %v4752
        %v5048 = vsub.f32 0.0, %v4641
        %v5049 = vsub.f32 0.0, %v4643
        %v5050 = vsub.f32 0.0, %v4754
        %v5051 = vsub.f32 0.0, %v4756
        %v5052 = vsub.f32 0.0, %v4647
        %v5053 = vsub.f32 0.0, %v4649
        %v5054 = vsub.f32 0.0, %v4760
        %v5055 = vsub.f32 0.0, %v4762
        %v5056 = vsub.f32 0.0, %v4651
        %v5057 = vsub.f32 0.0, %v4653
        %v5058 = vsub.f32 0.0, %v4764
        %v5059 = vsub.f32 0.0, %v4766
        %v5060 = vsub.f32 0.0, %v4657
        %v5061 = vsub.f32 0.0, %v4659
        %v5062 = vsub.f32 0.0, %v4770
        %v5063 = vsub.f32 0.0, %v4772
        %v5064 = vsub.f32 0.0, %v4661
        %v5065 = vsub.f32 0.0, %v4663
        %v5066 = vsub.f32 0.0, %v4774
        %v5067 = vsub.f32 0.0, %v4776
        %v5068 = vmul.f32 %v5004, 1.442695
        %v5069 = vpow.pop %v5068
        %v5070 = vmul.f32 %v5005, 1.442695
        %v5071 = vpow.pop %v5070
        %v5072 = vmul.f32 %v5006, 1.442695
        %v5073 = vpow.pop %v5072
        %v5074 = vmul.f32 %v5007, 1.442695
        %v5075 = vpow.pop %v5074
        %v5076 = vmul.f32 %v5008, 1.442695
        %v5077 = vpow.pop %v5076
        %v5078 = vmul.f32 %v5009, 1.442695
        %v5079 = vpow.pop %v5078
        %v5080 = vmul.f32 %v5010, 1.442695
        %v5081 = vpow.pop %v5080
        %v5082 = vmul.f32 %v5011, 1.442695
        %v5083 = vpow.pop %v5082
        %v5084 = vmul.f32 %v5012, 1.442695
        %v5085 = vpow.pop %v5084
        %v5086 = vmul.f32 %v5013, 1.442695
        %v5087 = vpow.pop %v5086
        %v5088 = vmul.f32 %v5014, 1.442695
        %v5089 = vpow.pop %v5088
        %v5090 = vmul.f32 %v5015, 1.442695
        %v5091 = vpow.pop %v5090
        %v5092 = vmul.f32 %v5016, 1.442695
        %v5093 = vpow.pop %v5092
        %v5094 = vmul.f32 %v5017, 1.442695
        %v5095 = vpow.pop %v5094
        %v5096 = vmul.f32 %v5018, 1.442695
        %v5097 = vpow.pop %v5096
        %v5098 = vmul.f32 %v5019, 1.442695
        %v5099 = vpow.pop %v5098
        %v5100 = vmul.f32 %v5020, 1.442695
        %v5101 = vpow.pop %v5100
        %v5102 = vmul.f32 %v5021, 1.442695
        %v5103 = vpow.pop %v5102
        %v5104 = vmul.f32 %v5022, 1.442695
        %v5105 = vpow.pop %v5104
        %v5106 = vmul.f32 %v5023, 1.442695
        %v5107 = vpow.pop %v5106
        %v5108 = vmul.f32 %v5024, 1.442695
        %v5109 = vpow.pop %v5108
        %v5110 = vmul.f32 %v5025, 1.442695
        %v5111 = vpow.pop %v5110
        %v5112 = vmul.f32 %v5026, 1.442695
        %v5113 = vpow.pop %v5112
        %v5114 = vmul.f32 %v5027, 1.442695
        %v5115 = vpow.pop %v5114
        %v5116 = vmul.f32 %v5028, 1.442695
        %v5117 = vpow.pop %v5116
        %v5118 = vmul.f32 %v5029, 1.442695
        %v5119 = vpow.pop %v5118
        %v5120 = vmul.f32 %v5030, 1.442695
        %v5121 = vpow.pop %v5120
        %v5122 = vmul.f32 %v5031, 1.442695
        %v5123 = vpow.pop %v5122
        %v5124 = vmul.f32 %v5032, 1.442695
        %v5125 = vpow.pop %v5124
        %v5126 = vmul.f32 %v5033, 1.442695
        %v5127 = vpow.pop %v5126
        %v5128 = vmul.f32 %v5034, 1.442695
        %v5129 = vpow.pop %v5128
        %v5130 = vmul.f32 %v5035, 1.442695
        %v5131 = vpow.pop %v5130
        %v5132 = vmul.f32 %v5036, 1.442695
        %v5133 = vpow.pop %v5132
        %v5134 = vmul.f32 %v5037, 1.442695
        %v5135 = vpow.pop %v5134
        %v5136 = vmul.f32 %v5038, 1.442695
        %v5137 = vpow.pop %v5136
        %v5138 = vmul.f32 %v5039, 1.442695
        %v5139 = vpow.pop %v5138
        %v5140 = vmul.f32 %v5040, 1.442695
        %v5141 = vpow.pop %v5140
        %v5142 = vmul.f32 %v5041, 1.442695
        %v5143 = vpow.pop %v5142
        %v5144 = vmul.f32 %v5042, 1.442695
        %v5145 = vpow.pop %v5144
        %v5146 = vmul.f32 %v5043, 1.442695
        %v5147 = vpow.pop %v5146
        %v5148 = vmul.f32 %v5044, 1.442695
        %v5149 = vpow.pop %v5148
        %v5150 = vmul.f32 %v5045, 1.442695
        %v5151 = vpow.pop %v5150
        %v5152 = vmul.f32 %v5046, 1.442695
        %v5153 = vpow.pop %v5152
        %v5154 = vmul.f32 %v5047, 1.442695
        %v5155 = vpow.pop %v5154
        %v5156 = vmul.f32 %v5048, 1.442695
        %v5157 = vpow.pop %v5156
        %v5158 = vmul.f32 %v5049, 1.442695
        %v5159 = vpow.pop %v5158
        %v5160 = vmul.f32 %v5050, 1.442695
        %v5161 = vpow.pop %v5160
        %v5162 = vmul.f32 %v5051, 1.442695
        %v5163 = vpow.pop %v5162
        %v5164 = vmul.f32 %v5052, 1.442695
        %v5165 = vpow.pop %v5164
        %v5166 = vmul.f32 %v5053, 1.442695
        %v5167 = vpow.pop %v5166
        %v5168 = vmul.f32 %v5054, 1.442695
        %v5169 = vpow.pop %v5168
        %v5170 = vmul.f32 %v5055, 1.442695
        %v5171 = vpow.pop %v5170
        %v5172 = vmul.f32 %v5056, 1.442695
        %v5173 = vpow.pop %v5172
        %v5174 = vmul.f32 %v5057, 1.442695
        %v5175 = vpow.pop %v5174
        %v5176 = vmul.f32 %v5058, 1.442695
        %v5177 = vpow.pop %v5176
        %v5178 = vmul.f32 %v5059, 1.442695
        %v5179 = vpow.pop %v5178
        %v5180 = vmul.f32 %v5060, 1.442695
        %v5181 = vpow.pop %v5180
        %v5182 = vmul.f32 %v5061, 1.442695
        %v5183 = vpow.pop %v5182
        %v5184 = vmul.f32 %v5062, 1.442695
        %v5185 = vpow.pop %v5184
        %v5186 = vmul.f32 %v5063, 1.442695
        %v5187 = vpow.pop %v5186
        %v5188 = vmul.f32 %v5064, 1.442695
        %v5189 = vpow.pop %v5188
        %v5190 = vmul.f32 %v5065, 1.442695
        %v5191 = vpow.pop %v5190
        %v5192 = vmul.f32 %v5066, 1.442695
        %v5193 = vpow.pop %v5192
        %v5194 = vmul.f32 %v5067, 1.442695
        %v5195 = vpow.pop %v5194
        %v5196 = vadd.f32 %v5069, 1.0
        %v5197 = vadd.f32 %v5071, 1.0
        %v5198 = vadd.f32 %v5073, 1.0
        %v5199 = vadd.f32 %v5075, 1.0
        %v5200 = vadd.f32 %v5077, 1.0
        %v5201 = vadd.f32 %v5079, 1.0
        %v5202 = vadd.f32 %v5081, 1.0
        %v5203 = vadd.f32 %v5083, 1.0
        %v5204 = vadd.f32 %v5085, 1.0
        %v5205 = vadd.f32 %v5087, 1.0
        %v5206 = vadd.f32 %v5089, 1.0
        %v5207 = vadd.f32 %v5091, 1.0
        %v5208 = vadd.f32 %v5093, 1.0
        %v5209 = vadd.f32 %v5095, 1.0
        %v5210 = vadd.f32 %v5097, 1.0
        %v5211 = vadd.f32 %v5099, 1.0
        %v5212 = vadd.f32 %v5101, 1.0
        %v5213 = vadd.f32 %v5103, 1.0
        %v5214 = vadd.f32 %v5105, 1.0
        %v5215 = vadd.f32 %v5107, 1.0
        %v5216 = vadd.f32 %v5109, 1.0
        %v5217 = vadd.f32 %v5111, 1.0
        %v5218 = vadd.f32 %v5113, 1.0
        %v5219 = vadd.f32 %v5115, 1.0
        %v5220 = vadd.f32 %v5117, 1.0
        %v5221 = vadd.f32 %v5119, 1.0
        %v5222 = vadd.f32 %v5121, 1.0
        %v5223 = vadd.f32 %v5123, 1.0
        %v5224 = vadd.f32 %v5125, 1.0
        %v5225 = vadd.f32 %v5127, 1.0
        %v5226 = vadd.f32 %v5129, 1.0
        %v5227 = vadd.f32 %v5131, 1.0
        %v5228 = vadd.f32 %v5133, 1.0
        %v5229 = vadd.f32 %v5135, 1.0
        %v5230 = vadd.f32 %v5137, 1.0
        %v5231 = vadd.f32 %v5139, 1.0
        %v5232 = vadd.f32 %v5141, 1.0
        %v5233 = vadd.f32 %v5143, 1.0
        %v5234 = vadd.f32 %v5145, 1.0
        %v5235 = vadd.f32 %v5147, 1.0
        %v5236 = vadd.f32 %v5149, 1.0
        %v5237 = vadd.f32 %v5151, 1.0
        %v5238 = vadd.f32 %v5153, 1.0
        %v5239 = vadd.f32 %v5155, 1.0
        %v5240 = vadd.f32 %v5157, 1.0
        %v5241 = vadd.f32 %v5159, 1.0
        %v5242 = vadd.f32 %v5161, 1.0
        %v5243 = vadd.f32 %v5163, 1.0
        %v5244 = vadd.f32 %v5165, 1.0
        %v5245 = vadd.f32 %v5167, 1.0
        %v5246 = vadd.f32 %v5169, 1.0
        %v5247 = vadd.f32 %v5171, 1.0
        %v5248 = vadd.f32 %v5173, 1.0
        %v5249 = vadd.f32 %v5175, 1.0
        %v5250 = vadd.f32 %v5177, 1.0
        %v5251 = vadd.f32 %v5179, 1.0
        %v5252 = vadd.f32 %v5181, 1.0
        %v5253 = vadd.f32 %v5183, 1.0
        %v5254 = vadd.f32 %v5185, 1.0
        %v5255 = vadd.f32 %v5187, 1.0
        %v5256 = vadd.f32 %v5189, 1.0
        %v5257 = vadd.f32 %v5191, 1.0
        %v5258 = vadd.f32 %v5193, 1.0
        %v5259 = vadd.f32 %v5195, 1.0
        %v5260 = vrcp.pop %v5196
        %v5261 = vrcp.pop %v5197
        %v5262 = vrcp.pop %v5198
        %v5263 = vrcp.pop %v5199
        %v5264 = vrcp.pop %v5200
        %v5265 = vrcp.pop %v5201
        %v5266 = vrcp.pop %v5202
        %v5267 = vrcp.pop %v5203
        %v5268 = vrcp.pop %v5204
        %v5269 = vrcp.pop %v5205
        %v5270 = vrcp.pop %v5206
        %v5271 = vrcp.pop %v5207
        %v5272 = vrcp.pop %v5208
        %v5273 = vrcp.pop %v5209
        %v5274 = vrcp.pop %v5210
        %v5275 = vrcp.pop %v5211
        %v5276 = vrcp.pop %v5212
        %v5277 = vrcp.pop %v5213
        %v5278 = vrcp.pop %v5214
        %v5279 = vrcp.pop %v5215
        %v5280 = vrcp.pop %v5216
        %v5281 = vrcp.pop %v5217
        %v5282 = vrcp.pop %v5218
        %v5283 = vrcp.pop %v5219
        %v5284 = vrcp.pop %v5220
        %v5285 = vrcp.pop %v5221
        %v5286 = vrcp.pop %v5222
        %v5287 = vrcp.pop %v5223
        %v5288 = vrcp.pop %v5224
        %v5289 = vrcp.pop %v5225
        %v5290 = vrcp.pop %v5226
        %v5291 = vrcp.pop %v5227
        %v5292 = vrcp.pop %v5228
        %v5293 = vrcp.pop %v5229
        %v5294 = vrcp.pop %v5230
        %v5295 = vrcp.pop %v5231
        %v5296 = vrcp.pop %v5232
        %v5297 = vrcp.pop %v5233
        %v5298 = vrcp.pop %v5234
        %v5299 = vrcp.pop %v5235
        %v5300 = vrcp.pop %v5236
        %v5301 = vrcp.pop %v5237
        %v5302 = vrcp.pop %v5238
        %v5303 = vrcp.pop %v5239
        %v5304 = vrcp.pop %v5240
        %v5305 = vrcp.pop %v5241
        %v5306 = vrcp.pop %v5242
        %v5307 = vrcp.pop %v5243
        %v5308 = vrcp.pop %v5244
        %v5309 = vrcp.pop %v5245
        %v5310 = vrcp.pop %v5246
        %v5311 = vrcp.pop %v5247
        %v5312 = vrcp.pop %v5248
        %v5313 = vrcp.pop %v5249
        %v5314 = vrcp.pop %v5250
        %v5315 = vrcp.pop %v5251
        %v5316 = vrcp.pop %v5252
        %v5317 = vrcp.pop %v5253
        %v5318 = vrcp.pop %v5254
        %v5319 = vrcp.pop %v5255
        %v5320 = vrcp.pop %v5256
        %v5321 = vrcp.pop %v5257
        %v5322 = vrcp.pop %v5258
        %v5323 = vrcp.pop %v5259
        %v5324 = vmul.f32 %v4587, %v5260
        %v5325 = vmul.f32 %v4589, %v5261
        %v5326 = vmul.f32 %v4700, %v5262
        %v5327 = vmul.f32 %v4702, %v5263
        %v5328 = vmul.f32 %v4591, %v5264
        %v5329 = vmul.f32 %v4593, %v5265
        %v5330 = vmul.f32 %v4704, %v5266
        %v5331 = vmul.f32 %v4706, %v5267
        %v5332 = vmul.f32 %v4597, %v5268
        %v5333 = vmul.f32 %v4599, %v5269
        %v5334 = vmul.f32 %v4710, %v5270
        %v5335 = vmul.f32 %v4712, %v5271
        %v5336 = vmul.f32 %v4601, %v5272
        %v5337 = vmul.f32 %v4603, %v5273
        %v5338 = vmul.f32 %v4714, %v5274
        %v5339 = vmul.f32 %v4716, %v5275
        %v5340 = vmul.f32 %v4607, %v5276
        %v5341 = vmul.f32 %v4609, %v5277
        %v5342 = vmul.f32 %v4720, %v5278
        %v5343 = vmul.f32 %v4722, %v5279
        %v5344 = vmul.f32 %v4611, %v5280
        %v5345 = vmul.f32 %v4613, %v5281
        %v5346 = vmul.f32 %v4724, %v5282
        %v5347 = vmul.f32 %v4726, %v5283
        %v5348 = vmul.f32 %v4617, %v5284
        %v5349 = vmul.f32 %v4619, %v5285
        %v5350 = vmul.f32 %v4730, %v5286
        %v5351 = vmul.f32 %v4732, %v5287
        %v5352 = vmul.f32 %v4621, %v5288
        %v5353 = vmul.f32 %v4623, %v5289
        %v5354 = vmul.f32 %v4734, %v5290
        %v5355 = vmul.f32 %v4736, %v5291
        %v5356 = vmul.f32 %v4627, %v5292
        %v5357 = vmul.f32 %v4629, %v5293
        %v5358 = vmul.f32 %v4740, %v5294
        %v5359 = vmul.f32 %v4742, %v5295
        %v5360 = vmul.f32 %v4631, %v5296
        %v5361 = vmul.f32 %v4633, %v5297
        %v5362 = vmul.f32 %v4744, %v5298
        %v5363 = vmul.f32 %v4746, %v5299
        %v5364 = vmul.f32 %v4637, %v5300
        %v5365 = vmul.f32 %v4639, %v5301
        %v5366 = vmul.f32 %v4750, %v5302
        %v5367 = vmul.f32 %v4752, %v5303
        %v5368 = vmul.f32 %v4641, %v5304
        %v5369 = vmul.f32 %v4643, %v5305
        %v5370 = vmul.f32 %v4754, %v5306
        %v5371 = vmul.f32 %v4756, %v5307
        %v5372 = vmul.f32 %v4647, %v5308
        %v5373 = vmul.f32 %v4649, %v5309
        %v5374 = vmul.f32 %v4760, %v5310
        %v5375 = vmul.f32 %v4762, %v5311
        %v5376 = vmul.f32 %v4651, %v5312
        %v5377 = vmul.f32 %v4653, %v5313
        %v5378 = vmul.f32 %v4764, %v5314
        %v5379 = vmul.f32 %v4766, %v5315
        %v5380 = vmul.f32 %v4657, %v5316
        %v5381 = vmul.f32 %v4659, %v5317
        %v5382 = vmul.f32 %v4770, %v5318
        %v5383 = vmul.f32 %v4772, %v5319
        %v5384 = vmul.f32 %v4661, %v5320
        %v5385 = vmul.f32 %v4663, %v5321
        %v5386 = vmul.f32 %v4774, %v5322
        %v5387 = vmul.f32 %v4776, %v5323
        %v5388 = vmul.f32 %v5324, %v4813
        %v5389 = vmul.f32 %v5325, %v4815
        %v5390 = vmul.f32 %v5326, %v4926
        %v5391 = vmul.f32 %v5327, %v4928
        %v5392 = vmul.f32 %v5328, %v4817
        %v5393 = vmul.f32 %v5329, %v4819
        %v5394 = vmul.f32 %v5330, %v4930
        %v5395 = vmul.f32 %v5331, %v4932
        %v5396 = vmul.f32 %v5332, %v4823
        %v5397 = vmul.f32 %v5333, %v4825
        %v5398 = vmul.f32 %v5334, %v4936
        %v5399 = vmul.f32 %v5335, %v4938
        %v5400 = vmul.f32 %v5336, %v4827
        %v5401 = vmul.f32 %v5337, %v4829
        %v5402 = vmul.f32 %v5338, %v4940
        %v5403 = vmul.f32 %v5339, %v4942
        %v5404 = vmul.f32 %v5340, %v4833
        %v5405 = vmul.f32 %v5341, %v4835
        %v5406 = vmul.f32 %v5342, %v4946
        %v5407 = vmul.f32 %v5343, %v4948
        %v5408 = vmul.f32 %v5344, %v4837
        %v5409 = vmul.f32 %v5345, %v4839
        %v5410 = vmul.f32 %v5346, %v4950
        %v5411 = vmul.f32 %v5347, %v4952
        %v5412 = vmul.f32 %v5348, %v4843
        %v5413 = vmul.f32 %v5349, %v4845
        %v5414 = vmul.f32 %v5350, %v4956
        %v5415 = vmul.f32 %v5351, %v4958
        %v5416 = vmul.f32 %v5352, %v4847
        %v5417 = vmul.f32 %v5353, %v4849
        %v5418 = vmul.f32 %v5354, %v4960
        %v5419 = vmul.f32 %v5355, %v4962
        %v5420 = vmul.f32 %v5356, %v4853
        %v5421 = vmul.f32 %v5357, %v4855
        %v5422 = vmul.f32 %v5358, %v4966
        %v5423 = vmul.f32 %v5359, %v4968
        %v5424 = vmul.f32 %v5360, %v4857
        %v5425 = vmul.f32 %v5361, %v4859
        %v5426 = vmul.f32 %v5362, %v4970
        %v5427 = vmul.f32 %v5363, %v4972
        %v5428 = vmul.f32 %v5364, %v4863
        %v5429 = vmul.f32 %v5365, %v4865
        %v5430 = vmul.f32 %v5366, %v4976
        %v5431 = vmul.f32 %v5367, %v4978
        %v5432 = vmul.f32 %v5368, %v4867
        %v5433 = vmul.f32 %v5369, %v4869
        %v5434 = vmul.f32 %v5370, %v4980
        %v5435 = vmul.f32 %v5371, %v4982
        %v5436 = vmul.f32 %v5372, %v4873
        %v5437 = vmul.f32 %v5373, %v4875
        %v5438 = vmul.f32 %v5374, %v4986
        %v5439 = vmul.f32 %v5375, %v4988
        %v5440 = vmul.f32 %v5376, %v4877
        %v5441 = vmul.f32 %v5377, %v4879
        %v5442 = vmul.f32 %v5378, %v4990
        %v5443 = vmul.f32 %v5379, %v4992
        %v5444 = vmul.f32 %v5380, %v4883
        %v5445 = vmul.f32 %v5381, %v4885
        %v5446 = vmul.f32 %v5382, %v4996
        %v5447 = vmul.f32 %v5383, %v4998
        %v5448 = vmul.f32 %v5384, %v4887
        %v5449 = vmul.f32 %v5385, %v4889
        %v5450 = vmul.f32 %v5386, %v5000
        %v5451 = vmul.f32 %v5387, %v5002
        %v5452 = vpack.c.bf16 %v5392, %v5388
        %v5453 = vpack.c.bf16 %v5393, %v5389
        %v5454 = vpack.c.bf16 %v5394, %v5390
        %v5455 = vpack.c.bf16 %v5395, %v5391
        %v5456 = vpack.c.bf16 %v5400, %v5396
        %v5457 = vpack.c.bf16 %v5401, %v5397
        %v5458 = vpack.c.bf16 %v5402, %v5398
        %v5459 = vpack.c.bf16 %v5403, %v5399
        %v5460 = vpack.c.bf16 %v5408, %v5404
        %v5461 = vpack.c.bf16 %v5409, %v5405
        %v5462 = vpack.c.bf16 %v5410, %v5406
        %v5463 = vpack.c.bf16 %v5411, %v5407
        %v5464 = vpack.c.bf16 %v5416, %v5412
        %v5465 = vpack.c.bf16 %v5417, %v5413
        %v5466 = vpack.c.bf16 %v5418, %v5414
        %v5467 = vpack.c.bf16 %v5419, %v5415
        %v5468 = vpack.c.bf16 %v5424, %v5420
        %v5469 = vpack.c.bf16 %v5425, %v5421
        %v5470 = vpack.c.bf16 %v5426, %v5422
        %v5471 = vpack.c.bf16 %v5427, %v5423
        %v5472 = vpack.c.bf16 %v5432, %v5428
        %v5473 = vpack.c.bf16 %v5433, %v5429
        %v5474 = vpack.c.bf16 %v5434, %v5430
        %v5475 = vpack.c.bf16 %v5435, %v5431
        %v5476 = vpack.c.bf16 %v5440, %v5436
        %v5477 = vpack.c.bf16 %v5441, %v5437
        %v5478 = vpack.c.bf16 %v5442, %v5438
        %v5479 = vpack.c.bf16 %v5443, %v5439
        %v5480 = vpack.c.bf16 %v5448, %v5444
        %v5481 = vpack.c.bf16 %v5449, %v5445
        %v5482 = vpack.c.bf16 %v5450, %v5446
        %v5483 = vpack.c.bf16 %v5451, %v5447
        %v5484 = vld [vmem:[#allocation12] sm:$0xff]
        %v5485 = vld [vmem:[#allocation12 + $0x8] sm:$0xff]
        %v5486 = vld [vmem:[#allocation12 + $0x10] sm:$0xff]
        %v5487 = vld [vmem:[#allocation12 + $0x18] sm:$0xff]
        %v5488 = vld [vmem:[#allocation12 + $0x20] sm:$0xff]
        %v5489 = vld [vmem:[#allocation12 + $0x28] sm:$0xff]
        %v5490 = vld [vmem:[#allocation12 + $0x30] sm:$0xff]
        %v5491 = vld [vmem:[#allocation12 + $0x38] sm:$0xff]
        %v5492 = vld [vmem:[#allocation12 + $0x40] sm:$0xff]
        %v5493 = vld [vmem:[#allocation12 + $0x48] sm:$0xff]
        %v5494 = vld [vmem:[#allocation12 + $0x50] sm:$0xff]
        %v5495 = vld [vmem:[#allocation12 + $0x58] sm:$0xff]
        %v5496 = vld [vmem:[#allocation12 + $0x60] sm:$0xff]
        %v5497 = vld [vmem:[#allocation12 + $0x68] sm:$0xff]
        %v5498 = vld [vmem:[#allocation12 + $0x70] sm:$0xff]
        %v5499 = vld [vmem:[#allocation12 + $0x78] sm:$0xff]
        %v5500 = vld [vmem:[#allocation12 + $0x80] sm:$0xff]
        %v5501 = vld [vmem:[#allocation12 + $0x88] sm:$0xff]
        %v5502 = vld [vmem:[#allocation12 + $0x90] sm:$0xff]
        %v5503 = vld [vmem:[#allocation12 + $0x98] sm:$0xff]
        %v5504 = vld [vmem:[#allocation12 + $0xa0] sm:$0xff]
        %v5505 = vld [vmem:[#allocation12 + $0xa8] sm:$0xff]
        %v5506 = vld [vmem:[#allocation12 + $0xb0] sm:$0xff]
        %v5507 = vld [vmem:[#allocation12 + $0xb8] sm:$0xff]
        %v5508 = vld [vmem:[#allocation12 + $0xc0] sm:$0xff]
        %v5509 = vld [vmem:[#allocation12 + $0xc8] sm:$0xff]
        %v5510 = vld [vmem:[#allocation12 + $0xd0] sm:$0xff]
        %v5511 = vld [vmem:[#allocation12 + $0xd8] sm:$0xff]
        %v5512 = vld [vmem:[#allocation12 + $0xe0] sm:$0xff]
        %v5513 = vld [vmem:[#allocation12 + $0xe8] sm:$0xff]
        %v5514 = vld [vmem:[#allocation12 + $0xf0] sm:$0xff]
        %v5515 = vld [vmem:[#allocation12 + $0xf8] sm:$0xff]
        %v5516 = vld [vmem:[#allocation12 + $0x100] sm:$0xff]
        %v5517 = vld [vmem:[#allocation12 + $0x108] sm:$0xff]
        %v5518 = vld [vmem:[#allocation12 + $0x110] sm:$0xff]
        %v5519 = vld [vmem:[#allocation12 + $0x118] sm:$0xff]
        %v5520 = vld [vmem:[#allocation12 + $0x120] sm:$0xff]
        %v5521 = vld [vmem:[#allocation12 + $0x128] sm:$0xff]
        %v5522 = vld [vmem:[#allocation12 + $0x130] sm:$0xff]
        %v5523 = vld [vmem:[#allocation12 + $0x138] sm:$0xff]
        %v5524 = vld [vmem:[#allocation12 + $0x140] sm:$0xff]
        %v5525 = vld [vmem:[#allocation12 + $0x148] sm:$0xff]
        %v5526 = vld [vmem:[#allocation12 + $0x150] sm:$0xff]
        %v5527 = vld [vmem:[#allocation12 + $0x158] sm:$0xff]
        %v5528 = vld [vmem:[#allocation12 + $0x160] sm:$0xff]
        %v5529 = vld [vmem:[#allocation12 + $0x168] sm:$0xff]
        %v5530 = vld [vmem:[#allocation12 + $0x170] sm:$0xff]
        %v5531 = vld [vmem:[#allocation12 + $0x178] sm:$0xff]
        %v5532 = vld [vmem:[#allocation12 + $0x180] sm:$0xff]
        %v5533 = vld [vmem:[#allocation12 + $0x188] sm:$0xff]
        %v5534 = vld [vmem:[#allocation12 + $0x190] sm:$0xff]
        %v5535 = vld [vmem:[#allocation12 + $0x198] sm:$0xff]
        %v5536 = vld [vmem:[#allocation12 + $0x1a0] sm:$0xff]
        %v5537 = vld [vmem:[#allocation12 + $0x1a8] sm:$0xff]
        %v5538 = vld [vmem:[#allocation12 + $0x1b0] sm:$0xff]
        %v5539 = vld [vmem:[#allocation12 + $0x1b8] sm:$0xff]
        %v5540 = vld [vmem:[#allocation12 + $0x1c0] sm:$0xff]
        %v5541 = vld [vmem:[#allocation12 + $0x1c8] sm:$0xff]
        %v5542 = vld [vmem:[#allocation12 + $0x1d0] sm:$0xff]
        %v5543 = vld [vmem:[#allocation12 + $0x1d8] sm:$0xff]
        %v5544 = vld [vmem:[#allocation12 + $0x1e0] sm:$0xff]
        %v5545 = vld [vmem:[#allocation12 + $0x1e8] sm:$0xff]
        %v5546 = vld [vmem:[#allocation12 + $0x1f0] sm:$0xff]
        %v5547 = vld [vmem:[#allocation12 + $0x1f8] sm:$0xff]
        %v5612 = vunpack.c.l.b16 %v5484
        %v5613 = vunpack.c.h.b16 %v5484
        %v5614 = vunpack.c.l.b16 %v5485
        %v5615 = vunpack.c.h.b16 %v5485
        %v5616 = vunpack.c.l.b16 %v5486
        %v5617 = vunpack.c.h.b16 %v5486
        %v5618 = vunpack.c.l.b16 %v5487
        %v5619 = vunpack.c.h.b16 %v5487
        %v5620 = vunpack.c.l.b16 %v5488
        %v5621 = vunpack.c.h.b16 %v5488
        %v5622 = vunpack.c.l.b16 %v5489
        %v5623 = vunpack.c.h.b16 %v5489
        %v5624 = vunpack.c.l.b16 %v5490
        %v5625 = vunpack.c.h.b16 %v5490
        %v5626 = vunpack.c.l.b16 %v5491
        %v5627 = vunpack.c.h.b16 %v5491
        %v5628 = vunpack.c.l.b16 %v5492
        %v5629 = vunpack.c.h.b16 %v5492
        %v5630 = vunpack.c.l.b16 %v5493
        %v5631 = vunpack.c.h.b16 %v5493
        %v5632 = vunpack.c.l.b16 %v5494
        %v5633 = vunpack.c.h.b16 %v5494
        %v5634 = vunpack.c.l.b16 %v5495
        %v5635 = vunpack.c.h.b16 %v5495
        %v5636 = vunpack.c.l.b16 %v5496
        %v5637 = vunpack.c.h.b16 %v5496
        %v5638 = vunpack.c.l.b16 %v5497
        %v5639 = vunpack.c.h.b16 %v5497
        %v5640 = vunpack.c.l.b16 %v5498
        %v5641 = vunpack.c.h.b16 %v5498
        %v5642 = vunpack.c.l.b16 %v5499
        %v5643 = vunpack.c.h.b16 %v5499
        %v5644 = vunpack.c.l.b16 %v5500
        %v5645 = vunpack.c.h.b16 %v5500
        %v5646 = vunpack.c.l.b16 %v5501
        %v5647 = vunpack.c.h.b16 %v5501
        %v5648 = vunpack.c.l.b16 %v5502
        %v5649 = vunpack.c.h.b16 %v5502
        %v5650 = vunpack.c.l.b16 %v5503
        %v5651 = vunpack.c.h.b16 %v5503
        %v5652 = vunpack.c.l.b16 %v5504
        %v5653 = vunpack.c.h.b16 %v5504
        %v5654 = vunpack.c.l.b16 %v5505
        %v5655 = vunpack.c.h.b16 %v5505
        %v5656 = vunpack.c.l.b16 %v5506
        %v5657 = vunpack.c.h.b16 %v5506
        %v5658 = vunpack.c.l.b16 %v5507
        %v5659 = vunpack.c.h.b16 %v5507
        %v5660 = vunpack.c.l.b16 %v5508
        %v5661 = vunpack.c.h.b16 %v5508
        %v5662 = vunpack.c.l.b16 %v5509
        %v5663 = vunpack.c.h.b16 %v5509
        %v5664 = vunpack.c.l.b16 %v5510
        %v5665 = vunpack.c.h.b16 %v5510
        %v5666 = vunpack.c.l.b16 %v5511
        %v5667 = vunpack.c.h.b16 %v5511
        %v5668 = vunpack.c.l.b16 %v5512
        %v5669 = vunpack.c.h.b16 %v5512
        %v5670 = vunpack.c.l.b16 %v5513
        %v5671 = vunpack.c.h.b16 %v5513
        %v5672 = vunpack.c.l.b16 %v5514
        %v5673 = vunpack.c.h.b16 %v5514
        %v5674 = vunpack.c.l.b16 %v5515
        %v5675 = vunpack.c.h.b16 %v5515
        %v5676 = vunpack.c.l.b16 %v5516
        %v5677 = vunpack.c.h.b16 %v5516
        %v5678 = vunpack.c.l.b16 %v5517
        %v5679 = vunpack.c.h.b16 %v5517
        %v5680 = vunpack.c.l.b16 %v5518
        %v5681 = vunpack.c.h.b16 %v5518
        %v5682 = vunpack.c.l.b16 %v5519
        %v5683 = vunpack.c.h.b16 %v5519
        %v5684 = vunpack.c.l.b16 %v5520
        %v5685 = vunpack.c.h.b16 %v5520
        %v5686 = vunpack.c.l.b16 %v5521
        %v5687 = vunpack.c.h.b16 %v5521
        %v5688 = vunpack.c.l.b16 %v5522
        %v5689 = vunpack.c.h.b16 %v5522
        %v5690 = vunpack.c.l.b16 %v5523
        %v5691 = vunpack.c.h.b16 %v5523
        %v5692 = vunpack.c.l.b16 %v5524
        %v5693 = vunpack.c.h.b16 %v5524
        %v5694 = vunpack.c.l.b16 %v5525
        %v5695 = vunpack.c.h.b16 %v5525
        %v5696 = vunpack.c.l.b16 %v5526
        %v5697 = vunpack.c.h.b16 %v5526
        %v5698 = vunpack.c.l.b16 %v5527
        %v5699 = vunpack.c.h.b16 %v5527
        %v5700 = vunpack.c.l.b16 %v5528
        %v5701 = vunpack.c.h.b16 %v5528
        %v5702 = vunpack.c.l.b16 %v5529
        %v5703 = vunpack.c.h.b16 %v5529
        %v5704 = vunpack.c.l.b16 %v5530
        %v5705 = vunpack.c.h.b16 %v5530
        %v5706 = vunpack.c.l.b16 %v5531
        %v5707 = vunpack.c.h.b16 %v5531
        %v5708 = vunpack.c.l.b16 %v5532
        %v5709 = vunpack.c.h.b16 %v5532
        %v5710 = vunpack.c.l.b16 %v5533
        %v5711 = vunpack.c.h.b16 %v5533
        %v5712 = vunpack.c.l.b16 %v5534
        %v5713 = vunpack.c.h.b16 %v5534
        %v5714 = vunpack.c.l.b16 %v5535
        %v5715 = vunpack.c.h.b16 %v5535
        %v5716 = vunpack.c.l.b16 %v5536
        %v5717 = vunpack.c.h.b16 %v5536
        %v5718 = vunpack.c.l.b16 %v5537
        %v5719 = vunpack.c.h.b16 %v5537
        %v5720 = vunpack.c.l.b16 %v5538
        %v5721 = vunpack.c.h.b16 %v5538
        %v5722 = vunpack.c.l.b16 %v5539
        %v5723 = vunpack.c.h.b16 %v5539
        %v5724 = vunpack.c.l.b16 %v5540
        %v5725 = vunpack.c.h.b16 %v5540
        %v5726 = vunpack.c.l.b16 %v5541
        %v5727 = vunpack.c.h.b16 %v5541
        %v5728 = vunpack.c.l.b16 %v5542
        %v5729 = vunpack.c.h.b16 %v5542
        %v5730 = vunpack.c.l.b16 %v5543
        %v5731 = vunpack.c.h.b16 %v5543
        %v5732 = vunpack.c.l.b16 %v5544
        %v5733 = vunpack.c.h.b16 %v5544
        %v5734 = vunpack.c.l.b16 %v5545
        %v5735 = vunpack.c.h.b16 %v5545
        %v5736 = vunpack.c.l.b16 %v5546
        %v5737 = vunpack.c.h.b16 %v5546
        %v5738 = vunpack.c.l.b16 %v5547
        %v5739 = vunpack.c.h.b16 %v5547
        %v5740 = vpack.c.b16 %v5614, %v5612
        %v5741 = vpack.c.b16 %v5615, %v5613
        %v5742 = vpack.c.b16 %v5618, %v5616
        %v5743 = vpack.c.b16 %v5619, %v5617
        %v5744 = vpack.c.b16 %v5622, %v5620
        %v5745 = vpack.c.b16 %v5623, %v5621
        %v5746 = vpack.c.b16 %v5626, %v5624
        %v5747 = vpack.c.b16 %v5627, %v5625
        %v5748 = vpack.c.b16 %v5630, %v5628
        %v5749 = vpack.c.b16 %v5631, %v5629
        %v5750 = vpack.c.b16 %v5634, %v5632
        %v5751 = vpack.c.b16 %v5635, %v5633
        %v5752 = vpack.c.b16 %v5638, %v5636
        %v5753 = vpack.c.b16 %v5639, %v5637
        %v5754 = vpack.c.b16 %v5642, %v5640
        %v5755 = vpack.c.b16 %v5643, %v5641
        %v5756 = vpack.c.b16 %v5646, %v5644
        %v5757 = vpack.c.b16 %v5647, %v5645
        %v5758 = vpack.c.b16 %v5650, %v5648
        %v5759 = vpack.c.b16 %v5651, %v5649
        %v5760 = vpack.c.b16 %v5654, %v5652
        %v5761 = vpack.c.b16 %v5655, %v5653
        %v5762 = vpack.c.b16 %v5658, %v5656
        %v5763 = vpack.c.b16 %v5659, %v5657
        %v5764 = vpack.c.b16 %v5662, %v5660
        %v5765 = vpack.c.b16 %v5663, %v5661
        %v5766 = vpack.c.b16 %v5666, %v5664
        %v5767 = vpack.c.b16 %v5667, %v5665
        %v5768 = vpack.c.b16 %v5670, %v5668
        %v5769 = vpack.c.b16 %v5671, %v5669
        %v5770 = vpack.c.b16 %v5674, %v5672
        %v5771 = vpack.c.b16 %v5675, %v5673
        %v5772 = vpack.c.b16 %v5678, %v5676
        %v5773 = vpack.c.b16 %v5679, %v5677
        %v5774 = vpack.c.b16 %v5682, %v5680
        %v5775 = vpack.c.b16 %v5683, %v5681
        %v5776 = vpack.c.b16 %v5686, %v5684
        %v5777 = vpack.c.b16 %v5687, %v5685
        %v5778 = vpack.c.b16 %v5690, %v5688
        %v5779 = vpack.c.b16 %v5691, %v5689
        %v5780 = vpack.c.b16 %v5694, %v5692
        %v5781 = vpack.c.b16 %v5695, %v5693
        %v5782 = vpack.c.b16 %v5698, %v5696
        %v5783 = vpack.c.b16 %v5699, %v5697
        %v5784 = vpack.c.b16 %v5702, %v5700
        %v5785 = vpack.c.b16 %v5703, %v5701
        %v5786 = vpack.c.b16 %v5706, %v5704
        %v5787 = vpack.c.b16 %v5707, %v5705
        %v5788 = vpack.c.b16 %v5710, %v5708
        %v5789 = vpack.c.b16 %v5711, %v5709
        %v5790 = vpack.c.b16 %v5714, %v5712
        %v5791 = vpack.c.b16 %v5715, %v5713
        %v5792 = vpack.c.b16 %v5718, %v5716
        %v5793 = vpack.c.b16 %v5719, %v5717
        %v5794 = vpack.c.b16 %v5722, %v5720
        %v5795 = vpack.c.b16 %v5723, %v5721
        %v5796 = vpack.c.b16 %v5726, %v5724
        %v5797 = vpack.c.b16 %v5727, %v5725
        %v5798 = vpack.c.b16 %v5730, %v5728
        %v5799 = vpack.c.b16 %v5731, %v5729
        %v5800 = vpack.c.b16 %v5734, %v5732
        %v5801 = vpack.c.b16 %v5735, %v5733
        %v5802 = vpack.c.b16 %v5738, %v5736
        %v5803 = vpack.c.b16 %v5739, %v5737
        %5868 = vmatprep.subr.bf16.mxu0 %v5755
        %5869 = vmatpush1.bf16.msra.mxu0 %v5754
        %5870 = vmatprep.subr.bf16.mxu0 %v5753
        %5871 = vmatpush1.bf16.msra.mxu0 %v5752
        %5872 = vmatprep.subr.bf16.mxu0 %v5751
        %5873 = vmatpush1.bf16.msra.mxu0 %v5750
        %5874 = vmatprep.subr.bf16.mxu0 %v5749
        %5875 = vmatpush1.bf16.msra.mxu0 %v5748
        %5876 = vmatprep.subr.bf16.mxu0 %v5747
        %5877 = vmatpush1.bf16.msra.mxu0 %v5746
        %5878 = vmatprep.subr.bf16.mxu0 %v5745
        %5879 = vmatpush1.bf16.msra.mxu0 %v5744
        %5880 = vmatprep.subr.bf16.mxu0 %v5743
        %5881 = vmatpush1.bf16.msra.mxu0 %v5742
        %5882 = vmatprep.subr.bf16.mxu0 %v5741
        %5883 = vmatpush1.bf16.msra.mxu0 %v5740
        %5884 = vmatprep.subr.bf16.mxu0 %v5771
        %5885 = vmatpush2.bf16.msra.mxu0 %v5770
        %5886 = vmatprep.subr.bf16.mxu0 %v5769
        %5887 = vmatpush2.bf16.msra.mxu0 %v5768
        %5888 = vmatprep.subr.bf16.mxu0 %v5767
        %5889 = vmatpush2.bf16.msra.mxu0 %v5766
        %5890 = vmatprep.subr.bf16.mxu0 %v5765
        %5891 = vmatpush2.bf16.msra.mxu0 %v5764
        %5892 = vmatprep.subr.bf16.mxu0 %v5763
        %5893 = vmatpush2.bf16.msra.mxu0 %v5762
        %5894 = vmatprep.subr.bf16.mxu0 %v5761
        %5895 = vmatpush2.bf16.msra.mxu0 %v5760
        %5896 = vmatprep.subr.bf16.mxu0 %v5759
        %5897 = vmatpush2.bf16.msra.mxu0 %v5758
        %5898 = vmatprep.subr.bf16.mxu0 %v5757
        %5899 = vmatpush2.bf16.msra.mxu0 %v5756
        %5900 = vmatprep.mubr.bf16.mxu0 %v5453
        %5901 = vmatmul.mubr.bf16.gmra.mxu0 %v5452
        %v5902 = vpop.f32.mrf.mxu0
        %v5903 = vadd.f32 0.0, %v5902
        %v5904 = vpop.f32.mrf.mxu0
        %v5905 = vadd.f32 0.0, %v5904
        %v5906 = vpop.f32.mrf.mxu0
        %v5907 = vadd.f32 0.0, %v5906
        %v5908 = vpop.f32.mrf.mxu0
        %v5909 = vadd.f32 0.0, %v5908
        %5910 = vmatprep.mubr.bf16.mxu0 %v5457
        %5911 = vmatmul.mubr.bf16.gmra.mxu0 %v5456
        %v5912 = vpop.f32.mrf.mxu0
        %v5913 = vadd.f32 0.0, %v5912
        %v5914 = vpop.f32.mrf.mxu0
        %v5915 = vadd.f32 0.0, %v5914
        %v5916 = vpop.f32.mrf.mxu0
        %v5917 = vadd.f32 0.0, %v5916
        %v5918 = vpop.f32.mrf.mxu0
        %v5919 = vadd.f32 0.0, %v5918
        %5920 = vmatprep.mubr.bf16.mxu0 %v5461
        %5921 = vmatmul.mubr.bf16.gmra.mxu0 %v5460
        %v5922 = vpop.f32.mrf.mxu0
        %v5923 = vadd.f32 0.0, %v5922
        %v5924 = vpop.f32.mrf.mxu0
        %v5925 = vadd.f32 0.0, %v5924
        %v5926 = vpop.f32.mrf.mxu0
        %v5927 = vadd.f32 0.0, %v5926
        %v5928 = vpop.f32.mrf.mxu0
        %v5929 = vadd.f32 0.0, %v5928
        %5930 = vmatprep.mubr.bf16.mxu0 %v5465
        %5931 = vmatmul.mubr.bf16.gmra.mxu0 %v5464
        %v5932 = vpop.f32.mrf.mxu0
        %v5933 = vadd.f32 0.0, %v5932
        %v5934 = vpop.f32.mrf.mxu0
        %v5935 = vadd.f32 0.0, %v5934
        %v5936 = vpop.f32.mrf.mxu0
        %v5937 = vadd.f32 0.0, %v5936
        %v5938 = vpop.f32.mrf.mxu0
        %v5939 = vadd.f32 0.0, %v5938
        %5940 = vmatprep.mubr.bf16.mxu0 %v5469
        %5941 = vmatmul.mubr.bf16.gmra.mxu0 %v5468
        %v5942 = vpop.f32.mrf.mxu0
        %v5943 = vadd.f32 0.0, %v5942
        %v5944 = vpop.f32.mrf.mxu0
        %v5945 = vadd.f32 0.0, %v5944
        %v5946 = vpop.f32.mrf.mxu0
        %v5947 = vadd.f32 0.0, %v5946
        %v5948 = vpop.f32.mrf.mxu0
        %v5949 = vadd.f32 0.0, %v5948
        %5950 = vmatprep.mubr.bf16.mxu0 %v5473
        %5951 = vmatmul.mubr.bf16.gmra.mxu0 %v5472
        %v5952 = vpop.f32.mrf.mxu0
        %v5953 = vadd.f32 0.0, %v5952
        %v5954 = vpop.f32.mrf.mxu0
        %v5955 = vadd.f32 0.0, %v5954
        %v5956 = vpop.f32.mrf.mxu0
        %v5957 = vadd.f32 0.0, %v5956
        %v5958 = vpop.f32.mrf.mxu0
        %v5959 = vadd.f32 0.0, %v5958
        %5960 = vmatprep.mubr.bf16.mxu0 %v5477
        %5961 = vmatmul.mubr.bf16.gmra.mxu0 %v5476
        %v5962 = vpop.f32.mrf.mxu0
        %v5963 = vadd.f32 0.0, %v5962
        %v5964 = vpop.f32.mrf.mxu0
        %v5965 = vadd.f32 0.0, %v5964
        %v5966 = vpop.f32.mrf.mxu0
        %v5967 = vadd.f32 0.0, %v5966
        %v5968 = vpop.f32.mrf.mxu0
        %v5969 = vadd.f32 0.0, %v5968
        %5970 = vmatprep.mubr.bf16.mxu0 %v5481
        %5971 = vmatmul.mubr.bf16.gmra.mxu0 %v5480
        %v5972 = vpop.f32.mrf.mxu0
        %v5973 = vadd.f32 0.0, %v5972
        %v5974 = vpop.f32.mrf.mxu0
        %v5975 = vadd.f32 0.0, %v5974
        %v5976 = vpop.f32.mrf.mxu0
        %v5977 = vadd.f32 0.0, %v5976
        %v5978 = vpop.f32.mrf.mxu0
        %v5979 = vadd.f32 0.0, %v5978
        %5980 = vdwg.mxu0
        %5981 = vmatprep.subr.bf16.mxu0 %v5787
        %5982 = vmatpush1.bf16.msra.mxu0 %v5786
        %5983 = vmatprep.subr.bf16.mxu0 %v5785
        %5984 = vmatpush1.bf16.msra.mxu0 %v5784
        %5985 = vmatprep.subr.bf16.mxu0 %v5783
        %5986 = vmatpush1.bf16.msra.mxu0 %v5782
        %5987 = vmatprep.subr.bf16.mxu0 %v5781
        %5988 = vmatpush1.bf16.msra.mxu0 %v5780
        %5989 = vmatprep.subr.bf16.mxu0 %v5779
        %5990 = vmatpush1.bf16.msra.mxu0 %v5778
        %5991 = vmatprep.subr.bf16.mxu0 %v5777
        %5992 = vmatpush1.bf16.msra.mxu0 %v5776
        %5993 = vmatprep.subr.bf16.mxu0 %v5775
        %5994 = vmatpush1.bf16.msra.mxu0 %v5774
        %5995 = vmatprep.subr.bf16.mxu0 %v5773
        %5996 = vmatpush1.bf16.msra.mxu0 %v5772
        %5997 = vmatprep.subr.bf16.mxu0 %v5803
        %5998 = vmatpush2.bf16.msra.mxu0 %v5802
        %5999 = vmatprep.subr.bf16.mxu0 %v5801
        %6000 = vmatpush2.bf16.msra.mxu0 %v5800
        %6001 = vmatprep.subr.bf16.mxu0 %v5799
        %6002 = vmatpush2.bf16.msra.mxu0 %v5798
        %6003 = vmatprep.subr.bf16.mxu0 %v5797
        %6004 = vmatpush2.bf16.msra.mxu0 %v5796
        %6005 = vmatprep.subr.bf16.mxu0 %v5795
        %6006 = vmatpush2.bf16.msra.mxu0 %v5794
        %6007 = vmatprep.subr.bf16.mxu0 %v5793
        %6008 = vmatpush2.bf16.msra.mxu0 %v5792
        %6009 = vmatprep.subr.bf16.mxu0 %v5791
        %6010 = vmatpush2.bf16.msra.mxu0 %v5790
        %6011 = vmatprep.subr.bf16.mxu0 %v5789
        %6012 = vmatpush2.bf16.msra.mxu0 %v5788
        %6013 = vmatprep.mubr.bf16.mxu0 %v5455
        %6014 = vmatmul.mubr.bf16.gmra.mxu0 %v5454
        %v6015 = vpop.f32.mrf.mxu0
        %v6016 = vadd.f32 %v5903, %v6015
        %v6017 = vpop.f32.mrf.mxu0
        %v6018 = vadd.f32 %v5905, %v6017
        %v6019 = vpop.f32.mrf.mxu0
        %v6020 = vadd.f32 %v5907, %v6019
        %v6021 = vpop.f32.mrf.mxu0
        %v6022 = vadd.f32 %v5909, %v6021
        %6023 = vmatprep.mubr.bf16.mxu0 %v5459
        %6024 = vmatmul.mubr.bf16.gmra.mxu0 %v5458
        %v6025 = vpop.f32.mrf.mxu0
        %v6026 = vadd.f32 %v5913, %v6025
        %v6027 = vpop.f32.mrf.mxu0
        %v6028 = vadd.f32 %v5915, %v6027
        %v6029 = vpop.f32.mrf.mxu0
        %v6030 = vadd.f32 %v5917, %v6029
        %v6031 = vpop.f32.mrf.mxu0
        %v6032 = vadd.f32 %v5919, %v6031
        %6033 = vmatprep.mubr.bf16.mxu0 %v5463
        %6034 = vmatmul.mubr.bf16.gmra.mxu0 %v5462
        %v6035 = vpop.f32.mrf.mxu0
        %v6036 = vadd.f32 %v5923, %v6035
        %v6037 = vpop.f32.mrf.mxu0
        %v6038 = vadd.f32 %v5925, %v6037
        %v6039 = vpop.f32.mrf.mxu0
        %v6040 = vadd.f32 %v5927, %v6039
        %v6041 = vpop.f32.mrf.mxu0
        %v6042 = vadd.f32 %v5929, %v6041
        %6043 = vmatprep.mubr.bf16.mxu0 %v5467
        %6044 = vmatmul.mubr.bf16.gmra.mxu0 %v5466
        %v6045 = vpop.f32.mrf.mxu0
        %v6046 = vadd.f32 %v5933, %v6045
        %v6047 = vpop.f32.mrf.mxu0
        %v6048 = vadd.f32 %v5935, %v6047
        %v6049 = vpop.f32.mrf.mxu0
        %v6050 = vadd.f32 %v5937, %v6049
        %v6051 = vpop.f32.mrf.mxu0
        %v6052 = vadd.f32 %v5939, %v6051
        %6053 = vmatprep.mubr.bf16.mxu0 %v5471
        %6054 = vmatmul.mubr.bf16.gmra.mxu0 %v5470
        %v6055 = vpop.f32.mrf.mxu0
        %v6056 = vadd.f32 %v5943, %v6055
        %v6057 = vpop.f32.mrf.mxu0
        %v6058 = vadd.f32 %v5945, %v6057
        %v6059 = vpop.f32.mrf.mxu0
        %v6060 = vadd.f32 %v5947, %v6059
        %v6061 = vpop.f32.mrf.mxu0
        %v6062 = vadd.f32 %v5949, %v6061
        %6063 = vmatprep.mubr.bf16.mxu0 %v5475
        %6064 = vmatmul.mubr.bf16.gmra.mxu0 %v5474
        %v6065 = vpop.f32.mrf.mxu0
        %v6066 = vadd.f32 %v5953, %v6065
        %v6067 = vpop.f32.mrf.mxu0
        %v6068 = vadd.f32 %v5955, %v6067
        %v6069 = vpop.f32.mrf.mxu0
        %v6070 = vadd.f32 %v5957, %v6069
        %v6071 = vpop.f32.mrf.mxu0
        %v6072 = vadd.f32 %v5959, %v6071
        %6073 = vmatprep.mubr.bf16.mxu0 %v5479
        %6074 = vmatmul.mubr.bf16.gmra.mxu0 %v5478
        %v6075 = vpop.f32.mrf.mxu0
        %v6076 = vadd.f32 %v5963, %v6075
        %v6077 = vpop.f32.mrf.mxu0
        %v6078 = vadd.f32 %v5965, %v6077
        %v6079 = vpop.f32.mrf.mxu0
        %v6080 = vadd.f32 %v5967, %v6079
        %v6081 = vpop.f32.mrf.mxu0
        %v6082 = vadd.f32 %v5969, %v6081
        %6083 = vmatprep.mubr.bf16.mxu0 %v5483
        %6084 = vmatmul.mubr.bf16.gmra.mxu0 %v5482
        %v6085 = vpop.f32.mrf.mxu0
        %v6086 = vadd.f32 %v5973, %v6085
        %v6087 = vpop.f32.mrf.mxu0
        %v6088 = vadd.f32 %v5975, %v6087
        %v6089 = vpop.f32.mrf.mxu0
        %v6090 = vadd.f32 %v5977, %v6089
        %v6091 = vpop.f32.mrf.mxu0
        %v6092 = vadd.f32 %v5979, %v6091
        %6093 = vdwg.mxu0
        %v6094 = vadd.f32 %v3533, %v6016
        %v6095 = vadd.f32 %v3534, %v6018
        %v6096 = vadd.f32 %v3535, %v6020
        %v6097 = vadd.f32 %v3536, %v6022
        %v6098 = vadd.f32 %v3537, %v6026
        %v6099 = vadd.f32 %v3538, %v6028
        %v6100 = vadd.f32 %v3539, %v6030
        %v6101 = vadd.f32 %v3540, %v6032
        %v6102 = vadd.f32 %v3541, %v6036
        %v6103 = vadd.f32 %v3542, %v6038
        %v6104 = vadd.f32 %v3543, %v6040
        %v6105 = vadd.f32 %v3544, %v6042
        %v6106 = vadd.f32 %v3545, %v6046
        %v6107 = vadd.f32 %v3546, %v6048
        %v6108 = vadd.f32 %v3547, %v6050
        %v6109 = vadd.f32 %v3548, %v6052
        %v6110 = vadd.f32 %v3549, %v6056
        %v6111 = vadd.f32 %v3550, %v6058
        %v6112 = vadd.f32 %v3551, %v6060
        %v6113 = vadd.f32 %v3552, %v6062
        %v6114 = vadd.f32 %v3553, %v6066
        %v6115 = vadd.f32 %v3554, %v6068
        %v6116 = vadd.f32 %v3555, %v6070
        %v6117 = vadd.f32 %v3556, %v6072
        %v6118 = vadd.f32 %v3557, %v6076
        %v6119 = vadd.f32 %v3558, %v6078
        %v6120 = vadd.f32 %v3559, %v6080
        %v6121 = vadd.f32 %v3560, %v6082
        %v6122 = vadd.f32 %v3561, %v6086
        %v6123 = vadd.f32 %v3562, %v6088
        %v6124 = vadd.f32 %v3563, %v6090
        %v6125 = vadd.f32 %v3564, %v6092
        %6126 = vst [vmem:[%s450] sm:$0xff] %v6094
        %6127 = vst [vmem:[%s450 + $0x8] sm:$0xff] %v6095
        %6128 = vst [vmem:[%s450 + $0x10] sm:$0xff] %v6096
        %6129 = vst [vmem:[%s450 + $0x18] sm:$0xff] %v6097
        %6130 = vst [vmem:[%s450 + $0x20] sm:$0xff] %v6098
        %6131 = vst [vmem:[%s450 + $0x28] sm:$0xff] %v6099
        %6132 = vst [vmem:[%s450 + $0x30] sm:$0xff] %v6100
        %6133 = vst [vmem:[%s450 + $0x38] sm:$0xff] %v6101
        %6134 = vst [vmem:[%s450 + $0x40] sm:$0xff] %v6102
        %6135 = vst [vmem:[%s450 + $0x48] sm:$0xff] %v6103
        %6136 = vst [vmem:[%s450 + $0x50] sm:$0xff] %v6104
        %6137 = vst [vmem:[%s450 + $0x58] sm:$0xff] %v6105
        %6138 = vst [vmem:[%s450 + $0x60] sm:$0xff] %v6106
        %6139 = vst [vmem:[%s450 + $0x68] sm:$0xff] %v6107
        %6140 = vst [vmem:[%s450 + $0x70] sm:$0xff] %v6108
        %6141 = vst [vmem:[%s450 + $0x78] sm:$0xff] %v6109
        %6142 = vst [vmem:[%s450 + $0x80] sm:$0xff] %v6110
        %6143 = vst [vmem:[%s450 + $0x88] sm:$0xff] %v6111
        %6144 = vst [vmem:[%s450 + $0x90] sm:$0xff] %v6112
        %6145 = vst [vmem:[%s450 + $0x98] sm:$0xff] %v6113
        %6146 = vst [vmem:[%s450 + $0xa0] sm:$0xff] %v6114
        %6147 = vst [vmem:[%s450 + $0xa8] sm:$0xff] %v6115
        %6148 = vst [vmem:[%s450 + $0xb0] sm:$0xff] %v6116
        %6149 = vst [vmem:[%s450 + $0xb8] sm:$0xff] %v6117
        %6150 = vst [vmem:[%s450 + $0xc0] sm:$0xff] %v6118
        %6151 = vst [vmem:[%s450 + $0xc8] sm:$0xff] %v6119
        %6152 = vst [vmem:[%s450 + $0xd0] sm:$0xff] %v6120
        %6153 = vst [vmem:[%s450 + $0xd8] sm:$0xff] %v6121
        %6154 = vst [vmem:[%s450 + $0xe0] sm:$0xff] %v6122
        %6155 = vst [vmem:[%s450 + $0xe8] sm:$0xff] %v6123
        %6156 = vst [vmem:[%s450 + $0xf0] sm:$0xff] %v6124
        %6157 = vst [vmem:[%s450 + $0xf8] sm:$0xff] %v6125
        %s6158 = sand.u32 %s232, 1
        %s6159 = scalar_lea.sflag [#allocation5], %s6158
        %s6160 = sand.u32 %s232, 1
        %s6161 = smul.addr %s6160, 256
        %s6162 = scalar_lea.vmem [#allocation17], %s6161
        // Predicated region
        $region89: #{tpu_custom_call.1} parent=55 // pred_check
          %p6163 = pneg %p242
        $region90: #{tpu_custom_call.1} parent=55 // pred_check_branch
          %6165 = sbr.rel (%p6163) target = $region92
        $region91: #{tpu_custom_call.1} parent=55 // pred_region
          %s6167 = ssub.s32 4096, 4096
          %6168 = vsyncadd %s6159, %s6167
          %s6169 = smul.addr %s30, 32
          %s6170 = smul.addr %s6169, 128
          %s6171 = scalar_lea.hbm %s9, %s6170
          %s6172 = sshll.u32 %s6162, 4
          %s6173 = int_to_ptr.vmem [resolvable:$true] %s6172
          %6178 = dma.vmem_to_hbm [thread:$0]  %s6173, 4096, %s6171, %s6159, 256, 256, 16
        $region92: #{tpu_custom_call.1} parent=55 // pred_fallthru
          _
      $region56: #{tpu_custom_call.1} parent=5 // pred_fallthru
        _
      %p6179 = scmp.le.s32.totalorder 2, %s25
      // Predicated region
      $region93: #{tpu_custom_call.1} parent=5 // pred_check
        %p6180 = pneg %p6179
      $region94: #{tpu_custom_call.1} parent=5 // pred_check_branch
        %6182 = sbr.rel (%p6180) target = $region96
      $region95: #{tpu_custom_call.1} parent=5 // pred_region
        %s6183 = ssub.s32 %s25, 2
        // Predicated region
        $region97: #{tpu_custom_call.1} parent=95 // pred_check
          %p6184 = pneg %p248
        $region98: #{tpu_custom_call.1} parent=95 // pred_check_branch
          %6186 = sbr.rel (%p6184) target = $region100
        $region99: #{tpu_custom_call.1} parent=95 // pred_region
          %s6187 = sand.u32 %s233, 1
          %s6188 = scalar_lea.sflag [#allocation5], %s6187
          %s6189 = sand.u32 %s233, 1
          %s6190 = smul.addr %s6189, 256
          %s6191 = scalar_lea.vmem [#allocation17], %s6190
          %6192 = dma.done %s6188, 4096
        $region100: #{tpu_custom_call.1} parent=95 // pred_fallthru
          _
      $region96: #{tpu_custom_call.1} parent=5 // pred_fallthru
        _
    $region6: #{tpu_custom_call.1} parent=1 // loop_footer
      %s29 = sadd.s32 1, %s25
    $region7: #{tpu_custom_call.1} parent=1 // loop_footer_branch
      %24 = sbr.rel target = $region3
    $region8: #{tpu_custom_call.1} parent=1 // loop_exit
      _
    %6193 = vsyncpa [#allocation4], 1
    %s6194 = scalar_lea.sflag [#allocation4], 1
    %6195 = vsyncpa %s6194, 1
    %6196 = vsyncpa [#allocation7], 1
    %6197 = vsyncpa [#allocation10], 1
    %6198 = vsyncpa [#allocation13], 1
    %6199 = vsyncpa [#allocation16], 1
    %6200 = vsyncpa [#allocation5], 1
    %s6201 = scalar_lea.sflag [#allocation5], 1
    %6202 = vsyncpa %s6201, 1

</llo_original>
